<compile_context>
chip_gen: v7x
topology: tpu7x:2x2x1
jax: 0.10.0
libtpu: 0.0.40
codegen_flags: <defaults>
</compile_context>

<pallas_src>
import math

import numpy as np

import jax
import jax.numpy as jnp
from jax.experimental import pallas as pl
from jax.experimental.pallas import tpu as pltpu

N_FREQUENCIES = 10
N_SPACE = 3
EMB_HALF = N_FREQUENCIES * N_SPACE          # 30
EMB_DIM = 2 * EMB_HALF                      # 60
PACK = 32                                   # original rows folded per packed row
PACKED_IN = PACK * N_SPACE                  # 96
PACKED_OUT = PACK * EMB_DIM                 # 1920 = 15 * 128 (lane aligned)
MAX_TM_P = 128                              # packed rows per grid step (~0.94 MiB out block)


def _build_constants():
    """Block-diagonal weight (96, 1920) and sin/cos lane selector (1, 1920)."""
    freqs = (2.0 * np.pi) * np.arange(N_FREQUENCIES, dtype=np.float32)
    w0 = np.zeros((N_SPACE, EMB_HALF), np.float32)
    for s in range(N_SPACE):
        w0[s, s * N_FREQUENCIES:(s + 1) * N_FREQUENCIES] = freqs
    w_row = np.concatenate([w0, w0], axis=1)                    # (3, 60): [W0 | W0]
    w = np.kron(np.eye(PACK, dtype=np.float32), w_row)          # (96, 1920) block-diag
    lane = np.arange(PACKED_OUT, dtype=np.int64)
    sel = ((lane % EMB_DIM) < EMB_HALF).astype(np.float32)      # 1.0 -> sin, 0.0 -> cos
    return jnp.asarray(w), jnp.asarray(sel.reshape(1, PACKED_OUT))


def _sinusoids_kernel(x_ref, w_ref, sel_ref, o_ref):
    # x_ref: (TM, 96)  w_ref: (96, 1920)  sel_ref: (1, 1920)  o_ref: (TM, 1920)
    emb = jnp.dot(x_ref[...], w_ref[...], preferred_element_type=jnp.float32)
    # f32 sublane-broadcast of the selector, then compare -> full-shape mask.
    is_sin = jnp.broadcast_to(sel_ref[...], emb.shape) > 0.5
    o_ref[...] = jnp.where(is_sin, jnp.sin(emb), jnp.cos(emb))


def sinusoids_embedding(x):
    """x: (N, 3) float. Returns (N, 60) float32 in the PyTorch column order."""
    N, ns = x.shape
    assert ns == N_SPACE
    x = x.astype(jnp.float32)

    # --- tiling policy: bounded padding, >= 2 grid steps once there is work ---
    n_packed = pl.cdiv(N, PACK)
    if n_packed <= 8:
        tm_p, n_steps = n_packed, 1
    else:
        n_steps = max(2, pl.cdiv(n_packed, MAX_TM_P))
        tm_p = min(MAX_TM_P, pl.cdiv(pl.cdiv(n_packed, n_steps), 8) * 8)
        n_steps = pl.cdiv(n_packed, tm_p)
    n_packed_pad = tm_p * n_steps
    n_rows_pad = n_packed_pad * PACK

    if n_rows_pad != N:
        x = jnp.pad(x, ((0, n_rows_pad - N), (0, 0)))
    x_packed = x.reshape(n_packed_pad, PACKED_IN)        # free row-major reshape

    w, sel = _build_constants()

    out_packed = pl.pallas_call(
        _sinusoids_kernel,
        out_shape=jax.ShapeDtypeStruct((n_packed_pad, PACKED_OUT), jnp.float32),
        grid_spec=pltpu.PrefetchScalarGridSpec(
            num_scalar_prefetch=0,
            grid=(n_steps,),
            in_specs=[
                pl.BlockSpec((tm_p, PACKED_IN), lambda i: (i, 0)),
                pl.BlockSpec((PACKED_IN, PACKED_OUT), lambda i: (0, 0)),   # resident W
                pl.BlockSpec((1, PACKED_OUT), lambda i: (0, 0)),           # resident sel
            ],
            out_specs=pl.BlockSpec((tm_p, PACKED_OUT), lambda i: (i, 0)),
        ),
        compiler_params=pltpu.CompilerParams(
            dimension_semantics=("parallel",)),
        cost_estimate=pl.CostEstimate(
            flops=2 * n_packed_pad * PACKED_IN * PACKED_OUT,
            transcendentals=2 * n_packed_pad * PACKED_OUT,
            bytes_accessed=(n_packed_pad * (PACKED_IN + PACKED_OUT)
                            + PACKED_IN * PACKED_OUT + PACKED_OUT) * 4,
        ),
    )(x_packed, w, sel)

    out = out_packed.reshape(n_rows_pad, EMB_DIM)        # free row-major reshape
    return out[:N] if n_rows_pad != N else out


def _reference(x):
    freqs = 2.0 * math.pi * jnp.arange(N_FREQUENCIES, dtype=jnp.float32)
    emb = x.astype(jnp.float32)[..., None] * freqs[None, None, :]
    emb = emb.reshape(-1, N_FREQUENCIES * N_SPACE)
    return jnp.concatenate([jnp.sin(emb), jnp.cos(emb)], axis=-1)


if __name__ == "__main__":
    key = jax.random.PRNGKey(0)

    # Small shape consistent with the module: 16 points in 3-D space.
    N = 16
    x = jax.random.normal(key, (N, N_SPACE), dtype=jnp.float32)
    out = jax.block_until_ready(sinusoids_embedding(x))
    ref = _reference(x)
    assert out.shape == (N, EMB_DIM)
    assert jnp.allclose(out, ref, atol=1e-5, rtol=1e-5)

    # Non-multiple-of-32 tail (padded pack, single grid step).
    N2 = 50
    x2 = jax.random.normal(jax.random.PRNGKey(1), (N2, N_SPACE), dtype=jnp.float32)
    out2 = jax.block_until_ready(sinusoids_embedding(x2))
    ref2 = _reference(x2)
    assert out2.shape == (N2, EMB_DIM)
    assert jnp.allclose(out2, ref2, atol=1e-5, rtol=1e-5)

    # Larger case exercising the multi-step "parallel" grid + tail slicing.
    N3 = 1000
    x3 = jax.random.normal(jax.random.PRNGKey(2), (N3, N_SPACE), dtype=jnp.float32)
    out3 = jax.block_until_ready(sinusoids_embedding(x3))
    ref3 = _reference(x3)
    assert out3.shape == (N3, EMB_DIM)
    assert jnp.allclose(out3, ref3, atol=1e-5, rtol=1e-5)

    print("KERNEL_OK")
</pallas_src>

<mosaic_0001>
module attributes {stable_mosaic.version = 11 : i64} {
  func.func @_sinusoids_kernel(%arg0: i32, %arg1: memref<1x96xf32, #tpu.memory_space<vmem>>, %arg2: memref<96x1920xf32, #tpu.memory_space<vmem>>, %arg3: memref<1x1920xf32, #tpu.memory_space<vmem>>, %arg4: memref<1x1920xf32, #tpu.memory_space<vmem>>) attributes {dimension_semantics = [#tpu.dimension_semantics<parallel>], iteration_bounds = array<i64: 1>, scalar_prefetch = 0 : i64, scratch_operands = 0 : i64, tpu.core_type = #tpu.core_type<tc>, window_params = [{transform_indices = @transform_0, window_bounds = array<i64: 1, 96>}, {pipeline_mode = #tpu.pipeline_mode<synchronous>, transform_indices = @transform_1, window_bounds = array<i64: 96, 1920>}, {pipeline_mode = #tpu.pipeline_mode<synchronous>, transform_indices = @transform_2, window_bounds = array<i64: 1, 1920>}, {transform_indices = @transform_3, window_bounds = array<i64: 1, 1920>}]} {
    %c0 = arith.constant 0 : index
    %c0_0 = arith.constant 0 : index
    %0 = vector.load %arg1[%c0, %c0_0] : memref<1x96xf32, #tpu.memory_space<vmem>>, vector<1x96xf32>
    %c0_1 = arith.constant 0 : index
    %c0_2 = arith.constant 0 : index
    %1 = vector.load %arg2[%c0_1, %c0_2] : memref<96x1920xf32, #tpu.memory_space<vmem>>, vector<96x1920xf32>
    %cst = arith.constant dense<0.000000e+00> : vector<1x1920xf32>
    %2 = tpu.matmul %0, %1, %cst {dimension_numbers = #tpu.dot_dimension_numbers<[1], [0], [0], [1], [0, 0, 1, 1], [], []>} : vector<1x96xf32>, vector<96x1920xf32>, vector<1x1920xf32> -> vector<1x1920xf32>
    %c0_3 = arith.constant 0 : index
    %c0_4 = arith.constant 0 : index
    %3 = vector.load %arg3[%c0_3, %c0_4] : memref<1x1920xf32, #tpu.memory_space<vmem>>, vector<1x1920xf32>
    %cst_5 = arith.constant 5.000000e-01 : f32
    %4 = vector.broadcast %cst_5 : f32 to vector<1x1920xf32>
    %5 = arith.cmpf ogt, %3, %4 : vector<1x1920xf32>
    %6 = math.sin %2 : vector<1x1920xf32>
    %7 = math.cos %2 : vector<1x1920xf32>
    %8 = arith.select %5, %6, %7 : vector<1x1920xi1>, vector<1x1920xf32>
    %c0_6 = arith.constant 0 : index
    %c0_7 = arith.constant 0 : index
    %9 = vector.load %arg4[%c0_6, %c0_7] : memref<1x1920xf32, #tpu.memory_space<vmem>>, vector<1x1920xf32>
    tpu.vector_store %arg4[%c0_6, %c0_7], %8 {strides = array<i32>} : memref<1x1920xf32, #tpu.memory_space<vmem>>, vector<1x1920xf32>,
    return
  }
  func.func @transform_0(%arg0: i32) -> (i32, i32) {
    %c0_i32 = arith.constant 0 : i32
    %c0_i32_0 = arith.constant 0 : i32
    return %arg0, %c0_i32 : i32, i32
  }
  func.func @transform_1(%arg0: i32) -> (i32, i32) {
    %c0_i32 = arith.constant 0 : i32
    %c0_i32_0 = arith.constant 0 : i32
    %c0_i32_1 = arith.constant 0 : i32
    return %c0_i32, %c0_i32_0 : i32, i32
  }
  func.func @transform_2(%arg0: i32) -> (i32, i32) {
    %c0_i32 = arith.constant 0 : i32
    %c0_i32_0 = arith.constant 0 : i32
    %c0_i32_1 = arith.constant 0 : i32
    return %c0_i32, %c0_i32_0 : i32, i32
  }
  func.func @transform_3(%arg0: i32) -> (i32, i32) {
    %c0_i32 = arith.constant 0 : i32
    %c0_i32_0 = arith.constant 0 : i32
    return %arg0, %c0_i32 : i32, i32
  }
}

</mosaic_0001>

<llo_original>
// kernel: tpu_custom_call.1
$region0: #{tpu_custom_call.1}
  #allocation0 [shape = 'u32[]', space=smem, size = 0x4, offset = 0x4, fixed_abs, tag = 'smem constant byte address 0x4 - core index']
  #allocation1 [shape = 'u32[144,128]{1,0:T(1,128)}', space=vmem, size = 0x12000, scoped, tag = 'internal scratch']
  %s0 = inlined_call_operand.hbm [shape: f32[1,96], index: 0, kind: input, shape index: {}]
  %s1 = inlined_call_operand.hbm [shape: f32[96,1920], index: 1, kind: input, shape index: {}]
  %s2 = inlined_call_operand.hbm [shape: f32[1,1920], index: 2, kind: input, shape index: {}]
  %s3 = inlined_call_operand.hbm [shape: f32[1,1920], index: 3, kind: output, shape index: {}]
  %s4 = sld [smem:[#allocation0]]
  $region34: #{tpu_custom_call.1} parent=0
    _
  %s6 = ssub.s32 1, %s4
  %s7 = scalar_select 0, %s6, %s4
  $region1: #{tpu_custom_call.1} parent=0
    #allocation2 [shape = 'u8[512]{0}', space=vmem, size = 0x400, scoped, tag = 'input window, operand 0, single buffered']
    #allocation3 [shape = 's32[1]{0}', space=sflag, size = 0x4, scoped, tag = 'scoped memory for tpu_custom_call.1']
    #allocation4 [shape = 's32[1]{0}', space=sflag, size = 0x4, scoped, tag = 'scoped memory for tpu_custom_call.1']
    #allocation5 [shape = 'u8[737280]{0}', space=vmem, size = 0xb4000, scoped, tag = 'input window, operand 1, single buffered']
    #allocation6 [shape = 's32[1]{0}', space=sflag, size = 0x4, scoped, tag = 'scoped memory for tpu_custom_call.1']
    #allocation7 [shape = 'u8[7680]{0}', space=vmem, size = 0x2000, scoped, tag = 'input window, operand 2, single buffered']
    #allocation8 [shape = 'u8[7680]{0}', space=vmem, size = 0x2000, scoped, tag = 'output window, operand 0, single buffered']
    %8 = vsyncpa [#allocation3], 0
    %9 = vsyncpa [#allocation6], 0
    %10 = vsyncpa [#allocation4], 0
    // Predicated region
    $region2: #{tpu_custom_call.1} parent=1 // pred_check
      _
    $region3: #{tpu_custom_call.1} parent=1 // pred_check_branch
      %12 = sbr.rel (0) target = $region5
    $region4: #{tpu_custom_call.1} parent=1 // pred_region
      %s14 = ssub.s32 16, 16
      %15 = vsyncadd [#allocation3], %s14
      %s17 = sshll.u32 [#allocation2], 4
      %s18 = int_to_ptr.vmem [resolvable:$true] %s17
      %20 = dma.hbm_to_vmem [thread:$0]  %s0, 16, %s18, [#allocation3]
    $region5: #{tpu_custom_call.1} parent=1 // pred_fallthru
      _
    // Predicated region
    $region6: #{tpu_custom_call.1} parent=1 // pred_check
      _
    $region7: #{tpu_custom_call.1} parent=1 // pred_check_branch
      %22 = sbr.rel (0) target = $region9
    $region8: #{tpu_custom_call.1} parent=1 // pred_region
      %s24 = ssub.s32 23040, 23040
      %25 = vsyncadd [#allocation6], %s24
      %s26 = sshll.u32 [#allocation5], 4
      %s27 = int_to_ptr.vmem [resolvable:$true] %s26
      %32 = dma.hbm_to_vmem [thread:$0]  %s1, 23040, %s27, [#allocation6], 1920, 1920, 120
    $region9: #{tpu_custom_call.1} parent=1 // pred_fallthru
      _
    // Predicated region
    $region10: #{tpu_custom_call.1} parent=1 // pred_check
      _
    $region11: #{tpu_custom_call.1} parent=1 // pred_check_branch
      %34 = sbr.rel (0) target = $region13
    $region12: #{tpu_custom_call.1} parent=1 // pred_region
      %s36 = ssub.s32 240, 240
      %37 = vsyncadd [#allocation6], %s36
      %s39 = sshll.u32 [#allocation7], 4
      %s40 = int_to_ptr.vmem [resolvable:$true] %s39
      %42 = dma.hbm_to_vmem [thread:$0]  %s2, 240, %s40, [#allocation6]
    $region13: #{tpu_custom_call.1} parent=1 // pred_fallthru
      _
    // Predicated region
    $region14: #{tpu_custom_call.1} parent=1 // pred_check
      _
    $region15: #{tpu_custom_call.1} parent=1 // pred_check_branch
      %44 = sbr.rel (0) target = $region17
    $region16: #{tpu_custom_call.1} parent=1 // pred_region
      %45 = dma.done [#allocation3], 16
    $region17: #{tpu_custom_call.1} parent=1 // pred_fallthru
      _
    // Predicated region
    $region18: #{tpu_custom_call.1} parent=1 // pred_check
      _
    $region19: #{tpu_custom_call.1} parent=1 // pred_check_branch
      %47 = sbr.rel (0) target = $region21
    $region20: #{tpu_custom_call.1} parent=1 // pred_region
      %48 = dma.done [#allocation6], 23040
    $region21: #{tpu_custom_call.1} parent=1 // pred_fallthru
      _
    // Predicated region
    $region22: #{tpu_custom_call.1} parent=1 // pred_check
      _
    $region23: #{tpu_custom_call.1} parent=1 // pred_check_branch
      %50 = sbr.rel (0) target = $region25
    $region24: #{tpu_custom_call.1} parent=1 // pred_region
      %51 = dma.done [#allocation6], 240
    $region25: #{tpu_custom_call.1} parent=1 // pred_fallthru
      _
    %v52 = vld [vmem:[#allocation2] sm:$0x1]
    %v53 = vld [vmem:[#allocation5] sm:$0xff]
    %v54 = vld [vmem:[#allocation5 + $0x8] sm:$0xff]
    %v55 = vld [vmem:[#allocation5 + $0x10] sm:$0xff]
    %v56 = vld [vmem:[#allocation5 + $0x18] sm:$0xff]
    %v57 = vld [vmem:[#allocation5 + $0x20] sm:$0xff]
    %v58 = vld [vmem:[#allocation5 + $0x28] sm:$0xff]
    %v59 = vld [vmem:[#allocation5 + $0x30] sm:$0xff]
    %v60 = vld [vmem:[#allocation5 + $0x38] sm:$0xff]
    %v61 = vld [vmem:[#allocation5 + $0x40] sm:$0xff]
    %v62 = vld [vmem:[#allocation5 + $0x48] sm:$0xff]
    %v63 = vld [vmem:[#allocation5 + $0x50] sm:$0xff]
    %v64 = vld [vmem:[#allocation5 + $0x58] sm:$0xff]
    %v65 = vld [vmem:[#allocation5 + $0x60] sm:$0xff]
    %v66 = vld [vmem:[#allocation5 + $0x68] sm:$0xff]
    %v67 = vld [vmem:[#allocation5 + $0x70] sm:$0xff]
    %v68 = vld [vmem:[#allocation5 + $0x78] sm:$0xff]
    %v69 = vld [vmem:[#allocation5 + $0x80] sm:$0xff]
    %v70 = vld [vmem:[#allocation5 + $0x88] sm:$0xff]
    %v71 = vld [vmem:[#allocation5 + $0x90] sm:$0xff]
    %v72 = vld [vmem:[#allocation5 + $0x98] sm:$0xff]
    %v73 = vld [vmem:[#allocation5 + $0xa0] sm:$0xff]
    %v74 = vld [vmem:[#allocation5 + $0xa8] sm:$0xff]
    %v75 = vld [vmem:[#allocation5 + $0xb0] sm:$0xff]
    %v76 = vld [vmem:[#allocation5 + $0xb8] sm:$0xff]
    %v77 = vld [vmem:[#allocation5 + $0xc0] sm:$0xff]
    %v78 = vld [vmem:[#allocation5 + $0xc8] sm:$0xff]
    %v79 = vld [vmem:[#allocation5 + $0xd0] sm:$0xff]
    %v80 = vld [vmem:[#allocation5 + $0xd8] sm:$0xff]
    %v81 = vld [vmem:[#allocation5 + $0xe0] sm:$0xff]
    %v82 = vld [vmem:[#allocation5 + $0xe8] sm:$0xff]
    %v83 = vld [vmem:[#allocation5 + $0xf0] sm:$0xff]
    %v84 = vld [vmem:[#allocation5 + $0xf8] sm:$0xff]
    %v85 = vld [vmem:[#allocation5 + $0x100] sm:$0xff]
    %v86 = vld [vmem:[#allocation5 + $0x108] sm:$0xff]
    %v87 = vld [vmem:[#allocation5 + $0x110] sm:$0xff]
    %v88 = vld [vmem:[#allocation5 + $0x118] sm:$0xff]
    %v89 = vld [vmem:[#allocation5 + $0x120] sm:$0xff]
    %v90 = vld [vmem:[#allocation5 + $0x128] sm:$0xff]
    %v91 = vld [vmem:[#allocation5 + $0x130] sm:$0xff]
    %v92 = vld [vmem:[#allocation5 + $0x138] sm:$0xff]
    %v93 = vld [vmem:[#allocation5 + $0x140] sm:$0xff]
    %v94 = vld [vmem:[#allocation5 + $0x148] sm:$0xff]
    %v95 = vld [vmem:[#allocation5 + $0x150] sm:$0xff]
    %v96 = vld [vmem:[#allocation5 + $0x158] sm:$0xff]
    %v97 = vld [vmem:[#allocation5 + $0x160] sm:$0xff]
    %v98 = vld [vmem:[#allocation5 + $0x168] sm:$0xff]
    %v99 = vld [vmem:[#allocation5 + $0x170] sm:$0xff]
    %v100 = vld [vmem:[#allocation5 + $0x178] sm:$0xff]
    %v101 = vld [vmem:[#allocation5 + $0x180] sm:$0xff]
    %v102 = vld [vmem:[#allocation5 + $0x188] sm:$0xff]
    %v103 = vld [vmem:[#allocation5 + $0x190] sm:$0xff]
    %v104 = vld [vmem:[#allocation5 + $0x198] sm:$0xff]
    %v105 = vld [vmem:[#allocation5 + $0x1a0] sm:$0xff]
    %v106 = vld [vmem:[#allocation5 + $0x1a8] sm:$0xff]
    %v107 = vld [vmem:[#allocation5 + $0x1b0] sm:$0xff]
    %v108 = vld [vmem:[#allocation5 + $0x1b8] sm:$0xff]
    %v109 = vld [vmem:[#allocation5 + $0x1c0] sm:$0xff]
    %v110 = vld [vmem:[#allocation5 + $0x1c8] sm:$0xff]
    %v111 = vld [vmem:[#allocation5 + $0x1d0] sm:$0xff]
    %v112 = vld [vmem:[#allocation5 + $0x1d8] sm:$0xff]
    %v113 = vld [vmem:[#allocation5 + $0x1e0] sm:$0xff]
    %v114 = vld [vmem:[#allocation5 + $0x1e8] sm:$0xff]
    %v115 = vld [vmem:[#allocation5 + $0x1f0] sm:$0xff]
    %v116 = vld [vmem:[#allocation5 + $0x1f8] sm:$0xff]
    %v117 = vld [vmem:[#allocation5 + $0x200] sm:$0xff]
    %v118 = vld [vmem:[#allocation5 + $0x208] sm:$0xff]
    %v119 = vld [vmem:[#allocation5 + $0x210] sm:$0xff]
    %v120 = vld [vmem:[#allocation5 + $0x218] sm:$0xff]
    %v121 = vld [vmem:[#allocation5 + $0x220] sm:$0xff]
    %v122 = vld [vmem:[#allocation5 + $0x228] sm:$0xff]
    %v123 = vld [vmem:[#allocation5 + $0x230] sm:$0xff]
    %v124 = vld [vmem:[#allocation5 + $0x238] sm:$0xff]
    %v125 = vld [vmem:[#allocation5 + $0x240] sm:$0xff]
    %v126 = vld [vmem:[#allocation5 + $0x248] sm:$0xff]
    %v127 = vld [vmem:[#allocation5 + $0x250] sm:$0xff]
    %v128 = vld [vmem:[#allocation5 + $0x258] sm:$0xff]
    %v129 = vld [vmem:[#allocation5 + $0x260] sm:$0xff]
    %v130 = vld [vmem:[#allocation5 + $0x268] sm:$0xff]
    %v131 = vld [vmem:[#allocation5 + $0x270] sm:$0xff]
    %v132 = vld [vmem:[#allocation5 + $0x278] sm:$0xff]
    %v133 = vld [vmem:[#allocation5 + $0x280] sm:$0xff]
    %v134 = vld [vmem:[#allocation5 + $0x288] sm:$0xff]
    %v135 = vld [vmem:[#allocation5 + $0x290] sm:$0xff]
    %v136 = vld [vmem:[#allocation5 + $0x298] sm:$0xff]
    %v137 = vld [vmem:[#allocation5 + $0x2a0] sm:$0xff]
    %v138 = vld [vmem:[#allocation5 + $0x2a8] sm:$0xff]
    %v139 = vld [vmem:[#allocation5 + $0x2b0] sm:$0xff]
    %v140 = vld [vmem:[#allocation5 + $0x2b8] sm:$0xff]
    %v141 = vld [vmem:[#allocation5 + $0x2c0] sm:$0xff]
    %v142 = vld [vmem:[#allocation5 + $0x2c8] sm:$0xff]
    %v143 = vld [vmem:[#allocation5 + $0x2d0] sm:$0xff]
    %v144 = vld [vmem:[#allocation5 + $0x2d8] sm:$0xff]
    %v145 = vld [vmem:[#allocation5 + $0x2e0] sm:$0xff]
    %v146 = vld [vmem:[#allocation5 + $0x2e8] sm:$0xff]
    %v147 = vld [vmem:[#allocation5 + $0x2f0] sm:$0xff]
    %v148 = vld [vmem:[#allocation5 + $0x2f8] sm:$0xff]
    %v149 = vld [vmem:[#allocation5 + $0x300] sm:$0xff]
    %v150 = vld [vmem:[#allocation5 + $0x308] sm:$0xff]
    %v151 = vld [vmem:[#allocation5 + $0x310] sm:$0xff]
    %v152 = vld [vmem:[#allocation5 + $0x318] sm:$0xff]
    %v153 = vld [vmem:[#allocation5 + $0x320] sm:$0xff]
    %v154 = vld [vmem:[#allocation5 + $0x328] sm:$0xff]
    %v155 = vld [vmem:[#allocation5 + $0x330] sm:$0xff]
    %v156 = vld [vmem:[#allocation5 + $0x338] sm:$0xff]
    %v157 = vld [vmem:[#allocation5 + $0x340] sm:$0xff]
    %v158 = vld [vmem:[#allocation5 + $0x348] sm:$0xff]
    %v159 = vld [vmem:[#allocation5 + $0x350] sm:$0xff]
    %v160 = vld [vmem:[#allocation5 + $0x358] sm:$0xff]
    %v161 = vld [vmem:[#allocation5 + $0x360] sm:$0xff]
    %v162 = vld [vmem:[#allocation5 + $0x368] sm:$0xff]
    %v163 = vld [vmem:[#allocation5 + $0x370] sm:$0xff]
    %v164 = vld [vmem:[#allocation5 + $0x378] sm:$0xff]
    %v165 = vld [vmem:[#allocation5 + $0x380] sm:$0xff]
    %v166 = vld [vmem:[#allocation5 + $0x388] sm:$0xff]
    %v167 = vld [vmem:[#allocation5 + $0x390] sm:$0xff]
    %v168 = vld [vmem:[#allocation5 + $0x398] sm:$0xff]
    %v169 = vld [vmem:[#allocation5 + $0x3a0] sm:$0xff]
    %v170 = vld [vmem:[#allocation5 + $0x3a8] sm:$0xff]
    %v171 = vld [vmem:[#allocation5 + $0x3b0] sm:$0xff]
    %v172 = vld [vmem:[#allocation5 + $0x3b8] sm:$0xff]
    %v173 = vld [vmem:[#allocation5 + $0x3c0] sm:$0xff]
    %v174 = vld [vmem:[#allocation5 + $0x3c8] sm:$0xff]
    %v175 = vld [vmem:[#allocation5 + $0x3d0] sm:$0xff]
    %v176 = vld [vmem:[#allocation5 + $0x3d8] sm:$0xff]
    %v177 = vld [vmem:[#allocation5 + $0x3e0] sm:$0xff]
    %v178 = vld [vmem:[#allocation5 + $0x3e8] sm:$0xff]
    %v179 = vld [vmem:[#allocation5 + $0x3f0] sm:$0xff]
    %v180 = vld [vmem:[#allocation5 + $0x3f8] sm:$0xff]
    %v181 = vld [vmem:[#allocation5 + $0x400] sm:$0xff]
    %v182 = vld [vmem:[#allocation5 + $0x408] sm:$0xff]
    %v183 = vld [vmem:[#allocation5 + $0x410] sm:$0xff]
    %v184 = vld [vmem:[#allocation5 + $0x418] sm:$0xff]
    %v185 = vld [vmem:[#allocation5 + $0x420] sm:$0xff]
    %v186 = vld [vmem:[#allocation5 + $0x428] sm:$0xff]
    %v187 = vld [vmem:[#allocation5 + $0x430] sm:$0xff]
    %v188 = vld [vmem:[#allocation5 + $0x438] sm:$0xff]
    %v189 = vld [vmem:[#allocation5 + $0x440] sm:$0xff]
    %v190 = vld [vmem:[#allocation5 + $0x448] sm:$0xff]
    %v191 = vld [vmem:[#allocation5 + $0x450] sm:$0xff]
    %v192 = vld [vmem:[#allocation5 + $0x458] sm:$0xff]
    %v193 = vld [vmem:[#allocation5 + $0x460] sm:$0xff]
    %v194 = vld [vmem:[#allocation5 + $0x468] sm:$0xff]
    %v195 = vld [vmem:[#allocation5 + $0x470] sm:$0xff]
    %v196 = vld [vmem:[#allocation5 + $0x478] sm:$0xff]
    %v197 = vld [vmem:[#allocation5 + $0x480] sm:$0xff]
    %v198 = vld [vmem:[#allocation5 + $0x488] sm:$0xff]
    %v199 = vld [vmem:[#allocation5 + $0x490] sm:$0xff]
    %v200 = vld [vmem:[#allocation5 + $0x498] sm:$0xff]
    %v201 = vld [vmem:[#allocation5 + $0x4a0] sm:$0xff]
    %v202 = vld [vmem:[#allocation5 + $0x4a8] sm:$0xff]
    %v203 = vld [vmem:[#allocation5 + $0x4b0] sm:$0xff]
    %v204 = vld [vmem:[#allocation5 + $0x4b8] sm:$0xff]
    %v205 = vld [vmem:[#allocation5 + $0x4c0] sm:$0xff]
    %v206 = vld [vmem:[#allocation5 + $0x4c8] sm:$0xff]
    %v207 = vld [vmem:[#allocation5 + $0x4d0] sm:$0xff]
    %v208 = vld [vmem:[#allocation5 + $0x4d8] sm:$0xff]
    %v209 = vld [vmem:[#allocation5 + $0x4e0] sm:$0xff]
    %v210 = vld [vmem:[#allocation5 + $0x4e8] sm:$0xff]
    %v211 = vld [vmem:[#allocation5 + $0x4f0] sm:$0xff]
    %v212 = vld [vmem:[#allocation5 + $0x4f8] sm:$0xff]
    %v213 = vld [vmem:[#allocation5 + $0x500] sm:$0xff]
    %v214 = vld [vmem:[#allocation5 + $0x508] sm:$0xff]
    %v215 = vld [vmem:[#allocation5 + $0x510] sm:$0xff]
    %v216 = vld [vmem:[#allocation5 + $0x518] sm:$0xff]
    %v217 = vld [vmem:[#allocation5 + $0x520] sm:$0xff]
    %v218 = vld [vmem:[#allocation5 + $0x528] sm:$0xff]
    %v219 = vld [vmem:[#allocation5 + $0x530] sm:$0xff]
    %v220 = vld [vmem:[#allocation5 + $0x538] sm:$0xff]
    %v221 = vld [vmem:[#allocation5 + $0x540] sm:$0xff]
    %v222 = vld [vmem:[#allocation5 + $0x548] sm:$0xff]
    %v223 = vld [vmem:[#allocation5 + $0x550] sm:$0xff]
    %v224 = vld [vmem:[#allocation5 + $0x558] sm:$0xff]
    %v225 = vld [vmem:[#allocation5 + $0x560] sm:$0xff]
    %v226 = vld [vmem:[#allocation5 + $0x568] sm:$0xff]
    %v227 = vld [vmem:[#allocation5 + $0x570] sm:$0xff]
    %v228 = vld [vmem:[#allocation5 + $0x578] sm:$0xff]
    %v229 = vld [vmem:[#allocation5 + $0x580] sm:$0xff]
    %v230 = vld [vmem:[#allocation5 + $0x588] sm:$0xff]
    %v231 = vld [vmem:[#allocation5 + $0x590] sm:$0xff]
    %v232 = vld [vmem:[#allocation5 + $0x598] sm:$0xff]
    %vm233 = vcmask 785408
    %v235 = vsel %vm233, %v52, 0
    %237 = vmatprep.subr.mxu0 %v54
    %238 = vmatpush1.msra.mxu0 %v53
    %239 = vmatprep.subr.mxu0 %v69
    %240 = vmatpush1.msra.mxu0 %v68
    %241 = vmatprep.subr.mxu0 %v84
    %242 = vmatpush1.msra.mxu0 %v83
    %243 = vmatprep.subr.mxu0 %v99
    %244 = vmatpush1.msra.mxu0 %v98
    %245 = vmatprep.subr.mxu0 %v114
    %246 = vmatpush1.msra.mxu0 %v113
    %247 = vmatprep.subr.mxu0 %v129
    %248 = vmatpush1.msra.mxu0 %v128
    %249 = vmatprep.subr.mxu0 %v144
    %250 = vmatpush1.msra.mxu0 %v143
    %251 = vmatprep.subr.mxu0 %v159
    %252 = vmatpush1.msra.mxu0 %v158
    %253 = vmatprep.subr.mxu0 %v174
    %254 = vmatpush1.msra.mxu0 %v173
    %255 = vmatprep.subr.mxu0 %v189
    %256 = vmatpush1.msra.mxu0 %v188
    %257 = vmatprep.subr.mxu0 %v204
    %258 = vmatpush1.msra.mxu0 %v203
    %259 = vmatprep.subr.mxu0 %v219
    %260 = vmatpush1.msra.mxu0 %v218
    %261 = vmatprep.subr.mxu0 0.0
    %262 = vmatpush1.msra.mxu0 0.0
    %263 = vmatprep.subr.mxu0 0.0
    %264 = vmatpush1.msra.mxu0 0.0
    %265 = vmatprep.subr.mxu0 0.0
    %266 = vmatpush1.msra.mxu0 0.0
    %267 = vmatprep.subr.mxu0 0.0
    %268 = vmatpush1.msra.mxu0 0.0
    %269 = vmatprep.subr.mxu0 0.0
    %270 = vmatpush1.msra.mxu0 0.0
    %271 = vmatprep.subr.mxu0 0.0
    %272 = vmatpush1.msra.mxu0 0.0
    %273 = vmatprep.subr.mxu0 0.0
    %274 = vmatpush1.msra.mxu0 0.0
    %275 = vmatprep.subr.mxu0 0.0
    %276 = vmatpush1.msra.mxu0 0.0
    %277 = vmatprep.subr.mxu0 0.0
    %278 = vmatpush1.msra.mxu0 0.0
    %279 = vmatprep.subr.mxu0 0.0
    %280 = vmatpush1.msra.mxu0 0.0
    %281 = vmatprep.subr.mxu0 0.0
    %282 = vmatpush1.msra.mxu0 0.0
    %283 = vmatprep.subr.mxu0 0.0
    %284 = vmatpush1.msra.mxu0 0.0
    %285 = vmatprep.subr.mxu0 0.0
    %286 = vmatpush1.msra.mxu0 0.0
    %287 = vmatprep.subr.mxu0 0.0
    %288 = vmatpush1.msra.mxu0 0.0
    %289 = vmatprep.subr.mxu0 0.0
    %290 = vmatpush1.msra.mxu0 0.0
    %291 = vmatprep.subr.mxu0 0.0
    %292 = vmatpush1.msra.mxu0 0.0
    %293 = vmatprep.subr.mxu0 0.0
    %294 = vmatpush1.msra.mxu0 0.0
    %295 = vmatprep.subr.mxu0 0.0
    %296 = vmatpush1.msra.mxu0 0.0
    %297 = vmatprep.subr.mxu0 0.0
    %298 = vmatpush1.msra.mxu0 0.0
    %299 = vmatprep.subr.mxu0 0.0
    %300 = vmatpush1.msra.mxu0 0.0
    %301 = vmatprep.mubr.f32.mxu0 0.0
    %302 = vmatmul.mubr.f32.gmra.mrb[0].mxu0 %v235
    %v303 = vpop.f32.mrb[0].mxu0
    %v304 = vadd.f32 0.0, %v303
    %v305 = vpop.f32.mrb[0].mxu0
    %v306 = vadd.f32 0.0, %v305
    %307 = vdwg.mxu0
    %308 = vmatprep.subr.mxu0 %v56
    %309 = vmatpush1.msra.mxu0 %v55
    %310 = vmatprep.subr.mxu0 %v71
    %311 = vmatpush1.msra.mxu0 %v70
    %312 = vmatprep.subr.mxu0 %v86
    %313 = vmatpush1.msra.mxu0 %v85
    %314 = vmatprep.subr.mxu0 %v101
    %315 = vmatpush1.msra.mxu0 %v100
    %316 = vmatprep.subr.mxu0 %v116
    %317 = vmatpush1.msra.mxu0 %v115
    %318 = vmatprep.subr.mxu0 %v131
    %319 = vmatpush1.msra.mxu0 %v130
    %320 = vmatprep.subr.mxu0 %v146
    %321 = vmatpush1.msra.mxu0 %v145
    %322 = vmatprep.subr.mxu0 %v161
    %323 = vmatpush1.msra.mxu0 %v160
    %324 = vmatprep.subr.mxu0 %v176
    %325 = vmatpush1.msra.mxu0 %v175
    %326 = vmatprep.subr.mxu0 %v191
    %327 = vmatpush1.msra.mxu0 %v190
    %328 = vmatprep.subr.mxu0 %v206
    %329 = vmatpush1.msra.mxu0 %v205
    %330 = vmatprep.subr.mxu0 %v221
    %331 = vmatpush1.msra.mxu0 %v220
    %332 = vmatprep.subr.mxu0 0.0
    %333 = vmatpush1.msra.mxu0 0.0
    %334 = vmatprep.subr.mxu0 0.0
    %335 = vmatpush1.msra.mxu0 0.0
    %336 = vmatprep.subr.mxu0 0.0
    %337 = vmatpush1.msra.mxu0 0.0
    %338 = vmatprep.subr.mxu0 0.0
    %339 = vmatpush1.msra.mxu0 0.0
    %340 = vmatprep.subr.mxu0 0.0
    %341 = vmatpush1.msra.mxu0 0.0
    %342 = vmatprep.subr.mxu0 0.0
    %343 = vmatpush1.msra.mxu0 0.0
    %344 = vmatprep.subr.mxu0 0.0
    %345 = vmatpush1.msra.mxu0 0.0
    %346 = vmatprep.subr.mxu0 0.0
    %347 = vmatpush1.msra.mxu0 0.0
    %348 = vmatprep.subr.mxu0 0.0
    %349 = vmatpush1.msra.mxu0 0.0
    %350 = vmatprep.subr.mxu0 0.0
    %351 = vmatpush1.msra.mxu0 0.0
    %352 = vmatprep.subr.mxu0 0.0
    %353 = vmatpush1.msra.mxu0 0.0
    %354 = vmatprep.subr.mxu0 0.0
    %355 = vmatpush1.msra.mxu0 0.0
    %356 = vmatprep.subr.mxu0 0.0
    %357 = vmatpush1.msra.mxu0 0.0
    %358 = vmatprep.subr.mxu0 0.0
    %359 = vmatpush1.msra.mxu0 0.0
    %360 = vmatprep.subr.mxu0 0.0
    %361 = vmatpush1.msra.mxu0 0.0
    %362 = vmatprep.subr.mxu0 0.0
    %363 = vmatpush1.msra.mxu0 0.0
    %364 = vmatprep.subr.mxu0 0.0
    %365 = vmatpush1.msra.mxu0 0.0
    %366 = vmatprep.subr.mxu0 0.0
    %367 = vmatpush1.msra.mxu0 0.0
    %368 = vmatprep.subr.mxu0 0.0
    %369 = vmatpush1.msra.mxu0 0.0
    %370 = vmatprep.subr.mxu0 0.0
    %371 = vmatpush1.msra.mxu0 0.0
    %372 = vmatprep.mubr.f32.mxu0 0.0
    %373 = vmatmul.mubr.f32.gmra.mrb[0].mxu0 %v235
    %v374 = vpop.f32.mrb[0].mxu0
    %v375 = vadd.f32 0.0, %v374
    %v376 = vpop.f32.mrb[0].mxu0
    %v377 = vadd.f32 0.0, %v376
    %378 = vdwg.mxu0
    %379 = vmatprep.subr.mxu0 %v58
    %380 = vmatpush1.msra.mxu0 %v57
    %381 = vmatprep.subr.mxu0 %v73
    %382 = vmatpush1.msra.mxu0 %v72
    %383 = vmatprep.subr.mxu0 %v88
    %384 = vmatpush1.msra.mxu0 %v87
    %385 = vmatprep.subr.mxu0 %v103
    %386 = vmatpush1.msra.mxu0 %v102
    %387 = vmatprep.subr.mxu0 %v118
    %388 = vmatpush1.msra.mxu0 %v117
    %389 = vmatprep.subr.mxu0 %v133
    %390 = vmatpush1.msra.mxu0 %v132
    %391 = vmatprep.subr.mxu0 %v148
    %392 = vmatpush1.msra.mxu0 %v147
    %393 = vmatprep.subr.mxu0 %v163
    %394 = vmatpush1.msra.mxu0 %v162
    %395 = vmatprep.subr.mxu0 %v178
    %396 = vmatpush1.msra.mxu0 %v177
    %397 = vmatprep.subr.mxu0 %v193
    %398 = vmatpush1.msra.mxu0 %v192
    %399 = vmatprep.subr.mxu0 %v208
    %400 = vmatpush1.msra.mxu0 %v207
    %401 = vmatprep.subr.mxu0 %v223
    %402 = vmatpush1.msra.mxu0 %v222
    %403 = vmatprep.subr.mxu0 0.0
    %404 = vmatpush1.msra.mxu0 0.0
    %405 = vmatprep.subr.mxu0 0.0
    %406 = vmatpush1.msra.mxu0 0.0
    %407 = vmatprep.subr.mxu0 0.0
    %408 = vmatpush1.msra.mxu0 0.0
    %409 = vmatprep.subr.mxu0 0.0
    %410 = vmatpush1.msra.mxu0 0.0
    %411 = vmatprep.subr.mxu0 0.0
    %412 = vmatpush1.msra.mxu0 0.0
    %413 = vmatprep.subr.mxu0 0.0
    %414 = vmatpush1.msra.mxu0 0.0
    %415 = vmatprep.subr.mxu0 0.0
    %416 = vmatpush1.msra.mxu0 0.0
    %417 = vmatprep.subr.mxu0 0.0
    %418 = vmatpush1.msra.mxu0 0.0
    %419 = vmatprep.subr.mxu0 0.0
    %420 = vmatpush1.msra.mxu0 0.0
    %421 = vmatprep.subr.mxu0 0.0
    %422 = vmatpush1.msra.mxu0 0.0
    %423 = vmatprep.subr.mxu0 0.0
    %424 = vmatpush1.msra.mxu0 0.0
    %425 = vmatprep.subr.mxu0 0.0
    %426 = vmatpush1.msra.mxu0 0.0
    %427 = vmatprep.subr.mxu0 0.0
    %428 = vmatpush1.msra.mxu0 0.0
    %429 = vmatprep.subr.mxu0 0.0
    %430 = vmatpush1.msra.mxu0 0.0
    %431 = vmatprep.subr.mxu0 0.0
    %432 = vmatpush1.msra.mxu0 0.0
    %433 = vmatprep.subr.mxu0 0.0
    %434 = vmatpush1.msra.mxu0 0.0
    %435 = vmatprep.subr.mxu0 0.0
    %436 = vmatpush1.msra.mxu0 0.0
    %437 = vmatprep.subr.mxu0 0.0
    %438 = vmatpush1.msra.mxu0 0.0
    %439 = vmatprep.subr.mxu0 0.0
    %440 = vmatpush1.msra.mxu0 0.0
    %441 = vmatprep.subr.mxu0 0.0
    %442 = vmatpush1.msra.mxu0 0.0
    %443 = vmatprep.mubr.f32.mxu0 0.0
    %444 = vmatmul.mubr.f32.gmra.mrb[0].mxu0 %v235
    %v445 = vpop.f32.mrb[0].mxu0
    %v446 = vadd.f32 0.0, %v445
    %v447 = vpop.f32.mrb[0].mxu0
    %v448 = vadd.f32 0.0, %v447
    %449 = vdwg.mxu0
    %450 = vmatprep.subr.mxu0 %v60
    %451 = vmatpush1.msra.mxu0 %v59
    %452 = vmatprep.subr.mxu0 %v75
    %453 = vmatpush1.msra.mxu0 %v74
    %454 = vmatprep.subr.mxu0 %v90
    %455 = vmatpush1.msra.mxu0 %v89
    %456 = vmatprep.subr.mxu0 %v105
    %457 = vmatpush1.msra.mxu0 %v104
    %458 = vmatprep.subr.mxu0 %v120
    %459 = vmatpush1.msra.mxu0 %v119
    %460 = vmatprep.subr.mxu0 %v135
    %461 = vmatpush1.msra.mxu0 %v134
    %462 = vmatprep.subr.mxu0 %v150
    %463 = vmatpush1.msra.mxu0 %v149
    %464 = vmatprep.subr.mxu0 %v165
    %465 = vmatpush1.msra.mxu0 %v164
    %466 = vmatprep.subr.mxu0 %v180
    %467 = vmatpush1.msra.mxu0 %v179
    %468 = vmatprep.subr.mxu0 %v195
    %469 = vmatpush1.msra.mxu0 %v194
    %470 = vmatprep.subr.mxu0 %v210
    %471 = vmatpush1.msra.mxu0 %v209
    %472 = vmatprep.subr.mxu0 %v225
    %473 = vmatpush1.msra.mxu0 %v224
    %474 = vmatprep.subr.mxu0 0.0
    %475 = vmatpush1.msra.mxu0 0.0
    %476 = vmatprep.subr.mxu0 0.0
    %477 = vmatpush1.msra.mxu0 0.0
    %478 = vmatprep.subr.mxu0 0.0
    %479 = vmatpush1.msra.mxu0 0.0
    %480 = vmatprep.subr.mxu0 0.0
    %481 = vmatpush1.msra.mxu0 0.0
    %482 = vmatprep.subr.mxu0 0.0
    %483 = vmatpush1.msra.mxu0 0.0
    %484 = vmatprep.subr.mxu0 0.0
    %485 = vmatpush1.msra.mxu0 0.0
    %486 = vmatprep.subr.mxu0 0.0
    %487 = vmatpush1.msra.mxu0 0.0
    %488 = vmatprep.subr.mxu0 0.0
    %489 = vmatpush1.msra.mxu0 0.0
    %490 = vmatprep.subr.mxu0 0.0
    %491 = vmatpush1.msra.mxu0 0.0
    %492 = vmatprep.subr.mxu0 0.0
    %493 = vmatpush1.msra.mxu0 0.0
    %494 = vmatprep.subr.mxu0 0.0
    %495 = vmatpush1.msra.mxu0 0.0
    %496 = vmatprep.subr.mxu0 0.0
    %497 = vmatpush1.msra.mxu0 0.0
    %498 = vmatprep.subr.mxu0 0.0
    %499 = vmatpush1.msra.mxu0 0.0
    %500 = vmatprep.subr.mxu0 0.0
    %501 = vmatpush1.msra.mxu0 0.0
    %502 = vmatprep.subr.mxu0 0.0
    %503 = vmatpush1.msra.mxu0 0.0
    %504 = vmatprep.subr.mxu0 0.0
    %505 = vmatpush1.msra.mxu0 0.0
    %506 = vmatprep.subr.mxu0 0.0
    %507 = vmatpush1.msra.mxu0 0.0
    %508 = vmatprep.subr.mxu0 0.0
    %509 = vmatpush1.msra.mxu0 0.0
    %510 = vmatprep.subr.mxu0 0.0
    %511 = vmatpush1.msra.mxu0 0.0
    %512 = vmatprep.subr.mxu0 0.0
    %513 = vmatpush1.msra.mxu0 0.0
    %514 = vmatprep.mubr.f32.mxu0 0.0
    %515 = vmatmul.mubr.f32.gmra.mrb[0].mxu0 %v235
    %v516 = vpop.f32.mrb[0].mxu0
    %v517 = vadd.f32 0.0, %v516
    %v518 = vpop.f32.mrb[0].mxu0
    %v519 = vadd.f32 0.0, %v518
    %520 = vdwg.mxu0
    %521 = vmatprep.subr.mxu0 %v62
    %522 = vmatpush1.msra.mxu0 %v61
    %523 = vmatprep.subr.mxu0 %v77
    %524 = vmatpush1.msra.mxu0 %v76
    %525 = vmatprep.subr.mxu0 %v92
    %526 = vmatpush1.msra.mxu0 %v91
    %527 = vmatprep.subr.mxu0 %v107
    %528 = vmatpush1.msra.mxu0 %v106
    %529 = vmatprep.subr.mxu0 %v122
    %530 = vmatpush1.msra.mxu0 %v121
    %531 = vmatprep.subr.mxu0 %v137
    %532 = vmatpush1.msra.mxu0 %v136
    %533 = vmatprep.subr.mxu0 %v152
    %534 = vmatpush1.msra.mxu0 %v151
    %535 = vmatprep.subr.mxu0 %v167
    %536 = vmatpush1.msra.mxu0 %v166
    %537 = vmatprep.subr.mxu0 %v182
    %538 = vmatpush1.msra.mxu0 %v181
    %539 = vmatprep.subr.mxu0 %v197
    %540 = vmatpush1.msra.mxu0 %v196
    %541 = vmatprep.subr.mxu0 %v212
    %542 = vmatpush1.msra.mxu0 %v211
    %543 = vmatprep.subr.mxu0 %v227
    %544 = vmatpush1.msra.mxu0 %v226
    %545 = vmatprep.subr.mxu0 0.0
    %546 = vmatpush1.msra.mxu0 0.0
    %547 = vmatprep.subr.mxu0 0.0
    %548 = vmatpush1.msra.mxu0 0.0
    %549 = vmatprep.subr.mxu0 0.0
    %550 = vmatpush1.msra.mxu0 0.0
    %551 = vmatprep.subr.mxu0 0.0
    %552 = vmatpush1.msra.mxu0 0.0
    %553 = vmatprep.subr.mxu0 0.0
    %554 = vmatpush1.msra.mxu0 0.0
    %555 = vmatprep.subr.mxu0 0.0
    %556 = vmatpush1.msra.mxu0 0.0
    %557 = vmatprep.subr.mxu0 0.0
    %558 = vmatpush1.msra.mxu0 0.0
    %559 = vmatprep.subr.mxu0 0.0
    %560 = vmatpush1.msra.mxu0 0.0
    %561 = vmatprep.subr.mxu0 0.0
    %562 = vmatpush1.msra.mxu0 0.0
    %563 = vmatprep.subr.mxu0 0.0
    %564 = vmatpush1.msra.mxu0 0.0
    %565 = vmatprep.subr.mxu0 0.0
    %566 = vmatpush1.msra.mxu0 0.0
    %567 = vmatprep.subr.mxu0 0.0
    %568 = vmatpush1.msra.mxu0 0.0
    %569 = vmatprep.subr.mxu0 0.0
    %570 = vmatpush1.msra.mxu0 0.0
    %571 = vmatprep.subr.mxu0 0.0
    %572 = vmatpush1.msra.mxu0 0.0
    %573 = vmatprep.subr.mxu0 0.0
    %574 = vmatpush1.msra.mxu0 0.0
    %575 = vmatprep.subr.mxu0 0.0
    %576 = vmatpush1.msra.mxu0 0.0
    %577 = vmatprep.subr.mxu0 0.0
    %578 = vmatpush1.msra.mxu0 0.0
    %579 = vmatprep.subr.mxu0 0.0
    %580 = vmatpush1.msra.mxu0 0.0
    %581 = vmatprep.subr.mxu0 0.0
    %582 = vmatpush1.msra.mxu0 0.0
    %583 = vmatprep.subr.mxu0 0.0
    %584 = vmatpush1.msra.mxu0 0.0
    %585 = vmatprep.mubr.f32.mxu0 0.0
    %586 = vmatmul.mubr.f32.gmra.mrb[0].mxu0 %v235
    %v587 = vpop.f32.mrb[0].mxu0
    %v588 = vadd.f32 0.0, %v587
    %v589 = vpop.f32.mrb[0].mxu0
    %v590 = vadd.f32 0.0, %v589
    %591 = vdwg.mxu0
    %592 = vmatprep.subr.mxu0 %v64
    %593 = vmatpush1.msra.mxu0 %v63
    %594 = vmatprep.subr.mxu0 %v79
    %595 = vmatpush1.msra.mxu0 %v78
    %596 = vmatprep.subr.mxu0 %v94
    %597 = vmatpush1.msra.mxu0 %v93
    %598 = vmatprep.subr.mxu0 %v109
    %599 = vmatpush1.msra.mxu0 %v108
    %600 = vmatprep.subr.mxu0 %v124
    %601 = vmatpush1.msra.mxu0 %v123
    %602 = vmatprep.subr.mxu0 %v139
    %603 = vmatpush1.msra.mxu0 %v138
    %604 = vmatprep.subr.mxu0 %v154
    %605 = vmatpush1.msra.mxu0 %v153
    %606 = vmatprep.subr.mxu0 %v169
    %607 = vmatpush1.msra.mxu0 %v168
    %608 = vmatprep.subr.mxu0 %v184
    %609 = vmatpush1.msra.mxu0 %v183
    %610 = vmatprep.subr.mxu0 %v199
    %611 = vmatpush1.msra.mxu0 %v198
    %612 = vmatprep.subr.mxu0 %v214
    %613 = vmatpush1.msra.mxu0 %v213
    %614 = vmatprep.subr.mxu0 %v229
    %615 = vmatpush1.msra.mxu0 %v228
    %616 = vmatprep.subr.mxu0 0.0
    %617 = vmatpush1.msra.mxu0 0.0
    %618 = vmatprep.subr.mxu0 0.0
    %619 = vmatpush1.msra.mxu0 0.0
    %620 = vmatprep.subr.mxu0 0.0
    %621 = vmatpush1.msra.mxu0 0.0
    %622 = vmatprep.subr.mxu0 0.0
    %623 = vmatpush1.msra.mxu0 0.0
    %624 = vmatprep.subr.mxu0 0.0
    %625 = vmatpush1.msra.mxu0 0.0
    %626 = vmatprep.subr.mxu0 0.0
    %627 = vmatpush1.msra.mxu0 0.0
    %628 = vmatprep.subr.mxu0 0.0
    %629 = vmatpush1.msra.mxu0 0.0
    %630 = vmatprep.subr.mxu0 0.0
    %631 = vmatpush1.msra.mxu0 0.0
    %632 = vmatprep.subr.mxu0 0.0
    %633 = vmatpush1.msra.mxu0 0.0
    %634 = vmatprep.subr.mxu0 0.0
    %635 = vmatpush1.msra.mxu0 0.0
    %636 = vmatprep.subr.mxu0 0.0
    %637 = vmatpush1.msra.mxu0 0.0
    %638 = vmatprep.subr.mxu0 0.0
    %639 = vmatpush1.msra.mxu0 0.0
    %640 = vmatprep.subr.mxu0 0.0
    %641 = vmatpush1.msra.mxu0 0.0
    %642 = vmatprep.subr.mxu0 0.0
    %643 = vmatpush1.msra.mxu0 0.0
    %644 = vmatprep.subr.mxu0 0.0
    %645 = vmatpush1.msra.mxu0 0.0
    %646 = vmatprep.subr.mxu0 0.0
    %647 = vmatpush1.msra.mxu0 0.0
    %648 = vmatprep.subr.mxu0 0.0
    %649 = vmatpush1.msra.mxu0 0.0
    %650 = vmatprep.subr.mxu0 0.0
    %651 = vmatpush1.msra.mxu0 0.0
    %652 = vmatprep.subr.mxu0 0.0
    %653 = vmatpush1.msra.mxu0 0.0
    %654 = vmatprep.subr.mxu0 0.0
    %655 = vmatpush1.msra.mxu0 0.0
    %656 = vmatprep.mubr.f32.mxu0 0.0
    %657 = vmatmul.mubr.f32.gmra.mrb[0].mxu0 %v235
    %v658 = vpop.f32.mrb[0].mxu0
    %v659 = vadd.f32 0.0, %v658
    %v660 = vpop.f32.mrb[0].mxu0
    %v661 = vadd.f32 0.0, %v660
    %662 = vdwg.mxu0
    %663 = vmatprep.subr.mxu0 %v66
    %664 = vmatpush1.msra.mxu0 %v65
    %665 = vmatprep.subr.mxu0 %v81
    %666 = vmatpush1.msra.mxu0 %v80
    %667 = vmatprep.subr.mxu0 %v96
    %668 = vmatpush1.msra.mxu0 %v95
    %669 = vmatprep.subr.mxu0 %v111
    %670 = vmatpush1.msra.mxu0 %v110
    %671 = vmatprep.subr.mxu0 %v126
    %672 = vmatpush1.msra.mxu0 %v125
    %673 = vmatprep.subr.mxu0 %v141
    %674 = vmatpush1.msra.mxu0 %v140
    %675 = vmatprep.subr.mxu0 %v156
    %676 = vmatpush1.msra.mxu0 %v155
    %677 = vmatprep.subr.mxu0 %v171
    %678 = vmatpush1.msra.mxu0 %v170
    %679 = vmatprep.subr.mxu0 %v186
    %680 = vmatpush1.msra.mxu0 %v185
    %681 = vmatprep.subr.mxu0 %v201
    %682 = vmatpush1.msra.mxu0 %v200
    %683 = vmatprep.subr.mxu0 %v216
    %684 = vmatpush1.msra.mxu0 %v215
    %685 = vmatprep.subr.mxu0 %v231
    %686 = vmatpush1.msra.mxu0 %v230
    %687 = vmatprep.subr.mxu0 0.0
    %688 = vmatpush1.msra.mxu0 0.0
    %689 = vmatprep.subr.mxu0 0.0
    %690 = vmatpush1.msra.mxu0 0.0
    %691 = vmatprep.subr.mxu0 0.0
    %692 = vmatpush1.msra.mxu0 0.0
    %693 = vmatprep.subr.mxu0 0.0
    %694 = vmatpush1.msra.mxu0 0.0
    %695 = vmatprep.subr.mxu0 0.0
    %696 = vmatpush1.msra.mxu0 0.0
    %697 = vmatprep.subr.mxu0 0.0
    %698 = vmatpush1.msra.mxu0 0.0
    %699 = vmatprep.subr.mxu0 0.0
    %700 = vmatpush1.msra.mxu0 0.0
    %701 = vmatprep.subr.mxu0 0.0
    %702 = vmatpush1.msra.mxu0 0.0
    %703 = vmatprep.subr.mxu0 0.0
    %704 = vmatpush1.msra.mxu0 0.0
    %705 = vmatprep.subr.mxu0 0.0
    %706 = vmatpush1.msra.mxu0 0.0
    %707 = vmatprep.subr.mxu0 0.0
    %708 = vmatpush1.msra.mxu0 0.0
    %709 = vmatprep.subr.mxu0 0.0
    %710 = vmatpush1.msra.mxu0 0.0
    %711 = vmatprep.subr.mxu0 0.0
    %712 = vmatpush1.msra.mxu0 0.0
    %713 = vmatprep.subr.mxu0 0.0
    %714 = vmatpush1.msra.mxu0 0.0
    %715 = vmatprep.subr.mxu0 0.0
    %716 = vmatpush1.msra.mxu0 0.0
    %717 = vmatprep.subr.mxu0 0.0
    %718 = vmatpush1.msra.mxu0 0.0
    %719 = vmatprep.subr.mxu0 0.0
    %720 = vmatpush1.msra.mxu0 0.0
    %721 = vmatprep.subr.mxu0 0.0
    %722 = vmatpush1.msra.mxu0 0.0
    %723 = vmatprep.subr.mxu0 0.0
    %724 = vmatpush1.msra.mxu0 0.0
    %725 = vmatprep.subr.mxu0 0.0
    %726 = vmatpush1.msra.mxu0 0.0
    %727 = vmatprep.mubr.f32.mxu0 0.0
    %728 = vmatmul.mubr.f32.gmra.mrb[0].mxu0 %v235
    %v729 = vpop.f32.mrb[0].mxu0
    %v730 = vadd.f32 0.0, %v729
    %v731 = vpop.f32.mrb[0].mxu0
    %v732 = vadd.f32 0.0, %v731
    %733 = vdwg.mxu0
    %734 = vmatprep.subr.mxu0 0.0
    %735 = vmatpush1.msra.mxu0 %v67
    %736 = vmatprep.subr.mxu0 0.0
    %737 = vmatpush1.msra.mxu0 %v82
    %738 = vmatprep.subr.mxu0 0.0
    %739 = vmatpush1.msra.mxu0 %v97
    %740 = vmatprep.subr.mxu0 0.0
    %741 = vmatpush1.msra.mxu0 %v112
    %742 = vmatprep.subr.mxu0 0.0
    %743 = vmatpush1.msra.mxu0 %v127
    %744 = vmatprep.subr.mxu0 0.0
    %745 = vmatpush1.msra.mxu0 %v142
    %746 = vmatprep.subr.mxu0 0.0
    %747 = vmatpush1.msra.mxu0 %v157
    %748 = vmatprep.subr.mxu0 0.0
    %749 = vmatpush1.msra.mxu0 %v172
    %750 = vmatprep.subr.mxu0 0.0
    %751 = vmatpush1.msra.mxu0 %v187
    %752 = vmatprep.subr.mxu0 0.0
    %753 = vmatpush1.msra.mxu0 %v202
    %754 = vmatprep.subr.mxu0 0.0
    %755 = vmatpush1.msra.mxu0 %v217
    %756 = vmatprep.subr.mxu0 0.0
    %757 = vmatpush1.msra.mxu0 %v232
    %758 = vmatprep.subr.mxu0 0.0
    %759 = vmatpush1.msra.mxu0 0.0
    %760 = vmatprep.subr.mxu0 0.0
    %761 = vmatpush1.msra.mxu0 0.0
    %762 = vmatprep.subr.mxu0 0.0
    %763 = vmatpush1.msra.mxu0 0.0
    %764 = vmatprep.subr.mxu0 0.0
    %765 = vmatpush1.msra.mxu0 0.0
    %766 = vmatprep.subr.mxu0 0.0
    %767 = vmatpush1.msra.mxu0 0.0
    %768 = vmatprep.subr.mxu0 0.0
    %769 = vmatpush1.msra.mxu0 0.0
    %770 = vmatprep.subr.mxu0 0.0
    %771 = vmatpush1.msra.mxu0 0.0
    %772 = vmatprep.subr.mxu0 0.0
    %773 = vmatpush1.msra.mxu0 0.0
    %774 = vmatprep.subr.mxu0 0.0
    %775 = vmatpush1.msra.mxu0 0.0
    %776 = vmatprep.subr.mxu0 0.0
    %777 = vmatpush1.msra.mxu0 0.0
    %778 = vmatprep.subr.mxu0 0.0
    %779 = vmatpush1.msra.mxu0 0.0
    %780 = vmatprep.subr.mxu0 0.0
    %781 = vmatpush1.msra.mxu0 0.0
    %782 = vmatprep.subr.mxu0 0.0
    %783 = vmatpush1.msra.mxu0 0.0
    %784 = vmatprep.subr.mxu0 0.0
    %785 = vmatpush1.msra.mxu0 0.0
    %786 = vmatprep.subr.mxu0 0.0
    %787 = vmatpush1.msra.mxu0 0.0
    %788 = vmatprep.subr.mxu0 0.0
    %789 = vmatpush1.msra.mxu0 0.0
    %790 = vmatprep.subr.mxu0 0.0
    %791 = vmatpush1.msra.mxu0 0.0
    %792 = vmatprep.subr.mxu0 0.0
    %793 = vmatpush1.msra.mxu0 0.0
    %794 = vmatprep.subr.mxu0 0.0
    %795 = vmatpush1.msra.mxu0 0.0
    %796 = vmatprep.subr.mxu0 0.0
    %797 = vmatpush1.msra.mxu0 0.0
    %798 = vmatprep.mubr.f32.mxu0 0.0
    %799 = vmatmul.mubr.f32.gmra.mrb[0].mxu0 %v235
    %v800 = vpop.f32.mrb[0].mxu0
    %v801 = vadd.f32 0.0, %v800
    %v802 = vpop.f32.mrb[0].mxu0
    %803 = vdwg.mxu0
    %v804 = vld [vmem:[#allocation7] sm:$0xff]
    %v805 = vld [vmem:[#allocation7 + $0x8] sm:$0xff]
    %vm806 = vcmp.gt.f32.partialorder %v804, 0.5
    %vm807 = vcmp.gt.f32.partialorder %v805, 0.5
    %v808 = vand.u32 2147483647, %v304
    %vm809 = vcmp.le.f32.partialorder %v808, 0.7853982
    %vm810 = vcmp.lt.s32.totalorder %v304, 0
    %v811 = vand.u32 %v304, 2139095040
    %v812 = vshrl.u32 %v811, 23
    %v813 = vsub.s32 %v812, 127
    %v814 = vand.u32 2147483647, %v304
    %v815 = vand.u32 %v814, 8388607
    %v816 = vor.u32 %v815, 8388608
    %v817 = vsub.s32 0, %v816
    %v818 = vadd.s32 %v813, 1
    %vm819 = vcmp.gt.s32.totalorder %v818, 0
    %v820 = vsel %vm819, %v818, 0
    %v821 = vshrl.u32 %v820, 5
    %v822 = vand.u32 %v820, 31
    %v823 = vsub.s32 32, %v822
    %v824 = vshrl.u32 683565275, %v823
    %v825 = vshll.u32 683565275, %v822
    %v826 = vshrl.u32 2475754826, %v823
    %v827 = vor.u32 %v825, %v826
    %v828 = vshll.u32 2475754826, %v822
    %v829 = vshrl.u32 2131351028, %v823
    %v830 = vor.u32 %v828, %v829
    %v831 = vshll.u32 2131351028, %v822
    %v832 = vshrl.u32 2102212464, %v823
    %v833 = vor.u32 %v831, %v832
    %v834 = vshll.u32 2102212464, %v822
    %v835 = vshrl.u32 920167782, %v823
    %v836 = vor.u32 %v834, %v835
    %v837 = vshll.u32 920167782, %v822
    %v838 = vshrl.u32 1326507024, %v823
    %v839 = vor.u32 %v837, %v838
    %vm840 = vcmp.lt.s32.totalorder %v821, 1
    %vm841 = vcmp.lt.s32.totalorder %v821, 2
    %vm842 = vcmp.lt.s32.totalorder %v821, 3
    %vm843 = vcmp.lt.s32.totalorder %v821, 4
    %v844 = vsel %vm840, %v824, %v827
    %v845 = vsel %vm843, %v833, 2102212464
    %v846 = vsel %vm842, %v830, %v845
    %v847 = vsel %vm841, %v844, %v846
    %v848 = vsel %vm840, %v827, %v830
    %v849 = vsel %vm843, %v836, 920167782
    %v850 = vsel %vm842, %v833, %v849
    %v851 = vsel %vm841, %v848, %v850
    %v852 = vsel %vm840, %v830, %v833
    %v853 = vsel %vm843, %v839, 1326507024
    %v854 = vsel %vm842, %v836, %v853
    %v855 = vsel %vm841, %v852, %v854
    %v856 = vshll.u32 %v816, 8
    %v857 = vmul.u32.u64.compose %v856, %v855
    %v858 = vextract.low.u32 %v857
    %v859 = vextract.high.u32 %v857
    %v860 = vmul.u32.u64.compose %v856, %v851
    %v861 = vextract.low.u32 %v860
    %v862 = vextract.high.u32 %v860
    %v863 = vmul.u32 %v856, %v847
    %v864 = vadd.s32 %v859, %v861
    %vm865 = vc.u32 %v859, %v861
    %v866 = vadd.s32 %v862, 1
    %v867 = vsel %vm865, %v866, %v862
    %v868 = vadd.s32 %v863, %v867
    %v869 = vadd.s32 %v868, 536870912
    %v870 = vshrl.u32 %v869, 30
    %v871 = vshll.u32 %v870, 30
    %v872 = vsub.s32 %v868, %v871
    %vm873 = vcmp.lt.s32.totalorder %v872, 0
    %v874 = vsub.s32 0, %v872
    %v875 = vsel %vm873, %v874, %v872
    %v876 = vclz %v875
    %v877 = vsub.s32 %v876, 2
    %vm878 = vcmp.gt.s32.totalorder 0, %v877
    %v879 = vsel %vm878, 0, %v877
    %v880 = vsub.s32 32, %v879
    %v881 = vshll.u32 %v872, %v879
    %v882 = vshrl.u32 %v864, %v880
    %v883 = vor.u32 %v881, %v882
    %v884 = vsub.s32 4294967266, %v879
    %v885 = vadd.s32 %v884, 127
    %v886 = vshll.u32 %v885, 23
    %v887 = vor.u32 4788187, %v886
    %v888 = vand.u32 2147483647, %v887
    %v890 = vcvt.s32.f32 %v883
    %v891 = vmul.f32 %v890, %v888
    %v892 = vxor.u32 %v891, 2147483648
    %v893 = vsel %vm810, %v892, %v891
    %v894 = vsub.s32 4, %v870
    %v895 = vsel %vm810, %v894, %v870
    %v896 = vsel %vm809, %v304, %v893
    %v897 = vsel %vm809, 0, %v895
    %v898 = vcosq.f32.pop %v896
    %v899 = vsinq.f32.pop %v896
    %vm900 = vweird.f32 %v304
    %v901 = vadd.s32 %v897, 3
    %v902 = vand.u32 %v901, 3
    %vm903 = vcmp.lt.s32.totalorder %v902, 2
    %vm904 = vcmp.eq.s32.totalorder %v902, 0
    %v905 = vxor.u32 %v899, 2147483648
    %v906 = vsel %vm904, %v898, %v905
    %vm907 = vcmp.eq.s32.totalorder %v902, 2
    %v908 = vxor.u32 %v898, 2147483648
    %v909 = vsel %vm907, %v908, %v899
    %v910 = vsel %vm903, %v906, %v909
    %v911 = vsel %vm900, nan, %v910
    %v912 = vand.u32 2147483647, %v306
    %vm913 = vcmp.le.f32.partialorder %v912, 0.7853982
    %vm914 = vcmp.lt.s32.totalorder %v306, 0
    %v915 = vand.u32 %v306, 2139095040
    %v916 = vshrl.u32 %v915, 23
    %v917 = vsub.s32 %v916, 127
    %v918 = vand.u32 2147483647, %v306
    %v919 = vand.u32 %v918, 8388607
    %v920 = vor.u32 %v919, 8388608
    %v921 = vsub.s32 0, %v920
    %v922 = vadd.s32 %v917, 1
    %vm923 = vcmp.gt.s32.totalorder %v922, 0
    %v924 = vsel %vm923, %v922, 0
    %v925 = vshrl.u32 %v924, 5
    %v926 = vand.u32 %v924, 31
    %v927 = vsub.s32 32, %v926
    %v928 = vshrl.u32 683565275, %v927
    %v929 = vshll.u32 683565275, %v926
    %v930 = vshrl.u32 2475754826, %v927
    %v931 = vor.u32 %v929, %v930
    %v932 = vshll.u32 2475754826, %v926
    %v933 = vshrl.u32 2131351028, %v927
    %v934 = vor.u32 %v932, %v933
    %v935 = vshll.u32 2131351028, %v926
    %v936 = vshrl.u32 2102212464, %v927
    %v937 = vor.u32 %v935, %v936
    %v938 = vshll.u32 2102212464, %v926
    %v939 = vshrl.u32 920167782, %v927
    %v940 = vor.u32 %v938, %v939
    %v941 = vshll.u32 920167782, %v926
    %v942 = vshrl.u32 1326507024, %v927
    %v943 = vor.u32 %v941, %v942
    %vm944 = vcmp.lt.s32.totalorder %v925, 1
    %vm945 = vcmp.lt.s32.totalorder %v925, 2
    %vm946 = vcmp.lt.s32.totalorder %v925, 3
    %vm947 = vcmp.lt.s32.totalorder %v925, 4
    %v948 = vsel %vm944, %v928, %v931
    %v949 = vsel %vm947, %v937, 2102212464
    %v950 = vsel %vm946, %v934, %v949
    %v951 = vsel %vm945, %v948, %v950
    %v952 = vsel %vm944, %v931, %v934
    %v953 = vsel %vm947, %v940, 920167782
    %v954 = vsel %vm946, %v937, %v953
    %v955 = vsel %vm945, %v952, %v954
    %v956 = vsel %vm944, %v934, %v937
    %v957 = vsel %vm947, %v943, 1326507024
    %v958 = vsel %vm946, %v940, %v957
    %v959 = vsel %vm945, %v956, %v958
    %v960 = vshll.u32 %v920, 8
    %v961 = vmul.u32.u64.compose %v960, %v959
    %v962 = vextract.low.u32 %v961
    %v963 = vextract.high.u32 %v961
    %v964 = vmul.u32.u64.compose %v960, %v955
    %v965 = vextract.low.u32 %v964
    %v966 = vextract.high.u32 %v964
    %v967 = vmul.u32 %v960, %v951
    %v968 = vadd.s32 %v963, %v965
    %vm969 = vc.u32 %v963, %v965
    %v970 = vadd.s32 %v966, 1
    %v971 = vsel %vm969, %v970, %v966
    %v972 = vadd.s32 %v967, %v971
    %v973 = vadd.s32 %v972, 536870912
    %v974 = vshrl.u32 %v973, 30
    %v975 = vshll.u32 %v974, 30
    %v976 = vsub.s32 %v972, %v975
    %vm977 = vcmp.lt.s32.totalorder %v976, 0
    %v978 = vsub.s32 0, %v976
    %v979 = vsel %vm977, %v978, %v976
    %v980 = vclz %v979
    %v981 = vsub.s32 %v980, 2
    %vm982 = vcmp.gt.s32.totalorder 0, %v981
    %v983 = vsel %vm982, 0, %v981
    %v984 = vsub.s32 32, %v983
    %v985 = vshll.u32 %v976, %v983
    %v986 = vshrl.u32 %v968, %v984
    %v987 = vor.u32 %v985, %v986
    %v988 = vsub.s32 4294967266, %v983
    %v989 = vadd.s32 %v988, 127
    %v990 = vshll.u32 %v989, 23
    %v991 = vor.u32 4788187, %v990
    %v992 = vand.u32 2147483647, %v991
    %v994 = vcvt.s32.f32 %v987
    %v995 = vmul.f32 %v994, %v992
    %v996 = vxor.u32 %v995, 2147483648
    %v997 = vsel %vm914, %v996, %v995
    %v998 = vsub.s32 4, %v974
    %v999 = vsel %vm914, %v998, %v974
    %v1000 = vsel %vm913, %v306, %v997
    %v1001 = vsel %vm913, 0, %v999
    %v1002 = vcosq.f32.pop %v1000
    %v1003 = vsinq.f32.pop %v1000
    %vm1004 = vweird.f32 %v306
    %v1005 = vadd.s32 %v1001, 3
    %v1006 = vand.u32 %v1005, 3
    %vm1007 = vcmp.lt.s32.totalorder %v1006, 2
    %vm1008 = vcmp.eq.s32.totalorder %v1006, 0
    %v1009 = vxor.u32 %v1003, 2147483648
    %v1010 = vsel %vm1008, %v1002, %v1009
    %vm1011 = vcmp.eq.s32.totalorder %v1006, 2
    %v1012 = vxor.u32 %v1002, 2147483648
    %v1013 = vsel %vm1011, %v1012, %v1003
    %v1014 = vsel %vm1007, %v1010, %v1013
    %v1015 = vsel %vm1004, nan, %v1014
    %v1016 = vand.u32 2147483647, %v375
    %vm1017 = vcmp.le.f32.partialorder %v1016, 0.7853982
    %vm1018 = vcmp.lt.s32.totalorder %v375, 0
    %v1019 = vand.u32 %v375, 2139095040
    %v1020 = vshrl.u32 %v1019, 23
    %v1021 = vsub.s32 %v1020, 127
    %v1022 = vand.u32 2147483647, %v375
    %v1023 = vand.u32 %v1022, 8388607
    %v1024 = vor.u32 %v1023, 8388608
    %v1025 = vsub.s32 0, %v1024
    %v1026 = vadd.s32 %v1021, 1
    %vm1027 = vcmp.gt.s32.totalorder %v1026, 0
    %v1028 = vsel %vm1027, %v1026, 0
    %v1029 = vshrl.u32 %v1028, 5
    %v1030 = vand.u32 %v1028, 31
    %v1031 = vsub.s32 32, %v1030
    %v1032 = vshrl.u32 683565275, %v1031
    %v1033 = vshll.u32 683565275, %v1030
    %v1034 = vshrl.u32 2475754826, %v1031
    %v1035 = vor.u32 %v1033, %v1034
    %v1036 = vshll.u32 2475754826, %v1030
    %v1037 = vshrl.u32 2131351028, %v1031
    %v1038 = vor.u32 %v1036, %v1037
    %v1039 = vshll.u32 2131351028, %v1030
    %v1040 = vshrl.u32 2102212464, %v1031
    %v1041 = vor.u32 %v1039, %v1040
    %v1042 = vshll.u32 2102212464, %v1030
    %v1043 = vshrl.u32 920167782, %v1031
    %v1044 = vor.u32 %v1042, %v1043
    %v1045 = vshll.u32 920167782, %v1030
    %v1046 = vshrl.u32 1326507024, %v1031
    %v1047 = vor.u32 %v1045, %v1046
    %vm1048 = vcmp.lt.s32.totalorder %v1029, 1
    %vm1049 = vcmp.lt.s32.totalorder %v1029, 2
    %vm1050 = vcmp.lt.s32.totalorder %v1029, 3
    %vm1051 = vcmp.lt.s32.totalorder %v1029, 4
    %v1052 = vsel %vm1048, %v1032, %v1035
    %v1053 = vsel %vm1051, %v1041, 2102212464
    %v1054 = vsel %vm1050, %v1038, %v1053
    %v1055 = vsel %vm1049, %v1052, %v1054
    %v1056 = vsel %vm1048, %v1035, %v1038
    %v1057 = vsel %vm1051, %v1044, 920167782
    %v1058 = vsel %vm1050, %v1041, %v1057
    %v1059 = vsel %vm1049, %v1056, %v1058
    %v1060 = vsel %vm1048, %v1038, %v1041
    %v1061 = vsel %vm1051, %v1047, 1326507024
    %v1062 = vsel %vm1050, %v1044, %v1061
    %v1063 = vsel %vm1049, %v1060, %v1062
    %v1064 = vshll.u32 %v1024, 8
    %v1065 = vmul.u32.u64.compose %v1064, %v1063
    %v1066 = vextract.low.u32 %v1065
    %v1067 = vextract.high.u32 %v1065
    %v1068 = vmul.u32.u64.compose %v1064, %v1059
    %v1069 = vextract.low.u32 %v1068
    %v1070 = vextract.high.u32 %v1068
    %v1071 = vmul.u32 %v1064, %v1055
    %v1072 = vadd.s32 %v1067, %v1069
    %vm1073 = vc.u32 %v1067, %v1069
    %v1074 = vadd.s32 %v1070, 1
    %v1075 = vsel %vm1073, %v1074, %v1070
    %v1076 = vadd.s32 %v1071, %v1075
    %v1077 = vadd.s32 %v1076, 536870912
    %v1078 = vshrl.u32 %v1077, 30
    %v1079 = vshll.u32 %v1078, 30
    %v1080 = vsub.s32 %v1076, %v1079
    %vm1081 = vcmp.lt.s32.totalorder %v1080, 0
    %v1082 = vsub.s32 0, %v1080
    %v1083 = vsel %vm1081, %v1082, %v1080
    %v1084 = vclz %v1083
    %v1085 = vsub.s32 %v1084, 2
    %vm1086 = vcmp.gt.s32.totalorder 0, %v1085
    %v1087 = vsel %vm1086, 0, %v1085
    %v1088 = vsub.s32 32, %v1087
    %v1089 = vshll.u32 %v1080, %v1087
    %v1090 = vshrl.u32 %v1072, %v1088
    %v1091 = vor.u32 %v1089, %v1090
    %v1092 = vsub.s32 4294967266, %v1087
    %v1093 = vadd.s32 %v1092, 127
    %v1094 = vshll.u32 %v1093, 23
    %v1095 = vor.u32 4788187, %v1094
    %v1096 = vand.u32 2147483647, %v1095
    %v1098 = vcvt.s32.f32 %v1091
    %v1099 = vmul.f32 %v1098, %v1096
    %v1100 = vxor.u32 %v1099, 2147483648
    %v1101 = vsel %vm1018, %v1100, %v1099
    %v1102 = vsub.s32 4, %v1078
    %v1103 = vsel %vm1018, %v1102, %v1078
    %v1104 = vsel %vm1017, %v375, %v1101
    %v1105 = vsel %vm1017, 0, %v1103
    %v1106 = vcosq.f32.pop %v1104
    %v1107 = vsinq.f32.pop %v1104
    %vm1108 = vweird.f32 %v375
    %v1109 = vadd.s32 %v1105, 3
    %v1110 = vand.u32 %v1109, 3
    %vm1111 = vcmp.lt.s32.totalorder %v1110, 2
    %vm1112 = vcmp.eq.s32.totalorder %v1110, 0
    %v1113 = vxor.u32 %v1107, 2147483648
    %v1114 = vsel %vm1112, %v1106, %v1113
    %vm1115 = vcmp.eq.s32.totalorder %v1110, 2
    %v1116 = vxor.u32 %v1106, 2147483648
    %v1117 = vsel %vm1115, %v1116, %v1107
    %v1118 = vsel %vm1111, %v1114, %v1117
    %v1119 = vsel %vm1108, nan, %v1118
    %v1120 = vand.u32 2147483647, %v377
    %vm1121 = vcmp.le.f32.partialorder %v1120, 0.7853982
    %vm1122 = vcmp.lt.s32.totalorder %v377, 0
    %v1123 = vand.u32 %v377, 2139095040
    %v1124 = vshrl.u32 %v1123, 23
    %v1125 = vsub.s32 %v1124, 127
    %v1126 = vand.u32 2147483647, %v377
    %v1127 = vand.u32 %v1126, 8388607
    %v1128 = vor.u32 %v1127, 8388608
    %v1129 = vsub.s32 0, %v1128
    %v1130 = vadd.s32 %v1125, 1
    %vm1131 = vcmp.gt.s32.totalorder %v1130, 0
    %v1132 = vsel %vm1131, %v1130, 0
    %v1133 = vshrl.u32 %v1132, 5
    %v1134 = vand.u32 %v1132, 31
    %v1135 = vsub.s32 32, %v1134
    %v1136 = vshrl.u32 683565275, %v1135
    %v1137 = vshll.u32 683565275, %v1134
    %v1138 = vshrl.u32 2475754826, %v1135
    %v1139 = vor.u32 %v1137, %v1138
    %v1140 = vshll.u32 2475754826, %v1134
    %v1141 = vshrl.u32 2131351028, %v1135
    %v1142 = vor.u32 %v1140, %v1141
    %v1143 = vshll.u32 2131351028, %v1134
    %v1144 = vshrl.u32 2102212464, %v1135
    %v1145 = vor.u32 %v1143, %v1144
    %v1146 = vshll.u32 2102212464, %v1134
    %v1147 = vshrl.u32 920167782, %v1135
    %v1148 = vor.u32 %v1146, %v1147
    %v1149 = vshll.u32 920167782, %v1134
    %v1150 = vshrl.u32 1326507024, %v1135
    %v1151 = vor.u32 %v1149, %v1150
    %vm1152 = vcmp.lt.s32.totalorder %v1133, 1
    %vm1153 = vcmp.lt.s32.totalorder %v1133, 2
    %vm1154 = vcmp.lt.s32.totalorder %v1133, 3
    %vm1155 = vcmp.lt.s32.totalorder %v1133, 4
    %v1156 = vsel %vm1152, %v1136, %v1139
    %v1157 = vsel %vm1155, %v1145, 2102212464
    %v1158 = vsel %vm1154, %v1142, %v1157
    %v1159 = vsel %vm1153, %v1156, %v1158
    %v1160 = vsel %vm1152, %v1139, %v1142
    %v1161 = vsel %vm1155, %v1148, 920167782
    %v1162 = vsel %vm1154, %v1145, %v1161
    %v1163 = vsel %vm1153, %v1160, %v1162
    %v1164 = vsel %vm1152, %v1142, %v1145
    %v1165 = vsel %vm1155, %v1151, 1326507024
    %v1166 = vsel %vm1154, %v1148, %v1165
    %v1167 = vsel %vm1153, %v1164, %v1166
    %v1168 = vshll.u32 %v1128, 8
    %v1169 = vmul.u32.u64.compose %v1168, %v1167
    %v1170 = vextract.low.u32 %v1169
    %v1171 = vextract.high.u32 %v1169
    %v1172 = vmul.u32.u64.compose %v1168, %v1163
    %v1173 = vextract.low.u32 %v1172
    %v1174 = vextract.high.u32 %v1172
    %v1175 = vmul.u32 %v1168, %v1159
    %v1176 = vadd.s32 %v1171, %v1173
    %vm1177 = vc.u32 %v1171, %v1173
    %v1178 = vadd.s32 %v1174, 1
    %v1179 = vsel %vm1177, %v1178, %v1174
    %v1180 = vadd.s32 %v1175, %v1179
    %v1181 = vadd.s32 %v1180, 536870912
    %v1182 = vshrl.u32 %v1181, 30
    %v1183 = vshll.u32 %v1182, 30
    %v1184 = vsub.s32 %v1180, %v1183
    %vm1185 = vcmp.lt.s32.totalorder %v1184, 0
    %v1186 = vsub.s32 0, %v1184
    %v1187 = vsel %vm1185, %v1186, %v1184
    %v1188 = vclz %v1187
    %v1189 = vsub.s32 %v1188, 2
    %vm1190 = vcmp.gt.s32.totalorder 0, %v1189
    %v1191 = vsel %vm1190, 0, %v1189
    %v1192 = vsub.s32 32, %v1191
    %v1193 = vshll.u32 %v1184, %v1191
    %v1194 = vshrl.u32 %v1176, %v1192
    %v1195 = vor.u32 %v1193, %v1194
    %v1196 = vsub.s32 4294967266, %v1191
    %v1197 = vadd.s32 %v1196, 127
    %v1198 = vshll.u32 %v1197, 23
    %v1199 = vor.u32 4788187, %v1198
    %v1200 = vand.u32 2147483647, %v1199
    %v1202 = vcvt.s32.f32 %v1195
    %v1203 = vmul.f32 %v1202, %v1200
    %v1204 = vxor.u32 %v1203, 2147483648
    %v1205 = vsel %vm1122, %v1204, %v1203
    %v1206 = vsub.s32 4, %v1182
    %v1207 = vsel %vm1122, %v1206, %v1182
    %v1208 = vsel %vm1121, %v377, %v1205
    %v1209 = vsel %vm1121, 0, %v1207
    %v1210 = vcosq.f32.pop %v1208
    %v1211 = vsinq.f32.pop %v1208
    %vm1212 = vweird.f32 %v377
    %v1213 = vadd.s32 %v1209, 3
    %v1214 = vand.u32 %v1213, 3
    %vm1215 = vcmp.lt.s32.totalorder %v1214, 2
    %vm1216 = vcmp.eq.s32.totalorder %v1214, 0
    %v1217 = vxor.u32 %v1211, 2147483648
    %v1218 = vsel %vm1216, %v1210, %v1217
    %vm1219 = vcmp.eq.s32.totalorder %v1214, 2
    %v1220 = vxor.u32 %v1210, 2147483648
    %v1221 = vsel %vm1219, %v1220, %v1211
    %v1222 = vsel %vm1215, %v1218, %v1221
    %v1223 = vsel %vm1212, nan, %v1222
    %v1224 = vand.u32 2147483647, %v446
    %vm1225 = vcmp.le.f32.partialorder %v1224, 0.7853982
    %vm1226 = vcmp.lt.s32.totalorder %v446, 0
    %v1227 = vand.u32 %v446, 2139095040
    %v1228 = vshrl.u32 %v1227, 23
    %v1229 = vsub.s32 %v1228, 127
    %v1230 = vand.u32 2147483647, %v446
    %v1231 = vand.u32 %v1230, 8388607
    %v1232 = vor.u32 %v1231, 8388608
    %v1233 = vsub.s32 0, %v1232
    %v1234 = vadd.s32 %v1229, 1
    %vm1235 = vcmp.gt.s32.totalorder %v1234, 0
    %v1236 = vsel %vm1235, %v1234, 0
    %v1237 = vshrl.u32 %v1236, 5
    %v1238 = vand.u32 %v1236, 31
    %v1239 = vsub.s32 32, %v1238
    %v1240 = vshrl.u32 683565275, %v1239
    %v1241 = vshll.u32 683565275, %v1238
    %v1242 = vshrl.u32 2475754826, %v1239
    %v1243 = vor.u32 %v1241, %v1242
    %v1244 = vshll.u32 2475754826, %v1238
    %v1245 = vshrl.u32 2131351028, %v1239
    %v1246 = vor.u32 %v1244, %v1245
    %v1247 = vshll.u32 2131351028, %v1238
    %v1248 = vshrl.u32 2102212464, %v1239
    %v1249 = vor.u32 %v1247, %v1248
    %v1250 = vshll.u32 2102212464, %v1238
    %v1251 = vshrl.u32 920167782, %v1239
    %v1252 = vor.u32 %v1250, %v1251
    %v1253 = vshll.u32 920167782, %v1238
    %v1254 = vshrl.u32 1326507024, %v1239
    %v1255 = vor.u32 %v1253, %v1254
    %vm1256 = vcmp.lt.s32.totalorder %v1237, 1
    %vm1257 = vcmp.lt.s32.totalorder %v1237, 2
    %vm1258 = vcmp.lt.s32.totalorder %v1237, 3
    %vm1259 = vcmp.lt.s32.totalorder %v1237, 4
    %v1260 = vsel %vm1256, %v1240, %v1243
    %v1261 = vsel %vm1259, %v1249, 2102212464
    %v1262 = vsel %vm1258, %v1246, %v1261
    %v1263 = vsel %vm1257, %v1260, %v1262
    %v1264 = vsel %vm1256, %v1243, %v1246
    %v1265 = vsel %vm1259, %v1252, 920167782
    %v1266 = vsel %vm1258, %v1249, %v1265
    %v1267 = vsel %vm1257, %v1264, %v1266
    %v1268 = vsel %vm1256, %v1246, %v1249
    %v1269 = vsel %vm1259, %v1255, 1326507024
    %v1270 = vsel %vm1258, %v1252, %v1269
    %v1271 = vsel %vm1257, %v1268, %v1270
    %v1272 = vshll.u32 %v1232, 8
    %v1273 = vmul.u32.u64.compose %v1272, %v1271
    %v1274 = vextract.low.u32 %v1273
    %v1275 = vextract.high.u32 %v1273
    %v1276 = vmul.u32.u64.compose %v1272, %v1267
    %v1277 = vextract.low.u32 %v1276
    %v1278 = vextract.high.u32 %v1276
    %v1279 = vmul.u32 %v1272, %v1263
    %v1280 = vadd.s32 %v1275, %v1277
    %vm1281 = vc.u32 %v1275, %v1277
    %v1282 = vadd.s32 %v1278, 1
    %v1283 = vsel %vm1281, %v1282, %v1278
    %v1284 = vadd.s32 %v1279, %v1283
    %v1285 = vadd.s32 %v1284, 536870912
    %v1286 = vshrl.u32 %v1285, 30
    %v1287 = vshll.u32 %v1286, 30
    %v1288 = vsub.s32 %v1284, %v1287
    %vm1289 = vcmp.lt.s32.totalorder %v1288, 0
    %v1290 = vsub.s32 0, %v1288
    %v1291 = vsel %vm1289, %v1290, %v1288
    %v1292 = vclz %v1291
    %v1293 = vsub.s32 %v1292, 2
    %vm1294 = vcmp.gt.s32.totalorder 0, %v1293
    %v1295 = vsel %vm1294, 0, %v1293
    %v1296 = vsub.s32 32, %v1295
    %v1297 = vshll.u32 %v1288, %v1295
    %v1298 = vshrl.u32 %v1280, %v1296
    %v1299 = vor.u32 %v1297, %v1298
    %v1300 = vsub.s32 4294967266, %v1295
    %v1301 = vadd.s32 %v1300, 127
    %v1302 = vshll.u32 %v1301, 23
    %v1303 = vor.u32 4788187, %v1302
    %v1304 = vand.u32 2147483647, %v1303
    %v1306 = vcvt.s32.f32 %v1299
    %v1307 = vmul.f32 %v1306, %v1304
    %v1308 = vxor.u32 %v1307, 2147483648
    %v1309 = vsel %vm1226, %v1308, %v1307
    %v1310 = vsub.s32 4, %v1286
    %v1311 = vsel %vm1226, %v1310, %v1286
    %v1312 = vsel %vm1225, %v446, %v1309
    %v1313 = vsel %vm1225, 0, %v1311
    %v1314 = vcosq.f32.pop %v1312
    %v1315 = vsinq.f32.pop %v1312
    %vm1316 = vweird.f32 %v446
    %v1317 = vadd.s32 %v1313, 3
    %v1318 = vand.u32 %v1317, 3
    %vm1319 = vcmp.lt.s32.totalorder %v1318, 2
    %vm1320 = vcmp.eq.s32.totalorder %v1318, 0
    %v1321 = vxor.u32 %v1315, 2147483648
    %v1322 = vsel %vm1320, %v1314, %v1321
    %vm1323 = vcmp.eq.s32.totalorder %v1318, 2
    %v1324 = vxor.u32 %v1314, 2147483648
    %v1325 = vsel %vm1323, %v1324, %v1315
    %v1326 = vsel %vm1319, %v1322, %v1325
    %v1327 = vsel %vm1316, nan, %v1326
    %v1328 = vand.u32 2147483647, %v448
    %vm1329 = vcmp.le.f32.partialorder %v1328, 0.7853982
    %vm1330 = vcmp.lt.s32.totalorder %v448, 0
    %v1331 = vand.u32 %v448, 2139095040
    %v1332 = vshrl.u32 %v1331, 23
    %v1333 = vsub.s32 %v1332, 127
    %v1334 = vand.u32 2147483647, %v448
    %v1335 = vand.u32 %v1334, 8388607
    %v1336 = vor.u32 %v1335, 8388608
    %v1337 = vsub.s32 0, %v1336
    %v1338 = vadd.s32 %v1333, 1
    %vm1339 = vcmp.gt.s32.totalorder %v1338, 0
    %v1340 = vsel %vm1339, %v1338, 0
    %v1341 = vshrl.u32 %v1340, 5
    %v1342 = vand.u32 %v1340, 31
    %v1343 = vsub.s32 32, %v1342
    %v1344 = vshrl.u32 683565275, %v1343
    %v1345 = vshll.u32 683565275, %v1342
    %v1346 = vshrl.u32 2475754826, %v1343
    %v1347 = vor.u32 %v1345, %v1346
    %v1348 = vshll.u32 2475754826, %v1342
    %v1349 = vshrl.u32 2131351028, %v1343
    %v1350 = vor.u32 %v1348, %v1349
    %v1351 = vshll.u32 2131351028, %v1342
    %v1352 = vshrl.u32 2102212464, %v1343
    %v1353 = vor.u32 %v1351, %v1352
    %v1354 = vshll.u32 2102212464, %v1342
    %v1355 = vshrl.u32 920167782, %v1343
    %v1356 = vor.u32 %v1354, %v1355
    %v1357 = vshll.u32 920167782, %v1342
    %v1358 = vshrl.u32 1326507024, %v1343
    %v1359 = vor.u32 %v1357, %v1358
    %vm1360 = vcmp.lt.s32.totalorder %v1341, 1
    %vm1361 = vcmp.lt.s32.totalorder %v1341, 2
    %vm1362 = vcmp.lt.s32.totalorder %v1341, 3
    %vm1363 = vcmp.lt.s32.totalorder %v1341, 4
    %v1364 = vsel %vm1360, %v1344, %v1347
    %v1365 = vsel %vm1363, %v1353, 2102212464
    %v1366 = vsel %vm1362, %v1350, %v1365
    %v1367 = vsel %vm1361, %v1364, %v1366
    %v1368 = vsel %vm1360, %v1347, %v1350
    %v1369 = vsel %vm1363, %v1356, 920167782
    %v1370 = vsel %vm1362, %v1353, %v1369
    %v1371 = vsel %vm1361, %v1368, %v1370
    %v1372 = vsel %vm1360, %v1350, %v1353
    %v1373 = vsel %vm1363, %v1359, 1326507024
    %v1374 = vsel %vm1362, %v1356, %v1373
    %v1375 = vsel %vm1361, %v1372, %v1374
    %v1376 = vshll.u32 %v1336, 8
    %v1377 = vmul.u32.u64.compose %v1376, %v1375
    %v1378 = vextract.low.u32 %v1377
    %v1379 = vextract.high.u32 %v1377
    %v1380 = vmul.u32.u64.compose %v1376, %v1371
    %v1381 = vextract.low.u32 %v1380
    %v1382 = vextract.high.u32 %v1380
    %v1383 = vmul.u32 %v1376, %v1367
    %v1384 = vadd.s32 %v1379, %v1381
    %vm1385 = vc.u32 %v1379, %v1381
    %v1386 = vadd.s32 %v1382, 1
    %v1387 = vsel %vm1385, %v1386, %v1382
    %v1388 = vadd.s32 %v1383, %v1387
    %v1389 = vadd.s32 %v1388, 536870912
    %v1390 = vshrl.u32 %v1389, 30
    %v1391 = vshll.u32 %v1390, 30
    %v1392 = vsub.s32 %v1388, %v1391
    %vm1393 = vcmp.lt.s32.totalorder %v1392, 0
    %v1394 = vsub.s32 0, %v1392
    %v1395 = vsel %vm1393, %v1394, %v1392
    %v1396 = vclz %v1395
    %v1397 = vsub.s32 %v1396, 2
    %vm1398 = vcmp.gt.s32.totalorder 0, %v1397
    %v1399 = vsel %vm1398, 0, %v1397
    %v1400 = vsub.s32 32, %v1399
    %v1401 = vshll.u32 %v1392, %v1399
    %v1402 = vshrl.u32 %v1384, %v1400
    %v1403 = vor.u32 %v1401, %v1402
    %v1404 = vsub.s32 4294967266, %v1399
    %v1405 = vadd.s32 %v1404, 127
    %v1406 = vshll.u32 %v1405, 23
    %v1407 = vor.u32 4788187, %v1406
    %v1408 = vand.u32 2147483647, %v1407
    %v1410 = vcvt.s32.f32 %v1403
    %v1411 = vmul.f32 %v1410, %v1408
    %v1412 = vxor.u32 %v1411, 2147483648
    %v1413 = vsel %vm1330, %v1412, %v1411
    %v1414 = vsub.s32 4, %v1390
    %v1415 = vsel %vm1330, %v1414, %v1390
    %v1416 = vsel %vm1329, %v448, %v1413
    %v1417 = vsel %vm1329, 0, %v1415
    %v1418 = vcosq.f32.pop %v1416
    %v1419 = vsinq.f32.pop %v1416
    %vm1420 = vweird.f32 %v448
    %v1421 = vadd.s32 %v1417, 3
    %v1422 = vand.u32 %v1421, 3
    %vm1423 = vcmp.lt.s32.totalorder %v1422, 2
    %vm1424 = vcmp.eq.s32.totalorder %v1422, 0
    %v1425 = vxor.u32 %v1419, 2147483648
    %v1426 = vsel %vm1424, %v1418, %v1425
    %vm1427 = vcmp.eq.s32.totalorder %v1422, 2
    %v1428 = vxor.u32 %v1418, 2147483648
    %v1429 = vsel %vm1427, %v1428, %v1419
    %v1430 = vsel %vm1423, %v1426, %v1429
    %v1431 = vsel %vm1420, nan, %v1430
    %v1432 = vand.u32 2147483647, %v517
    %vm1433 = vcmp.le.f32.partialorder %v1432, 0.7853982
    %vm1434 = vcmp.lt.s32.totalorder %v517, 0
    %v1435 = vand.u32 %v517, 2139095040
    %v1436 = vshrl.u32 %v1435, 23
    %v1437 = vsub.s32 %v1436, 127
    %v1438 = vand.u32 2147483647, %v517
    %v1439 = vand.u32 %v1438, 8388607
    %v1440 = vor.u32 %v1439, 8388608
    %v1441 = vsub.s32 0, %v1440
    %v1442 = vadd.s32 %v1437, 1
    %vm1443 = vcmp.gt.s32.totalorder %v1442, 0
    %v1444 = vsel %vm1443, %v1442, 0
    %v1445 = vshrl.u32 %v1444, 5
    %v1446 = vand.u32 %v1444, 31
    %v1447 = vsub.s32 32, %v1446
    %v1448 = vshrl.u32 683565275, %v1447
    %v1449 = vshll.u32 683565275, %v1446
    %v1450 = vshrl.u32 2475754826, %v1447
    %v1451 = vor.u32 %v1449, %v1450
    %v1452 = vshll.u32 2475754826, %v1446
    %v1453 = vshrl.u32 2131351028, %v1447
    %v1454 = vor.u32 %v1452, %v1453
    %v1455 = vshll.u32 2131351028, %v1446
    %v1456 = vshrl.u32 2102212464, %v1447
    %v1457 = vor.u32 %v1455, %v1456
    %v1458 = vshll.u32 2102212464, %v1446
    %v1459 = vshrl.u32 920167782, %v1447
    %v1460 = vor.u32 %v1458, %v1459
    %v1461 = vshll.u32 920167782, %v1446
    %v1462 = vshrl.u32 1326507024, %v1447
    %v1463 = vor.u32 %v1461, %v1462
    %vm1464 = vcmp.lt.s32.totalorder %v1445, 1
    %vm1465 = vcmp.lt.s32.totalorder %v1445, 2
    %vm1466 = vcmp.lt.s32.totalorder %v1445, 3
    %vm1467 = vcmp.lt.s32.totalorder %v1445, 4
    %v1468 = vsel %vm1464, %v1448, %v1451
    %v1469 = vsel %vm1467, %v1457, 2102212464
    %v1470 = vsel %vm1466, %v1454, %v1469
    %v1471 = vsel %vm1465, %v1468, %v1470
    %v1472 = vsel %vm1464, %v1451, %v1454
    %v1473 = vsel %vm1467, %v1460, 920167782
    %v1474 = vsel %vm1466, %v1457, %v1473
    %v1475 = vsel %vm1465, %v1472, %v1474
    %v1476 = vsel %vm1464, %v1454, %v1457
    %v1477 = vsel %vm1467, %v1463, 1326507024
    %v1478 = vsel %vm1466, %v1460, %v1477
    %v1479 = vsel %vm1465, %v1476, %v1478
    %v1480 = vshll.u32 %v1440, 8
    %v1481 = vmul.u32.u64.compose %v1480, %v1479
    %v1482 = vextract.low.u32 %v1481
    %v1483 = vextract.high.u32 %v1481
    %v1484 = vmul.u32.u64.compose %v1480, %v1475
    %v1485 = vextract.low.u32 %v1484
    %v1486 = vextract.high.u32 %v1484
    %v1487 = vmul.u32 %v1480, %v1471
    %v1488 = vadd.s32 %v1483, %v1485
    %vm1489 = vc.u32 %v1483, %v1485
    %v1490 = vadd.s32 %v1486, 1
    %v1491 = vsel %vm1489, %v1490, %v1486
    %v1492 = vadd.s32 %v1487, %v1491
    %v1493 = vadd.s32 %v1492, 536870912
    %v1494 = vshrl.u32 %v1493, 30
    %v1495 = vshll.u32 %v1494, 30
    %v1496 = vsub.s32 %v1492, %v1495
    %vm1497 = vcmp.lt.s32.totalorder %v1496, 0
    %v1498 = vsub.s32 0, %v1496
    %v1499 = vsel %vm1497, %v1498, %v1496
    %v1500 = vclz %v1499
    %v1501 = vsub.s32 %v1500, 2
    %vm1502 = vcmp.gt.s32.totalorder 0, %v1501
    %v1503 = vsel %vm1502, 0, %v1501
    %v1504 = vsub.s32 32, %v1503
    %v1505 = vshll.u32 %v1496, %v1503
    %v1506 = vshrl.u32 %v1488, %v1504
    %v1507 = vor.u32 %v1505, %v1506
    %v1508 = vsub.s32 4294967266, %v1503
    %v1509 = vadd.s32 %v1508, 127
    %v1510 = vshll.u32 %v1509, 23
    %v1511 = vor.u32 4788187, %v1510
    %v1512 = vand.u32 2147483647, %v1511
    %v1514 = vcvt.s32.f32 %v1507
    %v1515 = vmul.f32 %v1514, %v1512
    %v1516 = vxor.u32 %v1515, 2147483648
    %v1517 = vsel %vm1434, %v1516, %v1515
    %v1518 = vsub.s32 4, %v1494
    %v1519 = vsel %vm1434, %v1518, %v1494
    %v1520 = vsel %vm1433, %v517, %v1517
    %v1521 = vsel %vm1433, 0, %v1519
    %v1522 = vcosq.f32.pop %v1520
    %v1523 = vsinq.f32.pop %v1520
    %vm1524 = vweird.f32 %v517
    %v1525 = vadd.s32 %v1521, 3
    %v1526 = vand.u32 %v1525, 3
    %vm1527 = vcmp.lt.s32.totalorder %v1526, 2
    %vm1528 = vcmp.eq.s32.totalorder %v1526, 0
    %v1529 = vxor.u32 %v1523, 2147483648
    %v1530 = vsel %vm1528, %v1522, %v1529
    %vm1531 = vcmp.eq.s32.totalorder %v1526, 2
    %v1532 = vxor.u32 %v1522, 2147483648
    %v1533 = vsel %vm1531, %v1532, %v1523
    %v1534 = vsel %vm1527, %v1530, %v1533
    %v1535 = vsel %vm1524, nan, %v1534
    %v1536 = vand.u32 2147483647, %v519
    %vm1537 = vcmp.le.f32.partialorder %v1536, 0.7853982
    %vm1538 = vcmp.lt.s32.totalorder %v519, 0
    %v1539 = vand.u32 %v519, 2139095040
    %v1540 = vshrl.u32 %v1539, 23
    %v1541 = vsub.s32 %v1540, 127
    %v1542 = vand.u32 2147483647, %v519
    %v1543 = vand.u32 %v1542, 8388607
    %v1544 = vor.u32 %v1543, 8388608
    %v1545 = vsub.s32 0, %v1544
    %v1546 = vadd.s32 %v1541, 1
    %vm1547 = vcmp.gt.s32.totalorder %v1546, 0
    %v1548 = vsel %vm1547, %v1546, 0
    %v1549 = vshrl.u32 %v1548, 5
    %v1550 = vand.u32 %v1548, 31
    %v1551 = vsub.s32 32, %v1550
    %v1552 = vshrl.u32 683565275, %v1551
    %v1553 = vshll.u32 683565275, %v1550
    %v1554 = vshrl.u32 2475754826, %v1551
    %v1555 = vor.u32 %v1553, %v1554
    %v1556 = vshll.u32 2475754826, %v1550
    %v1557 = vshrl.u32 2131351028, %v1551
    %v1558 = vor.u32 %v1556, %v1557
    %v1559 = vshll.u32 2131351028, %v1550
    %v1560 = vshrl.u32 2102212464, %v1551
    %v1561 = vor.u32 %v1559, %v1560
    %v1562 = vshll.u32 2102212464, %v1550
    %v1563 = vshrl.u32 920167782, %v1551
    %v1564 = vor.u32 %v1562, %v1563
    %v1565 = vshll.u32 920167782, %v1550
    %v1566 = vshrl.u32 1326507024, %v1551
    %v1567 = vor.u32 %v1565, %v1566
    %vm1568 = vcmp.lt.s32.totalorder %v1549, 1
    %vm1569 = vcmp.lt.s32.totalorder %v1549, 2
    %vm1570 = vcmp.lt.s32.totalorder %v1549, 3
    %vm1571 = vcmp.lt.s32.totalorder %v1549, 4
    %v1572 = vsel %vm1568, %v1552, %v1555
    %v1573 = vsel %vm1571, %v1561, 2102212464
    %v1574 = vsel %vm1570, %v1558, %v1573
    %v1575 = vsel %vm1569, %v1572, %v1574
    %v1576 = vsel %vm1568, %v1555, %v1558
    %v1577 = vsel %vm1571, %v1564, 920167782
    %v1578 = vsel %vm1570, %v1561, %v1577
    %v1579 = vsel %vm1569, %v1576, %v1578
    %v1580 = vsel %vm1568, %v1558, %v1561
    %v1581 = vsel %vm1571, %v1567, 1326507024
    %v1582 = vsel %vm1570, %v1564, %v1581
    %v1583 = vsel %vm1569, %v1580, %v1582
    %v1584 = vshll.u32 %v1544, 8
    %v1585 = vmul.u32.u64.compose %v1584, %v1583
    %v1586 = vextract.low.u32 %v1585
    %v1587 = vextract.high.u32 %v1585
    %v1588 = vmul.u32.u64.compose %v1584, %v1579
    %v1589 = vextract.low.u32 %v1588
    %v1590 = vextract.high.u32 %v1588
    %v1591 = vmul.u32 %v1584, %v1575
    %v1592 = vadd.s32 %v1587, %v1589
    %vm1593 = vc.u32 %v1587, %v1589
    %v1594 = vadd.s32 %v1590, 1
    %v1595 = vsel %vm1593, %v1594, %v1590
    %v1596 = vadd.s32 %v1591, %v1595
    %v1597 = vadd.s32 %v1596, 536870912
    %v1598 = vshrl.u32 %v1597, 30
    %v1599 = vshll.u32 %v1598, 30
    %v1600 = vsub.s32 %v1596, %v1599
    %vm1601 = vcmp.lt.s32.totalorder %v1600, 0
    %v1602 = vsub.s32 0, %v1600
    %v1603 = vsel %vm1601, %v1602, %v1600
    %v1604 = vclz %v1603
    %v1605 = vsub.s32 %v1604, 2
    %vm1606 = vcmp.gt.s32.totalorder 0, %v1605
    %v1607 = vsel %vm1606, 0, %v1605
    %v1608 = vsub.s32 32, %v1607
    %v1609 = vshll.u32 %v1600, %v1607
    %v1610 = vshrl.u32 %v1592, %v1608
    %v1611 = vor.u32 %v1609, %v1610
    %v1612 = vsub.s32 4294967266, %v1607
    %v1613 = vadd.s32 %v1612, 127
    %v1614 = vshll.u32 %v1613, 23
    %v1615 = vor.u32 4788187, %v1614
    %v1616 = vand.u32 2147483647, %v1615
    %v1618 = vcvt.s32.f32 %v1611
    %v1619 = vmul.f32 %v1618, %v1616
    %v1620 = vxor.u32 %v1619, 2147483648
    %v1621 = vsel %vm1538, %v1620, %v1619
    %v1622 = vsub.s32 4, %v1598
    %v1623 = vsel %vm1538, %v1622, %v1598
    %v1624 = vsel %vm1537, %v519, %v1621
    %v1625 = vsel %vm1537, 0, %v1623
    %v1626 = vcosq.f32.pop %v1624
    %v1627 = vsinq.f32.pop %v1624
    %vm1628 = vweird.f32 %v519
    %v1629 = vadd.s32 %v1625, 3
    %v1630 = vand.u32 %v1629, 3
    %vm1631 = vcmp.lt.s32.totalorder %v1630, 2
    %vm1632 = vcmp.eq.s32.totalorder %v1630, 0
    %v1633 = vxor.u32 %v1627, 2147483648
    %v1634 = vsel %vm1632, %v1626, %v1633
    %vm1635 = vcmp.eq.s32.totalorder %v1630, 2
    %v1636 = vxor.u32 %v1626, 2147483648
    %v1637 = vsel %vm1635, %v1636, %v1627
    %v1638 = vsel %vm1631, %v1634, %v1637
    %v1639 = vsel %vm1628, nan, %v1638
    %v1640 = vand.u32 2147483647, %v588
    %vm1641 = vcmp.le.f32.partialorder %v1640, 0.7853982
    %vm1642 = vcmp.lt.s32.totalorder %v588, 0
    %v1643 = vand.u32 %v588, 2139095040
    %v1644 = vshrl.u32 %v1643, 23
    %v1645 = vsub.s32 %v1644, 127
    %v1646 = vand.u32 2147483647, %v588
    %v1647 = vand.u32 %v1646, 8388607
    %v1648 = vor.u32 %v1647, 8388608
    %v1649 = vsub.s32 0, %v1648
    %v1650 = vadd.s32 %v1645, 1
    %vm1651 = vcmp.gt.s32.totalorder %v1650, 0
    %v1652 = vsel %vm1651, %v1650, 0
    %v1653 = vshrl.u32 %v1652, 5
    %v1654 = vand.u32 %v1652, 31
    %v1655 = vsub.s32 32, %v1654
    %v1656 = vshrl.u32 683565275, %v1655
    %v1657 = vshll.u32 683565275, %v1654
    %v1658 = vshrl.u32 2475754826, %v1655
    %v1659 = vor.u32 %v1657, %v1658
    %v1660 = vshll.u32 2475754826, %v1654
    %v1661 = vshrl.u32 2131351028, %v1655
    %v1662 = vor.u32 %v1660, %v1661
    %v1663 = vshll.u32 2131351028, %v1654
    %v1664 = vshrl.u32 2102212464, %v1655
    %v1665 = vor.u32 %v1663, %v1664
    %v1666 = vshll.u32 2102212464, %v1654
    %v1667 = vshrl.u32 920167782, %v1655
    %v1668 = vor.u32 %v1666, %v1667
    %v1669 = vshll.u32 920167782, %v1654
    %v1670 = vshrl.u32 1326507024, %v1655
    %v1671 = vor.u32 %v1669, %v1670
    %vm1672 = vcmp.lt.s32.totalorder %v1653, 1
    %vm1673 = vcmp.lt.s32.totalorder %v1653, 2
    %vm1674 = vcmp.lt.s32.totalorder %v1653, 3
    %vm1675 = vcmp.lt.s32.totalorder %v1653, 4
    %v1676 = vsel %vm1672, %v1656, %v1659
    %v1677 = vsel %vm1675, %v1665, 2102212464
    %v1678 = vsel %vm1674, %v1662, %v1677
    %v1679 = vsel %vm1673, %v1676, %v1678
    %v1680 = vsel %vm1672, %v1659, %v1662
    %v1681 = vsel %vm1675, %v1668, 920167782
    %v1682 = vsel %vm1674, %v1665, %v1681
    %v1683 = vsel %vm1673, %v1680, %v1682
    %v1684 = vsel %vm1672, %v1662, %v1665
    %v1685 = vsel %vm1675, %v1671, 1326507024
    %v1686 = vsel %vm1674, %v1668, %v1685
    %v1687 = vsel %vm1673, %v1684, %v1686
    %v1688 = vshll.u32 %v1648, 8
    %v1689 = vmul.u32.u64.compose %v1688, %v1687
    %v1690 = vextract.low.u32 %v1689
    %v1691 = vextract.high.u32 %v1689
    %v1692 = vmul.u32.u64.compose %v1688, %v1683
    %v1693 = vextract.low.u32 %v1692
    %v1694 = vextract.high.u32 %v1692
    %v1695 = vmul.u32 %v1688, %v1679
    %v1696 = vadd.s32 %v1691, %v1693
    %vm1697 = vc.u32 %v1691, %v1693
    %v1698 = vadd.s32 %v1694, 1
    %v1699 = vsel %vm1697, %v1698, %v1694
    %v1700 = vadd.s32 %v1695, %v1699
    %v1701 = vadd.s32 %v1700, 536870912
    %v1702 = vshrl.u32 %v1701, 30
    %v1703 = vshll.u32 %v1702, 30
    %v1704 = vsub.s32 %v1700, %v1703
    %vm1705 = vcmp.lt.s32.totalorder %v1704, 0
    %v1706 = vsub.s32 0, %v1704
    %v1707 = vsel %vm1705, %v1706, %v1704
    %v1708 = vclz %v1707
    %v1709 = vsub.s32 %v1708, 2
    %vm1710 = vcmp.gt.s32.totalorder 0, %v1709
    %v1711 = vsel %vm1710, 0, %v1709
    %v1712 = vsub.s32 32, %v1711
    %v1713 = vshll.u32 %v1704, %v1711
    %v1714 = vshrl.u32 %v1696, %v1712
    %v1715 = vor.u32 %v1713, %v1714
    %v1716 = vsub.s32 4294967266, %v1711
    %v1717 = vadd.s32 %v1716, 127
    %v1718 = vshll.u32 %v1717, 23
    %v1719 = vor.u32 4788187, %v1718
    %v1720 = vand.u32 2147483647, %v1719
    %v1722 = vcvt.s32.f32 %v1715
    %v1723 = vmul.f32 %v1722, %v1720
    %v1724 = vxor.u32 %v1723, 2147483648
    %v1725 = vsel %vm1642, %v1724, %v1723
    %v1726 = vsub.s32 4, %v1702
    %v1727 = vsel %vm1642, %v1726, %v1702
    %v1728 = vsel %vm1641, %v588, %v1725
    %v1729 = vsel %vm1641, 0, %v1727
    %v1730 = vcosq.f32.pop %v1728
    %v1731 = vsinq.f32.pop %v1728
    %vm1732 = vweird.f32 %v588
    %v1733 = vadd.s32 %v1729, 3
    %v1734 = vand.u32 %v1733, 3
    %vm1735 = vcmp.lt.s32.totalorder %v1734, 2
    %vm1736 = vcmp.eq.s32.totalorder %v1734, 0
    %v1737 = vxor.u32 %v1731, 2147483648
    %v1738 = vsel %vm1736, %v1730, %v1737
    %vm1739 = vcmp.eq.s32.totalorder %v1734, 2
    %v1740 = vxor.u32 %v1730, 2147483648
    %v1741 = vsel %vm1739, %v1740, %v1731
    %v1742 = vsel %vm1735, %v1738, %v1741
    %v1743 = vsel %vm1732, nan, %v1742
    %v1744 = vand.u32 2147483647, %v590
    %vm1745 = vcmp.le.f32.partialorder %v1744, 0.7853982
    %vm1746 = vcmp.lt.s32.totalorder %v590, 0
    %v1747 = vand.u32 %v590, 2139095040
    %v1748 = vshrl.u32 %v1747, 23
    %v1749 = vsub.s32 %v1748, 127
    %v1750 = vand.u32 2147483647, %v590
    %v1751 = vand.u32 %v1750, 8388607
    %v1752 = vor.u32 %v1751, 8388608
    %v1753 = vsub.s32 0, %v1752
    %v1754 = vadd.s32 %v1749, 1
    %vm1755 = vcmp.gt.s32.totalorder %v1754, 0
    %v1756 = vsel %vm1755, %v1754, 0
    %v1757 = vshrl.u32 %v1756, 5
    %v1758 = vand.u32 %v1756, 31
    %v1759 = vsub.s32 32, %v1758
    %v1760 = vshrl.u32 683565275, %v1759
    %v1761 = vshll.u32 683565275, %v1758
    %v1762 = vshrl.u32 2475754826, %v1759
    %v1763 = vor.u32 %v1761, %v1762
    %v1764 = vshll.u32 2475754826, %v1758
    %v1765 = vshrl.u32 2131351028, %v1759
    %v1766 = vor.u32 %v1764, %v1765
    %v1767 = vshll.u32 2131351028, %v1758
    %v1768 = vshrl.u32 2102212464, %v1759
    %v1769 = vor.u32 %v1767, %v1768
    %v1770 = vshll.u32 2102212464, %v1758
    %v1771 = vshrl.u32 920167782, %v1759
    %v1772 = vor.u32 %v1770, %v1771
    %v1773 = vshll.u32 920167782, %v1758
    %v1774 = vshrl.u32 1326507024, %v1759
    %v1775 = vor.u32 %v1773, %v1774
    %vm1776 = vcmp.lt.s32.totalorder %v1757, 1
    %vm1777 = vcmp.lt.s32.totalorder %v1757, 2
    %vm1778 = vcmp.lt.s32.totalorder %v1757, 3
    %vm1779 = vcmp.lt.s32.totalorder %v1757, 4
    %v1780 = vsel %vm1776, %v1760, %v1763
    %v1781 = vsel %vm1779, %v1769, 2102212464
    %v1782 = vsel %vm1778, %v1766, %v1781
    %v1783 = vsel %vm1777, %v1780, %v1782
    %v1784 = vsel %vm1776, %v1763, %v1766
    %v1785 = vsel %vm1779, %v1772, 920167782
    %v1786 = vsel %vm1778, %v1769, %v1785
    %v1787 = vsel %vm1777, %v1784, %v1786
    %v1788 = vsel %vm1776, %v1766, %v1769
    %v1789 = vsel %vm1779, %v1775, 1326507024
    %v1790 = vsel %vm1778, %v1772, %v1789
    %v1791 = vsel %vm1777, %v1788, %v1790
    %v1792 = vshll.u32 %v1752, 8
    %v1793 = vmul.u32.u64.compose %v1792, %v1791
    %v1794 = vextract.low.u32 %v1793
    %v1795 = vextract.high.u32 %v1793
    %v1796 = vmul.u32.u64.compose %v1792, %v1787
    %v1797 = vextract.low.u32 %v1796
    %v1798 = vextract.high.u32 %v1796
    %v1799 = vmul.u32 %v1792, %v1783
    %v1800 = vadd.s32 %v1795, %v1797
    %vm1801 = vc.u32 %v1795, %v1797
    %v1802 = vadd.s32 %v1798, 1
    %v1803 = vsel %vm1801, %v1802, %v1798
    %v1804 = vadd.s32 %v1799, %v1803
    %v1805 = vadd.s32 %v1804, 536870912
    %v1806 = vshrl.u32 %v1805, 30
    %v1807 = vshll.u32 %v1806, 30
    %v1808 = vsub.s32 %v1804, %v1807
    %vm1809 = vcmp.lt.s32.totalorder %v1808, 0
    %v1810 = vsub.s32 0, %v1808
    %v1811 = vsel %vm1809, %v1810, %v1808
    %v1812 = vclz %v1811
    %v1813 = vsub.s32 %v1812, 2
    %vm1814 = vcmp.gt.s32.totalorder 0, %v1813
    %v1815 = vsel %vm1814, 0, %v1813
    %v1816 = vsub.s32 32, %v1815
    %v1817 = vshll.u32 %v1808, %v1815
    %v1818 = vshrl.u32 %v1800, %v1816
    %v1819 = vor.u32 %v1817, %v1818
    %v1820 = vsub.s32 4294967266, %v1815
    %v1821 = vadd.s32 %v1820, 127
    %v1822 = vshll.u32 %v1821, 23
    %v1823 = vor.u32 4788187, %v1822
    %v1824 = vand.u32 2147483647, %v1823
    %v1826 = vcvt.s32.f32 %v1819
    %v1827 = vmul.f32 %v1826, %v1824
    %v1828 = vxor.u32 %v1827, 2147483648
    %v1829 = vsel %vm1746, %v1828, %v1827
    %v1830 = vsub.s32 4, %v1806
    %v1831 = vsel %vm1746, %v1830, %v1806
    %v1832 = vsel %vm1745, %v590, %v1829
    %v1833 = vsel %vm1745, 0, %v1831
    %v1834 = vcosq.f32.pop %v1832
    %v1835 = vsinq.f32.pop %v1832
    %vm1836 = vweird.f32 %v590
    %v1837 = vadd.s32 %v1833, 3
    %v1838 = vand.u32 %v1837, 3
    %vm1839 = vcmp.lt.s32.totalorder %v1838, 2
    %vm1840 = vcmp.eq.s32.totalorder %v1838, 0
    %v1841 = vxor.u32 %v1835, 2147483648
    %v1842 = vsel %vm1840, %v1834, %v1841
    %vm1843 = vcmp.eq.s32.totalorder %v1838, 2
    %v1844 = vxor.u32 %v1834, 2147483648
    %v1845 = vsel %vm1843, %v1844, %v1835
    %v1846 = vsel %vm1839, %v1842, %v1845
    %v1847 = vsel %vm1836, nan, %v1846
    %v1848 = vand.u32 2147483647, %v659
    %vm1849 = vcmp.le.f32.partialorder %v1848, 0.7853982
    %vm1850 = vcmp.lt.s32.totalorder %v659, 0
    %v1851 = vand.u32 %v659, 2139095040
    %v1852 = vshrl.u32 %v1851, 23
    %v1853 = vsub.s32 %v1852, 127
    %v1854 = vand.u32 2147483647, %v659
    %v1855 = vand.u32 %v1854, 8388607
    %v1856 = vor.u32 %v1855, 8388608
    %v1857 = vsub.s32 0, %v1856
    %v1858 = vadd.s32 %v1853, 1
    %vm1859 = vcmp.gt.s32.totalorder %v1858, 0
    %v1860 = vsel %vm1859, %v1858, 0
    %v1861 = vshrl.u32 %v1860, 5
    %v1862 = vand.u32 %v1860, 31
    %v1863 = vsub.s32 32, %v1862
    %v1864 = vshrl.u32 683565275, %v1863
    %v1865 = vshll.u32 683565275, %v1862
    %v1866 = vshrl.u32 2475754826, %v1863
    %v1867 = vor.u32 %v1865, %v1866
    %v1868 = vshll.u32 2475754826, %v1862
    %v1869 = vshrl.u32 2131351028, %v1863
    %v1870 = vor.u32 %v1868, %v1869
    %v1871 = vshll.u32 2131351028, %v1862
    %v1872 = vshrl.u32 2102212464, %v1863
    %v1873 = vor.u32 %v1871, %v1872
    %v1874 = vshll.u32 2102212464, %v1862
    %v1875 = vshrl.u32 920167782, %v1863
    %v1876 = vor.u32 %v1874, %v1875
    %v1877 = vshll.u32 920167782, %v1862
    %v1878 = vshrl.u32 1326507024, %v1863
    %v1879 = vor.u32 %v1877, %v1878
    %vm1880 = vcmp.lt.s32.totalorder %v1861, 1
    %vm1881 = vcmp.lt.s32.totalorder %v1861, 2
    %vm1882 = vcmp.lt.s32.totalorder %v1861, 3
    %vm1883 = vcmp.lt.s32.totalorder %v1861, 4
    %v1884 = vsel %vm1880, %v1864, %v1867
    %v1885 = vsel %vm1883, %v1873, 2102212464
    %v1886 = vsel %vm1882, %v1870, %v1885
    %v1887 = vsel %vm1881, %v1884, %v1886
    %v1888 = vsel %vm1880, %v1867, %v1870
    %v1889 = vsel %vm1883, %v1876, 920167782
    %v1890 = vsel %vm1882, %v1873, %v1889
    %v1891 = vsel %vm1881, %v1888, %v1890
    %v1892 = vsel %vm1880, %v1870, %v1873
    %v1893 = vsel %vm1883, %v1879, 1326507024
    %v1894 = vsel %vm1882, %v1876, %v1893
    %v1895 = vsel %vm1881, %v1892, %v1894
    %v1896 = vshll.u32 %v1856, 8
    %v1897 = vmul.u32.u64.compose %v1896, %v1895
    %v1898 = vextract.low.u32 %v1897
    %v1899 = vextract.high.u32 %v1897
    %v1900 = vmul.u32.u64.compose %v1896, %v1891
    %v1901 = vextract.low.u32 %v1900
    %v1902 = vextract.high.u32 %v1900
    %v1903 = vmul.u32 %v1896, %v1887
    %v1904 = vadd.s32 %v1899, %v1901
    %vm1905 = vc.u32 %v1899, %v1901
    %v1906 = vadd.s32 %v1902, 1
    %v1907 = vsel %vm1905, %v1906, %v1902
    %v1908 = vadd.s32 %v1903, %v1907
    %v1909 = vadd.s32 %v1908, 536870912
    %v1910 = vshrl.u32 %v1909, 30
    %v1911 = vshll.u32 %v1910, 30
    %v1912 = vsub.s32 %v1908, %v1911
    %vm1913 = vcmp.lt.s32.totalorder %v1912, 0
    %v1914 = vsub.s32 0, %v1912
    %v1915 = vsel %vm1913, %v1914, %v1912
    %v1916 = vclz %v1915
    %v1917 = vsub.s32 %v1916, 2
    %vm1918 = vcmp.gt.s32.totalorder 0, %v1917
    %v1919 = vsel %vm1918, 0, %v1917
    %v1920 = vsub.s32 32, %v1919
    %v1921 = vshll.u32 %v1912, %v1919
    %v1922 = vshrl.u32 %v1904, %v1920
    %v1923 = vor.u32 %v1921, %v1922
    %v1924 = vsub.s32 4294967266, %v1919
    %v1925 = vadd.s32 %v1924, 127
    %v1926 = vshll.u32 %v1925, 23
    %v1927 = vor.u32 4788187, %v1926
    %v1928 = vand.u32 2147483647, %v1927
    %v1930 = vcvt.s32.f32 %v1923
    %v1931 = vmul.f32 %v1930, %v1928
    %v1932 = vxor.u32 %v1931, 2147483648
    %v1933 = vsel %vm1850, %v1932, %v1931
    %v1934 = vsub.s32 4, %v1910
    %v1935 = vsel %vm1850, %v1934, %v1910
    %v1936 = vsel %vm1849, %v659, %v1933
    %v1937 = vsel %vm1849, 0, %v1935
    %v1938 = vcosq.f32.pop %v1936
    %v1939 = vsinq.f32.pop %v1936
    %vm1940 = vweird.f32 %v659
    %v1941 = vadd.s32 %v1937, 3
    %v1942 = vand.u32 %v1941, 3
    %vm1943 = vcmp.lt.s32.totalorder %v1942, 2
    %vm1944 = vcmp.eq.s32.totalorder %v1942, 0
    %v1945 = vxor.u32 %v1939, 2147483648
    %v1946 = vsel %vm1944, %v1938, %v1945
    %vm1947 = vcmp.eq.s32.totalorder %v1942, 2
    %v1948 = vxor.u32 %v1938, 2147483648
    %v1949 = vsel %vm1947, %v1948, %v1939
    %v1950 = vsel %vm1943, %v1946, %v1949
    %v1951 = vsel %vm1940, nan, %v1950
    %v1952 = vand.u32 2147483647, %v661
    %vm1953 = vcmp.le.f32.partialorder %v1952, 0.7853982
    %vm1954 = vcmp.lt.s32.totalorder %v661, 0
    %v1955 = vand.u32 %v661, 2139095040
    %v1956 = vshrl.u32 %v1955, 23
    %v1957 = vsub.s32 %v1956, 127
    %v1958 = vand.u32 2147483647, %v661
    %v1959 = vand.u32 %v1958, 8388607
    %v1960 = vor.u32 %v1959, 8388608
    %v1961 = vsub.s32 0, %v1960
    %v1962 = vadd.s32 %v1957, 1
    %vm1963 = vcmp.gt.s32.totalorder %v1962, 0
    %v1964 = vsel %vm1963, %v1962, 0
    %v1965 = vshrl.u32 %v1964, 5
    %v1966 = vand.u32 %v1964, 31
    %v1967 = vsub.s32 32, %v1966
    %v1968 = vshrl.u32 683565275, %v1967
    %v1969 = vshll.u32 683565275, %v1966
    %v1970 = vshrl.u32 2475754826, %v1967
    %v1971 = vor.u32 %v1969, %v1970
    %v1972 = vshll.u32 2475754826, %v1966
    %v1973 = vshrl.u32 2131351028, %v1967
    %v1974 = vor.u32 %v1972, %v1973
    %v1975 = vshll.u32 2131351028, %v1966
    %v1976 = vshrl.u32 2102212464, %v1967
    %v1977 = vor.u32 %v1975, %v1976
    %v1978 = vshll.u32 2102212464, %v1966
    %v1979 = vshrl.u32 920167782, %v1967
    %v1980 = vor.u32 %v1978, %v1979
    %v1981 = vshll.u32 920167782, %v1966
    %v1982 = vshrl.u32 1326507024, %v1967
    %v1983 = vor.u32 %v1981, %v1982
    %vm1984 = vcmp.lt.s32.totalorder %v1965, 1
    %vm1985 = vcmp.lt.s32.totalorder %v1965, 2
    %vm1986 = vcmp.lt.s32.totalorder %v1965, 3
    %vm1987 = vcmp.lt.s32.totalorder %v1965, 4
    %v1988 = vsel %vm1984, %v1968, %v1971
    %v1989 = vsel %vm1987, %v1977, 2102212464
    %v1990 = vsel %vm1986, %v1974, %v1989
    %v1991 = vsel %vm1985, %v1988, %v1990
    %v1992 = vsel %vm1984, %v1971, %v1974
    %v1993 = vsel %vm1987, %v1980, 920167782
    %v1994 = vsel %vm1986, %v1977, %v1993
    %v1995 = vsel %vm1985, %v1992, %v1994
    %v1996 = vsel %vm1984, %v1974, %v1977
    %v1997 = vsel %vm1987, %v1983, 1326507024
    %v1998 = vsel %vm1986, %v1980, %v1997
    %v1999 = vsel %vm1985, %v1996, %v1998
    %v2000 = vshll.u32 %v1960, 8
    %v2001 = vmul.u32.u64.compose %v2000, %v1999
    %v2002 = vextract.low.u32 %v2001
    %v2003 = vextract.high.u32 %v2001
    %v2004 = vmul.u32.u64.compose %v2000, %v1995
    %v2005 = vextract.low.u32 %v2004
    %v2006 = vextract.high.u32 %v2004
    %v2007 = vmul.u32 %v2000, %v1991
    %v2008 = vadd.s32 %v2003, %v2005
    %vm2009 = vc.u32 %v2003, %v2005
    %v2010 = vadd.s32 %v2006, 1
    %v2011 = vsel %vm2009, %v2010, %v2006
    %v2012 = vadd.s32 %v2007, %v2011
    %v2013 = vadd.s32 %v2012, 536870912
    %v2014 = vshrl.u32 %v2013, 30
    %v2015 = vshll.u32 %v2014, 30
    %v2016 = vsub.s32 %v2012, %v2015
    %vm2017 = vcmp.lt.s32.totalorder %v2016, 0
    %v2018 = vsub.s32 0, %v2016
    %v2019 = vsel %vm2017, %v2018, %v2016
    %v2020 = vclz %v2019
    %v2021 = vsub.s32 %v2020, 2
    %vm2022 = vcmp.gt.s32.totalorder 0, %v2021
    %v2023 = vsel %vm2022, 0, %v2021
    %v2024 = vsub.s32 32, %v2023
    %v2025 = vshll.u32 %v2016, %v2023
    %v2026 = vshrl.u32 %v2008, %v2024
    %v2027 = vor.u32 %v2025, %v2026
    %v2028 = vsub.s32 4294967266, %v2023
    %v2029 = vadd.s32 %v2028, 127
    %v2030 = vshll.u32 %v2029, 23
    %v2031 = vor.u32 4788187, %v2030
    %v2032 = vand.u32 2147483647, %v2031
    %v2034 = vcvt.s32.f32 %v2027
    %v2035 = vmul.f32 %v2034, %v2032
    %v2036 = vxor.u32 %v2035, 2147483648
    %v2037 = vsel %vm1954, %v2036, %v2035
    %v2038 = vsub.s32 4, %v2014
    %v2039 = vsel %vm1954, %v2038, %v2014
    %v2040 = vsel %vm1953, %v661, %v2037
    %v2041 = vsel %vm1953, 0, %v2039
    %v2042 = vcosq.f32.pop %v2040
    %v2043 = vsinq.f32.pop %v2040
    %vm2044 = vweird.f32 %v661
    %v2045 = vadd.s32 %v2041, 3
    %v2046 = vand.u32 %v2045, 3
    %vm2047 = vcmp.lt.s32.totalorder %v2046, 2
    %vm2048 = vcmp.eq.s32.totalorder %v2046, 0
    %v2049 = vxor.u32 %v2043, 2147483648
    %v2050 = vsel %vm2048, %v2042, %v2049
    %vm2051 = vcmp.eq.s32.totalorder %v2046, 2
    %v2052 = vxor.u32 %v2042, 2147483648
    %v2053 = vsel %vm2051, %v2052, %v2043
    %v2054 = vsel %vm2047, %v2050, %v2053
    %v2055 = vsel %vm2044, nan, %v2054
    %v2056 = vand.u32 2147483647, %v730
    %vm2057 = vcmp.le.f32.partialorder %v2056, 0.7853982
    %vm2058 = vcmp.lt.s32.totalorder %v730, 0
    %v2059 = vand.u32 %v730, 2139095040
    %v2060 = vshrl.u32 %v2059, 23
    %v2061 = vsub.s32 %v2060, 127
    %v2062 = vand.u32 2147483647, %v730
    %v2063 = vand.u32 %v2062, 8388607
    %v2064 = vor.u32 %v2063, 8388608
    %v2065 = vsub.s32 0, %v2064
    %v2066 = vadd.s32 %v2061, 1
    %vm2067 = vcmp.gt.s32.totalorder %v2066, 0
    %v2068 = vsel %vm2067, %v2066, 0
    %v2069 = vshrl.u32 %v2068, 5
    %v2070 = vand.u32 %v2068, 31
    %v2071 = vsub.s32 32, %v2070
    %v2072 = vshrl.u32 683565275, %v2071
    %v2073 = vshll.u32 683565275, %v2070
    %v2074 = vshrl.u32 2475754826, %v2071
    %v2075 = vor.u32 %v2073, %v2074
    %v2076 = vshll.u32 2475754826, %v2070
    %v2077 = vshrl.u32 2131351028, %v2071
    %v2078 = vor.u32 %v2076, %v2077
    %v2079 = vshll.u32 2131351028, %v2070
    %v2080 = vshrl.u32 2102212464, %v2071
    %v2081 = vor.u32 %v2079, %v2080
    %v2082 = vshll.u32 2102212464, %v2070
    %v2083 = vshrl.u32 920167782, %v2071
    %v2084 = vor.u32 %v2082, %v2083
    %v2085 = vshll.u32 920167782, %v2070
    %v2086 = vshrl.u32 1326507024, %v2071
    %v2087 = vor.u32 %v2085, %v2086
    %vm2088 = vcmp.lt.s32.totalorder %v2069, 1
    %vm2089 = vcmp.lt.s32.totalorder %v2069, 2
    %vm2090 = vcmp.lt.s32.totalorder %v2069, 3
    %vm2091 = vcmp.lt.s32.totalorder %v2069, 4
    %v2092 = vsel %vm2088, %v2072, %v2075
    %v2093 = vsel %vm2091, %v2081, 2102212464
    %v2094 = vsel %vm2090, %v2078, %v2093
    %v2095 = vsel %vm2089, %v2092, %v2094
    %v2096 = vsel %vm2088, %v2075, %v2078
    %v2097 = vsel %vm2091, %v2084, 920167782
    %v2098 = vsel %vm2090, %v2081, %v2097
    %v2099 = vsel %vm2089, %v2096, %v2098
    %v2100 = vsel %vm2088, %v2078, %v2081
    %v2101 = vsel %vm2091, %v2087, 1326507024
    %v2102 = vsel %vm2090, %v2084, %v2101
    %v2103 = vsel %vm2089, %v2100, %v2102
    %v2104 = vshll.u32 %v2064, 8
    %v2105 = vmul.u32.u64.compose %v2104, %v2103
    %v2106 = vextract.low.u32 %v2105
    %v2107 = vextract.high.u32 %v2105
    %v2108 = vmul.u32.u64.compose %v2104, %v2099
    %v2109 = vextract.low.u32 %v2108
    %v2110 = vextract.high.u32 %v2108
    %v2111 = vmul.u32 %v2104, %v2095
    %v2112 = vadd.s32 %v2107, %v2109
    %vm2113 = vc.u32 %v2107, %v2109
    %v2114 = vadd.s32 %v2110, 1
    %v2115 = vsel %vm2113, %v2114, %v2110
    %v2116 = vadd.s32 %v2111, %v2115
    %v2117 = vadd.s32 %v2116, 536870912
    %v2118 = vshrl.u32 %v2117, 30
    %v2119 = vshll.u32 %v2118, 30
    %v2120 = vsub.s32 %v2116, %v2119
    %vm2121 = vcmp.lt.s32.totalorder %v2120, 0
    %v2122 = vsub.s32 0, %v2120
    %v2123 = vsel %vm2121, %v2122, %v2120
    %v2124 = vclz %v2123
    %v2125 = vsub.s32 %v2124, 2
    %vm2126 = vcmp.gt.s32.totalorder 0, %v2125
    %v2127 = vsel %vm2126, 0, %v2125
    %v2128 = vsub.s32 32, %v2127
    %v2129 = vshll.u32 %v2120, %v2127
    %v2130 = vshrl.u32 %v2112, %v2128
    %v2131 = vor.u32 %v2129, %v2130
    %v2132 = vsub.s32 4294967266, %v2127
    %v2133 = vadd.s32 %v2132, 127
    %v2134 = vshll.u32 %v2133, 23
    %v2135 = vor.u32 4788187, %v2134
    %v2136 = vand.u32 2147483647, %v2135
    %v2138 = vcvt.s32.f32 %v2131
    %v2139 = vmul.f32 %v2138, %v2136
    %v2140 = vxor.u32 %v2139, 2147483648
    %v2141 = vsel %vm2058, %v2140, %v2139
    %v2142 = vsub.s32 4, %v2118
    %v2143 = vsel %vm2058, %v2142, %v2118
    %v2144 = vsel %vm2057, %v730, %v2141
    %v2145 = vsel %vm2057, 0, %v2143
    %v2146 = vcosq.f32.pop %v2144
    %v2147 = vsinq.f32.pop %v2144
    %vm2148 = vweird.f32 %v730
    %v2149 = vadd.s32 %v2145, 3
    %v2150 = vand.u32 %v2149, 3
    %vm2151 = vcmp.lt.s32.totalorder %v2150, 2
    %vm2152 = vcmp.eq.s32.totalorder %v2150, 0
    %v2153 = vxor.u32 %v2147, 2147483648
    %v2154 = vsel %vm2152, %v2146, %v2153
    %vm2155 = vcmp.eq.s32.totalorder %v2150, 2
    %v2156 = vxor.u32 %v2146, 2147483648
    %v2157 = vsel %vm2155, %v2156, %v2147
    %v2158 = vsel %vm2151, %v2154, %v2157
    %v2159 = vsel %vm2148, nan, %v2158
    %v2160 = vand.u32 2147483647, %v732
    %vm2161 = vcmp.le.f32.partialorder %v2160, 0.7853982
    %vm2162 = vcmp.lt.s32.totalorder %v732, 0
    %v2163 = vand.u32 %v732, 2139095040
    %v2164 = vshrl.u32 %v2163, 23
    %v2165 = vsub.s32 %v2164, 127
    %v2166 = vand.u32 2147483647, %v732
    %v2167 = vand.u32 %v2166, 8388607
    %v2168 = vor.u32 %v2167, 8388608
    %v2169 = vsub.s32 0, %v2168
    %v2170 = vadd.s32 %v2165, 1
    %vm2171 = vcmp.gt.s32.totalorder %v2170, 0
    %v2172 = vsel %vm2171, %v2170, 0
    %v2173 = vshrl.u32 %v2172, 5
    %v2174 = vand.u32 %v2172, 31
    %v2175 = vsub.s32 32, %v2174
    %v2176 = vshrl.u32 683565275, %v2175
    %v2177 = vshll.u32 683565275, %v2174
    %v2178 = vshrl.u32 2475754826, %v2175
    %v2179 = vor.u32 %v2177, %v2178
    %v2180 = vshll.u32 2475754826, %v2174
    %v2181 = vshrl.u32 2131351028, %v2175
    %v2182 = vor.u32 %v2180, %v2181
    %v2183 = vshll.u32 2131351028, %v2174
    %v2184 = vshrl.u32 2102212464, %v2175
    %v2185 = vor.u32 %v2183, %v2184
    %v2186 = vshll.u32 2102212464, %v2174
    %v2187 = vshrl.u32 920167782, %v2175
    %v2188 = vor.u32 %v2186, %v2187
    %v2189 = vshll.u32 920167782, %v2174
    %v2190 = vshrl.u32 1326507024, %v2175
    %v2191 = vor.u32 %v2189, %v2190
    %vm2192 = vcmp.lt.s32.totalorder %v2173, 1
    %vm2193 = vcmp.lt.s32.totalorder %v2173, 2
    %vm2194 = vcmp.lt.s32.totalorder %v2173, 3
    %vm2195 = vcmp.lt.s32.totalorder %v2173, 4
    %v2196 = vsel %vm2192, %v2176, %v2179
    %v2197 = vsel %vm2195, %v2185, 2102212464
    %v2198 = vsel %vm2194, %v2182, %v2197
    %v2199 = vsel %vm2193, %v2196, %v2198
    %v2200 = vsel %vm2192, %v2179, %v2182
    %v2201 = vsel %vm2195, %v2188, 920167782
    %v2202 = vsel %vm2194, %v2185, %v2201
    %v2203 = vsel %vm2193, %v2200, %v2202
    %v2204 = vsel %vm2192, %v2182, %v2185
    %v2205 = vsel %vm2195, %v2191, 1326507024
    %v2206 = vsel %vm2194, %v2188, %v2205
    %v2207 = vsel %vm2193, %v2204, %v2206
    %v2208 = vshll.u32 %v2168, 8
    %v2209 = vmul.u32.u64.compose %v2208, %v2207
    %v2210 = vextract.low.u32 %v2209
    %v2211 = vextract.high.u32 %v2209
    %v2212 = vmul.u32.u64.compose %v2208, %v2203
    %v2213 = vextract.low.u32 %v2212
    %v2214 = vextract.high.u32 %v2212
    %v2215 = vmul.u32 %v2208, %v2199
    %v2216 = vadd.s32 %v2211, %v2213
    %vm2217 = vc.u32 %v2211, %v2213
    %v2218 = vadd.s32 %v2214, 1
    %v2219 = vsel %vm2217, %v2218, %v2214
    %v2220 = vadd.s32 %v2215, %v2219
    %v2221 = vadd.s32 %v2220, 536870912
    %v2222 = vshrl.u32 %v2221, 30
    %v2223 = vshll.u32 %v2222, 30
    %v2224 = vsub.s32 %v2220, %v2223
    %vm2225 = vcmp.lt.s32.totalorder %v2224, 0
    %v2226 = vsub.s32 0, %v2224
    %v2227 = vsel %vm2225, %v2226, %v2224
    %v2228 = vclz %v2227
    %v2229 = vsub.s32 %v2228, 2
    %vm2230 = vcmp.gt.s32.totalorder 0, %v2229
    %v2231 = vsel %vm2230, 0, %v2229
    %v2232 = vsub.s32 32, %v2231
    %v2233 = vshll.u32 %v2224, %v2231
    %v2234 = vshrl.u32 %v2216, %v2232
    %v2235 = vor.u32 %v2233, %v2234
    %v2236 = vsub.s32 4294967266, %v2231
    %v2237 = vadd.s32 %v2236, 127
    %v2238 = vshll.u32 %v2237, 23
    %v2239 = vor.u32 4788187, %v2238
    %v2240 = vand.u32 2147483647, %v2239
    %v2242 = vcvt.s32.f32 %v2235
    %v2243 = vmul.f32 %v2242, %v2240
    %v2244 = vxor.u32 %v2243, 2147483648
    %v2245 = vsel %vm2162, %v2244, %v2243
    %v2246 = vsub.s32 4, %v2222
    %v2247 = vsel %vm2162, %v2246, %v2222
    %v2248 = vsel %vm2161, %v732, %v2245
    %v2249 = vsel %vm2161, 0, %v2247
    %v2250 = vcosq.f32.pop %v2248
    %v2251 = vsinq.f32.pop %v2248
    %vm2252 = vweird.f32 %v732
    %v2253 = vadd.s32 %v2249, 3
    %v2254 = vand.u32 %v2253, 3
    %vm2255 = vcmp.lt.s32.totalorder %v2254, 2
    %vm2256 = vcmp.eq.s32.totalorder %v2254, 0
    %v2257 = vxor.u32 %v2251, 2147483648
    %v2258 = vsel %vm2256, %v2250, %v2257
    %vm2259 = vcmp.eq.s32.totalorder %v2254, 2
    %v2260 = vxor.u32 %v2250, 2147483648
    %v2261 = vsel %vm2259, %v2260, %v2251
    %v2262 = vsel %vm2255, %v2258, %v2261
    %v2263 = vsel %vm2252, nan, %v2262
    %v2264 = vand.u32 2147483647, %v801
    %vm2265 = vcmp.le.f32.partialorder %v2264, 0.7853982
    %vm2266 = vcmp.lt.s32.totalorder %v801, 0
    %v2267 = vand.u32 %v801, 2139095040
    %v2268 = vshrl.u32 %v2267, 23
    %v2269 = vsub.s32 %v2268, 127
    %v2270 = vand.u32 2147483647, %v801
    %v2271 = vand.u32 %v2270, 8388607
    %v2272 = vor.u32 %v2271, 8388608
    %v2273 = vsub.s32 0, %v2272
    %v2274 = vadd.s32 %v2269, 1
    %vm2275 = vcmp.gt.s32.totalorder %v2274, 0
    %v2276 = vsel %vm2275, %v2274, 0
    %v2277 = vshrl.u32 %v2276, 5
    %v2278 = vand.u32 %v2276, 31
    %v2279 = vsub.s32 32, %v2278
    %v2280 = vshrl.u32 683565275, %v2279
    %v2281 = vshll.u32 683565275, %v2278
    %v2282 = vshrl.u32 2475754826, %v2279
    %v2283 = vor.u32 %v2281, %v2282
    %v2284 = vshll.u32 2475754826, %v2278
    %v2285 = vshrl.u32 2131351028, %v2279
    %v2286 = vor.u32 %v2284, %v2285
    %v2287 = vshll.u32 2131351028, %v2278
    %v2288 = vshrl.u32 2102212464, %v2279
    %v2289 = vor.u32 %v2287, %v2288
    %v2290 = vshll.u32 2102212464, %v2278
    %v2291 = vshrl.u32 920167782, %v2279
    %v2292 = vor.u32 %v2290, %v2291
    %v2293 = vshll.u32 920167782, %v2278
    %v2294 = vshrl.u32 1326507024, %v2279
    %v2295 = vor.u32 %v2293, %v2294
    %vm2296 = vcmp.lt.s32.totalorder %v2277, 1
    %vm2297 = vcmp.lt.s32.totalorder %v2277, 2
    %vm2298 = vcmp.lt.s32.totalorder %v2277, 3
    %vm2299 = vcmp.lt.s32.totalorder %v2277, 4
    %v2300 = vsel %vm2296, %v2280, %v2283
    %v2301 = vsel %vm2299, %v2289, 2102212464
    %v2302 = vsel %vm2298, %v2286, %v2301
    %v2303 = vsel %vm2297, %v2300, %v2302
    %v2304 = vsel %vm2296, %v2283, %v2286
    %v2305 = vsel %vm2299, %v2292, 920167782
    %v2306 = vsel %vm2298, %v2289, %v2305
    %v2307 = vsel %vm2297, %v2304, %v2306
    %v2308 = vsel %vm2296, %v2286, %v2289
    %v2309 = vsel %vm2299, %v2295, 1326507024
    %v2310 = vsel %vm2298, %v2292, %v2309
    %v2311 = vsel %vm2297, %v2308, %v2310
    %v2312 = vshll.u32 %v2272, 8
    %v2313 = vmul.u32.u64.compose %v2312, %v2311
    %v2314 = vextract.low.u32 %v2313
    %v2315 = vextract.high.u32 %v2313
    %v2316 = vmul.u32.u64.compose %v2312, %v2307
    %v2317 = vextract.low.u32 %v2316
    %v2318 = vextract.high.u32 %v2316
    %v2319 = vmul.u32 %v2312, %v2303
    %v2320 = vadd.s32 %v2315, %v2317
    %vm2321 = vc.u32 %v2315, %v2317
    %v2322 = vadd.s32 %v2318, 1
    %v2323 = vsel %vm2321, %v2322, %v2318
    %v2324 = vadd.s32 %v2319, %v2323
    %v2325 = vadd.s32 %v2324, 536870912
    %v2326 = vshrl.u32 %v2325, 30
    %v2327 = vshll.u32 %v2326, 30
    %v2328 = vsub.s32 %v2324, %v2327
    %vm2329 = vcmp.lt.s32.totalorder %v2328, 0
    %v2330 = vsub.s32 0, %v2328
    %v2331 = vsel %vm2329, %v2330, %v2328
    %v2332 = vclz %v2331
    %v2333 = vsub.s32 %v2332, 2
    %vm2334 = vcmp.gt.s32.totalorder 0, %v2333
    %v2335 = vsel %vm2334, 0, %v2333
    %v2336 = vsub.s32 32, %v2335
    %v2337 = vshll.u32 %v2328, %v2335
    %v2338 = vshrl.u32 %v2320, %v2336
    %v2339 = vor.u32 %v2337, %v2338
    %v2340 = vsub.s32 4294967266, %v2335
    %v2341 = vadd.s32 %v2340, 127
    %v2342 = vshll.u32 %v2341, 23
    %v2343 = vor.u32 4788187, %v2342
    %v2344 = vand.u32 2147483647, %v2343
    %v2346 = vcvt.s32.f32 %v2339
    %v2347 = vmul.f32 %v2346, %v2344
    %v2348 = vxor.u32 %v2347, 2147483648
    %v2349 = vsel %vm2266, %v2348, %v2347
    %v2350 = vsub.s32 4, %v2326
    %v2351 = vsel %vm2266, %v2350, %v2326
    %v2352 = vsel %vm2265, %v801, %v2349
    %v2353 = vsel %vm2265, 0, %v2351
    %v2354 = vcosq.f32.pop %v2352
    %v2355 = vsinq.f32.pop %v2352
    %vm2356 = vweird.f32 %v801
    %v2357 = vadd.s32 %v2353, 3
    %v2358 = vand.u32 %v2357, 3
    %vm2359 = vcmp.lt.s32.totalorder %v2358, 2
    %vm2360 = vcmp.eq.s32.totalorder %v2358, 0
    %v2361 = vxor.u32 %v2355, 2147483648
    %v2362 = vsel %vm2360, %v2354, %v2361
    %vm2363 = vcmp.eq.s32.totalorder %v2358, 2
    %v2364 = vxor.u32 %v2354, 2147483648
    %v2365 = vsel %vm2363, %v2364, %v2355
    %v2366 = vsel %vm2359, %v2362, %v2365
    %v2367 = vsel %vm2356, nan, %v2366
    %v2368 = vand.u32 2147483647, %v304
    %vm2369 = vcmp.le.f32.partialorder %v2368, 0.7853982
    %vm2370 = vcmp.lt.s32.totalorder %v304, 0
    %v2371 = vand.u32 %v304, 2139095040
    %v2372 = vshrl.u32 %v2371, 23
    %v2373 = vsub.s32 %v2372, 127
    %v2374 = vand.u32 2147483647, %v304
    %v2375 = vand.u32 %v2374, 8388607
    %v2376 = vor.u32 %v2375, 8388608
    %v2377 = vsub.s32 0, %v2376
    %v2378 = vadd.s32 %v2373, 1
    %vm2379 = vcmp.gt.s32.totalorder %v2378, 0
    %v2380 = vsel %vm2379, %v2378, 0
    %v2381 = vshrl.u32 %v2380, 5
    %v2382 = vand.u32 %v2380, 31
    %v2383 = vsub.s32 32, %v2382
    %v2384 = vshrl.u32 683565275, %v2383
    %v2385 = vshll.u32 683565275, %v2382
    %v2386 = vshrl.u32 2475754826, %v2383
    %v2387 = vor.u32 %v2385, %v2386
    %v2388 = vshll.u32 2475754826, %v2382
    %v2389 = vshrl.u32 2131351028, %v2383
    %v2390 = vor.u32 %v2388, %v2389
    %v2391 = vshll.u32 2131351028, %v2382
    %v2392 = vshrl.u32 2102212464, %v2383
    %v2393 = vor.u32 %v2391, %v2392
    %v2394 = vshll.u32 2102212464, %v2382
    %v2395 = vshrl.u32 920167782, %v2383
    %v2396 = vor.u32 %v2394, %v2395
    %v2397 = vshll.u32 920167782, %v2382
    %v2398 = vshrl.u32 1326507024, %v2383
    %v2399 = vor.u32 %v2397, %v2398
    %vm2400 = vcmp.lt.s32.totalorder %v2381, 1
    %vm2401 = vcmp.lt.s32.totalorder %v2381, 2
    %vm2402 = vcmp.lt.s32.totalorder %v2381, 3
    %vm2403 = vcmp.lt.s32.totalorder %v2381, 4
    %v2404 = vsel %vm2400, %v2384, %v2387
    %v2405 = vsel %vm2403, %v2393, 2102212464
    %v2406 = vsel %vm2402, %v2390, %v2405
    %v2407 = vsel %vm2401, %v2404, %v2406
    %v2408 = vsel %vm2400, %v2387, %v2390
    %v2409 = vsel %vm2403, %v2396, 920167782
    %v2410 = vsel %vm2402, %v2393, %v2409
    %v2411 = vsel %vm2401, %v2408, %v2410
    %v2412 = vsel %vm2400, %v2390, %v2393
    %v2413 = vsel %vm2403, %v2399, 1326507024
    %v2414 = vsel %vm2402, %v2396, %v2413
    %v2415 = vsel %vm2401, %v2412, %v2414
    %v2416 = vshll.u32 %v2376, 8
    %v2417 = vmul.u32.u64.compose %v2416, %v2415
    %v2418 = vextract.low.u32 %v2417
    %v2419 = vextract.high.u32 %v2417
    %v2420 = vmul.u32.u64.compose %v2416, %v2411
    %v2421 = vextract.low.u32 %v2420
    %v2422 = vextract.high.u32 %v2420
    %v2423 = vmul.u32 %v2416, %v2407
    %v2424 = vadd.s32 %v2419, %v2421
    %vm2425 = vc.u32 %v2419, %v2421
    %v2426 = vadd.s32 %v2422, 1
    %v2427 = vsel %vm2425, %v2426, %v2422
    %v2428 = vadd.s32 %v2423, %v2427
    %v2429 = vadd.s32 %v2428, 536870912
    %v2430 = vshrl.u32 %v2429, 30
    %v2431 = vshll.u32 %v2430, 30
    %v2432 = vsub.s32 %v2428, %v2431
    %vm2433 = vcmp.lt.s32.totalorder %v2432, 0
    %v2434 = vsub.s32 0, %v2432
    %v2435 = vsel %vm2433, %v2434, %v2432
    %v2436 = vclz %v2435
    %v2437 = vsub.s32 %v2436, 2
    %vm2438 = vcmp.gt.s32.totalorder 0, %v2437
    %v2439 = vsel %vm2438, 0, %v2437
    %v2440 = vsub.s32 32, %v2439
    %v2441 = vshll.u32 %v2432, %v2439
    %v2442 = vshrl.u32 %v2424, %v2440
    %v2443 = vor.u32 %v2441, %v2442
    %v2444 = vsub.s32 4294967266, %v2439
    %v2445 = vadd.s32 %v2444, 127
    %v2446 = vshll.u32 %v2445, 23
    %v2447 = vor.u32 4788187, %v2446
    %v2448 = vand.u32 2147483647, %v2447
    %v2450 = vcvt.s32.f32 %v2443
    %v2451 = vmul.f32 %v2450, %v2448
    %v2452 = vxor.u32 %v2451, 2147483648
    %v2453 = vsel %vm2370, %v2452, %v2451
    %v2454 = vsub.s32 4, %v2430
    %v2455 = vsel %vm2370, %v2454, %v2430
    %v2456 = vsel %vm2369, %v304, %v2453
    %v2457 = vsel %vm2369, 0, %v2455
    %v2458 = vcosq.f32.pop %v2456
    %v2459 = vsinq.f32.pop %v2456
    %vm2460 = vweird.f32 %v304
    %v2461 = vand.u32 %v2457, 3
    %vm2462 = vcmp.lt.s32.totalorder %v2461, 2
    %vm2463 = vcmp.eq.s32.totalorder %v2461, 0
    %v2464 = vxor.u32 %v2459, 2147483648
    %v2465 = vsel %vm2463, %v2458, %v2464
    %vm2466 = vcmp.eq.s32.totalorder %v2461, 2
    %v2467 = vxor.u32 %v2458, 2147483648
    %v2468 = vsel %vm2466, %v2467, %v2459
    %v2469 = vsel %vm2462, %v2465, %v2468
    %v2470 = vsel %vm2460, nan, %v2469
    %v2471 = vand.u32 2147483647, %v306
    %vm2472 = vcmp.le.f32.partialorder %v2471, 0.7853982
    %vm2473 = vcmp.lt.s32.totalorder %v306, 0
    %v2474 = vand.u32 %v306, 2139095040
    %v2475 = vshrl.u32 %v2474, 23
    %v2476 = vsub.s32 %v2475, 127
    %v2477 = vand.u32 2147483647, %v306
    %v2478 = vand.u32 %v2477, 8388607
    %v2479 = vor.u32 %v2478, 8388608
    %v2480 = vsub.s32 0, %v2479
    %v2481 = vadd.s32 %v2476, 1
    %vm2482 = vcmp.gt.s32.totalorder %v2481, 0
    %v2483 = vsel %vm2482, %v2481, 0
    %v2484 = vshrl.u32 %v2483, 5
    %v2485 = vand.u32 %v2483, 31
    %v2486 = vsub.s32 32, %v2485
    %v2487 = vshrl.u32 683565275, %v2486
    %v2488 = vshll.u32 683565275, %v2485
    %v2489 = vshrl.u32 2475754826, %v2486
    %v2490 = vor.u32 %v2488, %v2489
    %v2491 = vshll.u32 2475754826, %v2485
    %v2492 = vshrl.u32 2131351028, %v2486
    %v2493 = vor.u32 %v2491, %v2492
    %v2494 = vshll.u32 2131351028, %v2485
    %v2495 = vshrl.u32 2102212464, %v2486
    %v2496 = vor.u32 %v2494, %v2495
    %v2497 = vshll.u32 2102212464, %v2485
    %v2498 = vshrl.u32 920167782, %v2486
    %v2499 = vor.u32 %v2497, %v2498
    %v2500 = vshll.u32 920167782, %v2485
    %v2501 = vshrl.u32 1326507024, %v2486
    %v2502 = vor.u32 %v2500, %v2501
    %vm2503 = vcmp.lt.s32.totalorder %v2484, 1
    %vm2504 = vcmp.lt.s32.totalorder %v2484, 2
    %vm2505 = vcmp.lt.s32.totalorder %v2484, 3
    %vm2506 = vcmp.lt.s32.totalorder %v2484, 4
    %v2507 = vsel %vm2503, %v2487, %v2490
    %v2508 = vsel %vm2506, %v2496, 2102212464
    %v2509 = vsel %vm2505, %v2493, %v2508
    %v2510 = vsel %vm2504, %v2507, %v2509
    %v2511 = vsel %vm2503, %v2490, %v2493
    %v2512 = vsel %vm2506, %v2499, 920167782
    %v2513 = vsel %vm2505, %v2496, %v2512
    %v2514 = vsel %vm2504, %v2511, %v2513
    %v2515 = vsel %vm2503, %v2493, %v2496
    %v2516 = vsel %vm2506, %v2502, 1326507024
    %v2517 = vsel %vm2505, %v2499, %v2516
    %v2518 = vsel %vm2504, %v2515, %v2517
    %v2519 = vshll.u32 %v2479, 8
    %v2520 = vmul.u32.u64.compose %v2519, %v2518
    %v2521 = vextract.low.u32 %v2520
    %v2522 = vextract.high.u32 %v2520
    %v2523 = vmul.u32.u64.compose %v2519, %v2514
    %v2524 = vextract.low.u32 %v2523
    %v2525 = vextract.high.u32 %v2523
    %v2526 = vmul.u32 %v2519, %v2510
    %v2527 = vadd.s32 %v2522, %v2524
    %vm2528 = vc.u32 %v2522, %v2524
    %v2529 = vadd.s32 %v2525, 1
    %v2530 = vsel %vm2528, %v2529, %v2525
    %v2531 = vadd.s32 %v2526, %v2530
    %v2532 = vadd.s32 %v2531, 536870912
    %v2533 = vshrl.u32 %v2532, 30
    %v2534 = vshll.u32 %v2533, 30
    %v2535 = vsub.s32 %v2531, %v2534
    %vm2536 = vcmp.lt.s32.totalorder %v2535, 0
    %v2537 = vsub.s32 0, %v2535
    %v2538 = vsel %vm2536, %v2537, %v2535
    %v2539 = vclz %v2538
    %v2540 = vsub.s32 %v2539, 2
    %vm2541 = vcmp.gt.s32.totalorder 0, %v2540
    %v2542 = vsel %vm2541, 0, %v2540
    %v2543 = vsub.s32 32, %v2542
    %v2544 = vshll.u32 %v2535, %v2542
    %v2545 = vshrl.u32 %v2527, %v2543
    %v2546 = vor.u32 %v2544, %v2545
    %v2547 = vsub.s32 4294967266, %v2542
    %v2548 = vadd.s32 %v2547, 127
    %v2549 = vshll.u32 %v2548, 23
    %v2550 = vor.u32 4788187, %v2549
    %v2551 = vand.u32 2147483647, %v2550
    %v2553 = vcvt.s32.f32 %v2546
    %v2554 = vmul.f32 %v2553, %v2551
    %v2555 = vxor.u32 %v2554, 2147483648
    %v2556 = vsel %vm2473, %v2555, %v2554
    %v2557 = vsub.s32 4, %v2533
    %v2558 = vsel %vm2473, %v2557, %v2533
    %v2559 = vsel %vm2472, %v306, %v2556
    %v2560 = vsel %vm2472, 0, %v2558
    %v2561 = vcosq.f32.pop %v2559
    %v2562 = vsinq.f32.pop %v2559
    %vm2563 = vweird.f32 %v306
    %v2564 = vand.u32 %v2560, 3
    %vm2565 = vcmp.lt.s32.totalorder %v2564, 2
    %vm2566 = vcmp.eq.s32.totalorder %v2564, 0
    %v2567 = vxor.u32 %v2562, 2147483648
    %v2568 = vsel %vm2566, %v2561, %v2567
    %vm2569 = vcmp.eq.s32.totalorder %v2564, 2
    %v2570 = vxor.u32 %v2561, 2147483648
    %v2571 = vsel %vm2569, %v2570, %v2562
    %v2572 = vsel %vm2565, %v2568, %v2571
    %v2573 = vsel %vm2563, nan, %v2572
    %v2574 = vand.u32 2147483647, %v375
    %vm2575 = vcmp.le.f32.partialorder %v2574, 0.7853982
    %vm2576 = vcmp.lt.s32.totalorder %v375, 0
    %v2577 = vand.u32 %v375, 2139095040
    %v2578 = vshrl.u32 %v2577, 23
    %v2579 = vsub.s32 %v2578, 127
    %v2580 = vand.u32 2147483647, %v375
    %v2581 = vand.u32 %v2580, 8388607
    %v2582 = vor.u32 %v2581, 8388608
    %v2583 = vsub.s32 0, %v2582
    %v2584 = vadd.s32 %v2579, 1
    %vm2585 = vcmp.gt.s32.totalorder %v2584, 0
    %v2586 = vsel %vm2585, %v2584, 0
    %v2587 = vshrl.u32 %v2586, 5
    %v2588 = vand.u32 %v2586, 31
    %v2589 = vsub.s32 32, %v2588
    %v2590 = vshrl.u32 683565275, %v2589
    %v2591 = vshll.u32 683565275, %v2588
    %v2592 = vshrl.u32 2475754826, %v2589
    %v2593 = vor.u32 %v2591, %v2592
    %v2594 = vshll.u32 2475754826, %v2588
    %v2595 = vshrl.u32 2131351028, %v2589
    %v2596 = vor.u32 %v2594, %v2595
    %v2597 = vshll.u32 2131351028, %v2588
    %v2598 = vshrl.u32 2102212464, %v2589
    %v2599 = vor.u32 %v2597, %v2598
    %v2600 = vshll.u32 2102212464, %v2588
    %v2601 = vshrl.u32 920167782, %v2589
    %v2602 = vor.u32 %v2600, %v2601
    %v2603 = vshll.u32 920167782, %v2588
    %v2604 = vshrl.u32 1326507024, %v2589
    %v2605 = vor.u32 %v2603, %v2604
    %vm2606 = vcmp.lt.s32.totalorder %v2587, 1
    %vm2607 = vcmp.lt.s32.totalorder %v2587, 2
    %vm2608 = vcmp.lt.s32.totalorder %v2587, 3
    %vm2609 = vcmp.lt.s32.totalorder %v2587, 4
    %v2610 = vsel %vm2606, %v2590, %v2593
    %v2611 = vsel %vm2609, %v2599, 2102212464
    %v2612 = vsel %vm2608, %v2596, %v2611
    %v2613 = vsel %vm2607, %v2610, %v2612
    %v2614 = vsel %vm2606, %v2593, %v2596
    %v2615 = vsel %vm2609, %v2602, 920167782
    %v2616 = vsel %vm2608, %v2599, %v2615
    %v2617 = vsel %vm2607, %v2614, %v2616
    %v2618 = vsel %vm2606, %v2596, %v2599
    %v2619 = vsel %vm2609, %v2605, 1326507024
    %v2620 = vsel %vm2608, %v2602, %v2619
    %v2621 = vsel %vm2607, %v2618, %v2620
    %v2622 = vshll.u32 %v2582, 8
    %v2623 = vmul.u32.u64.compose %v2622, %v2621
    %v2624 = vextract.low.u32 %v2623
    %v2625 = vextract.high.u32 %v2623
    %v2626 = vmul.u32.u64.compose %v2622, %v2617
    %v2627 = vextract.low.u32 %v2626
    %v2628 = vextract.high.u32 %v2626
    %v2629 = vmul.u32 %v2622, %v2613
    %v2630 = vadd.s32 %v2625, %v2627
    %vm2631 = vc.u32 %v2625, %v2627
    %v2632 = vadd.s32 %v2628, 1
    %v2633 = vsel %vm2631, %v2632, %v2628
    %v2634 = vadd.s32 %v2629, %v2633
    %v2635 = vadd.s32 %v2634, 536870912
    %v2636 = vshrl.u32 %v2635, 30
    %v2637 = vshll.u32 %v2636, 30
    %v2638 = vsub.s32 %v2634, %v2637
    %vm2639 = vcmp.lt.s32.totalorder %v2638, 0
    %v2640 = vsub.s32 0, %v2638
    %v2641 = vsel %vm2639, %v2640, %v2638
    %v2642 = vclz %v2641
    %v2643 = vsub.s32 %v2642, 2
    %vm2644 = vcmp.gt.s32.totalorder 0, %v2643
    %v2645 = vsel %vm2644, 0, %v2643
    %v2646 = vsub.s32 32, %v2645
    %v2647 = vshll.u32 %v2638, %v2645
    %v2648 = vshrl.u32 %v2630, %v2646
    %v2649 = vor.u32 %v2647, %v2648
    %v2650 = vsub.s32 4294967266, %v2645
    %v2651 = vadd.s32 %v2650, 127
    %v2652 = vshll.u32 %v2651, 23
    %v2653 = vor.u32 4788187, %v2652
    %v2654 = vand.u32 2147483647, %v2653
    %v2656 = vcvt.s32.f32 %v2649
    %v2657 = vmul.f32 %v2656, %v2654
    %v2658 = vxor.u32 %v2657, 2147483648
    %v2659 = vsel %vm2576, %v2658, %v2657
    %v2660 = vsub.s32 4, %v2636
    %v2661 = vsel %vm2576, %v2660, %v2636
    %v2662 = vsel %vm2575, %v375, %v2659
    %v2663 = vsel %vm2575, 0, %v2661
    %v2664 = vcosq.f32.pop %v2662
    %v2665 = vsinq.f32.pop %v2662
    %vm2666 = vweird.f32 %v375
    %v2667 = vand.u32 %v2663, 3
    %vm2668 = vcmp.lt.s32.totalorder %v2667, 2
    %vm2669 = vcmp.eq.s32.totalorder %v2667, 0
    %v2670 = vxor.u32 %v2665, 2147483648
    %v2671 = vsel %vm2669, %v2664, %v2670
    %vm2672 = vcmp.eq.s32.totalorder %v2667, 2
    %v2673 = vxor.u32 %v2664, 2147483648
    %v2674 = vsel %vm2672, %v2673, %v2665
    %v2675 = vsel %vm2668, %v2671, %v2674
    %v2676 = vsel %vm2666, nan, %v2675
    %v2677 = vand.u32 2147483647, %v377
    %vm2678 = vcmp.le.f32.partialorder %v2677, 0.7853982
    %vm2679 = vcmp.lt.s32.totalorder %v377, 0
    %v2680 = vand.u32 %v377, 2139095040
    %v2681 = vshrl.u32 %v2680, 23
    %v2682 = vsub.s32 %v2681, 127
    %v2683 = vand.u32 2147483647, %v377
    %v2684 = vand.u32 %v2683, 8388607
    %v2685 = vor.u32 %v2684, 8388608
    %v2686 = vsub.s32 0, %v2685
    %v2687 = vadd.s32 %v2682, 1
    %vm2688 = vcmp.gt.s32.totalorder %v2687, 0
    %v2689 = vsel %vm2688, %v2687, 0
    %v2690 = vshrl.u32 %v2689, 5
    %v2691 = vand.u32 %v2689, 31
    %v2692 = vsub.s32 32, %v2691
    %v2693 = vshrl.u32 683565275, %v2692
    %v2694 = vshll.u32 683565275, %v2691
    %v2695 = vshrl.u32 2475754826, %v2692
    %v2696 = vor.u32 %v2694, %v2695
    %v2697 = vshll.u32 2475754826, %v2691
    %v2698 = vshrl.u32 2131351028, %v2692
    %v2699 = vor.u32 %v2697, %v2698
    %v2700 = vshll.u32 2131351028, %v2691
    %v2701 = vshrl.u32 2102212464, %v2692
    %v2702 = vor.u32 %v2700, %v2701
    %v2703 = vshll.u32 2102212464, %v2691
    %v2704 = vshrl.u32 920167782, %v2692
    %v2705 = vor.u32 %v2703, %v2704
    %v2706 = vshll.u32 920167782, %v2691
    %v2707 = vshrl.u32 1326507024, %v2692
    %v2708 = vor.u32 %v2706, %v2707
    %vm2709 = vcmp.lt.s32.totalorder %v2690, 1
    %vm2710 = vcmp.lt.s32.totalorder %v2690, 2
    %vm2711 = vcmp.lt.s32.totalorder %v2690, 3
    %vm2712 = vcmp.lt.s32.totalorder %v2690, 4
    %v2713 = vsel %vm2709, %v2693, %v2696
    %v2714 = vsel %vm2712, %v2702, 2102212464
    %v2715 = vsel %vm2711, %v2699, %v2714
    %v2716 = vsel %vm2710, %v2713, %v2715
    %v2717 = vsel %vm2709, %v2696, %v2699
    %v2718 = vsel %vm2712, %v2705, 920167782
    %v2719 = vsel %vm2711, %v2702, %v2718
    %v2720 = vsel %vm2710, %v2717, %v2719
    %v2721 = vsel %vm2709, %v2699, %v2702
    %v2722 = vsel %vm2712, %v2708, 1326507024
    %v2723 = vsel %vm2711, %v2705, %v2722
    %v2724 = vsel %vm2710, %v2721, %v2723
    %v2725 = vshll.u32 %v2685, 8
    %v2726 = vmul.u32.u64.compose %v2725, %v2724
    %v2727 = vextract.low.u32 %v2726
    %v2728 = vextract.high.u32 %v2726
    %v2729 = vmul.u32.u64.compose %v2725, %v2720
    %v2730 = vextract.low.u32 %v2729
    %v2731 = vextract.high.u32 %v2729
    %v2732 = vmul.u32 %v2725, %v2716
    %v2733 = vadd.s32 %v2728, %v2730
    %vm2734 = vc.u32 %v2728, %v2730
    %v2735 = vadd.s32 %v2731, 1
    %v2736 = vsel %vm2734, %v2735, %v2731
    %v2737 = vadd.s32 %v2732, %v2736
    %v2738 = vadd.s32 %v2737, 536870912
    %v2739 = vshrl.u32 %v2738, 30
    %v2740 = vshll.u32 %v2739, 30
    %v2741 = vsub.s32 %v2737, %v2740
    %vm2742 = vcmp.lt.s32.totalorder %v2741, 0
    %v2743 = vsub.s32 0, %v2741
    %v2744 = vsel %vm2742, %v2743, %v2741
    %v2745 = vclz %v2744
    %v2746 = vsub.s32 %v2745, 2
    %vm2747 = vcmp.gt.s32.totalorder 0, %v2746
    %v2748 = vsel %vm2747, 0, %v2746
    %v2749 = vsub.s32 32, %v2748
    %v2750 = vshll.u32 %v2741, %v2748
    %v2751 = vshrl.u32 %v2733, %v2749
    %v2752 = vor.u32 %v2750, %v2751
    %v2753 = vsub.s32 4294967266, %v2748
    %v2754 = vadd.s32 %v2753, 127
    %v2755 = vshll.u32 %v2754, 23
    %v2756 = vor.u32 4788187, %v2755
    %v2757 = vand.u32 2147483647, %v2756
    %v2759 = vcvt.s32.f32 %v2752
    %v2760 = vmul.f32 %v2759, %v2757
    %v2761 = vxor.u32 %v2760, 2147483648
    %v2762 = vsel %vm2679, %v2761, %v2760
    %v2763 = vsub.s32 4, %v2739
    %v2764 = vsel %vm2679, %v2763, %v2739
    %v2765 = vsel %vm2678, %v377, %v2762
    %v2766 = vsel %vm2678, 0, %v2764
    %v2767 = vcosq.f32.pop %v2765
    %v2768 = vsinq.f32.pop %v2765
    %vm2769 = vweird.f32 %v377
    %v2770 = vand.u32 %v2766, 3
    %vm2771 = vcmp.lt.s32.totalorder %v2770, 2
    %vm2772 = vcmp.eq.s32.totalorder %v2770, 0
    %v2773 = vxor.u32 %v2768, 2147483648
    %v2774 = vsel %vm2772, %v2767, %v2773
    %vm2775 = vcmp.eq.s32.totalorder %v2770, 2
    %v2776 = vxor.u32 %v2767, 2147483648
    %v2777 = vsel %vm2775, %v2776, %v2768
    %v2778 = vsel %vm2771, %v2774, %v2777
    %v2779 = vsel %vm2769, nan, %v2778
    %v2780 = vand.u32 2147483647, %v446
    %vm2781 = vcmp.le.f32.partialorder %v2780, 0.7853982
    %vm2782 = vcmp.lt.s32.totalorder %v446, 0
    %v2783 = vand.u32 %v446, 2139095040
    %v2784 = vshrl.u32 %v2783, 23
    %v2785 = vsub.s32 %v2784, 127
    %v2786 = vand.u32 2147483647, %v446
    %v2787 = vand.u32 %v2786, 8388607
    %v2788 = vor.u32 %v2787, 8388608
    %v2789 = vsub.s32 0, %v2788
    %v2790 = vadd.s32 %v2785, 1
    %vm2791 = vcmp.gt.s32.totalorder %v2790, 0
    %v2792 = vsel %vm2791, %v2790, 0
    %v2793 = vshrl.u32 %v2792, 5
    %v2794 = vand.u32 %v2792, 31
    %v2795 = vsub.s32 32, %v2794
    %v2796 = vshrl.u32 683565275, %v2795
    %v2797 = vshll.u32 683565275, %v2794
    %v2798 = vshrl.u32 2475754826, %v2795
    %v2799 = vor.u32 %v2797, %v2798
    %v2800 = vshll.u32 2475754826, %v2794
    %v2801 = vshrl.u32 2131351028, %v2795
    %v2802 = vor.u32 %v2800, %v2801
    %v2803 = vshll.u32 2131351028, %v2794
    %v2804 = vshrl.u32 2102212464, %v2795
    %v2805 = vor.u32 %v2803, %v2804
    %v2806 = vshll.u32 2102212464, %v2794
    %v2807 = vshrl.u32 920167782, %v2795
    %v2808 = vor.u32 %v2806, %v2807
    %v2809 = vshll.u32 920167782, %v2794
    %v2810 = vshrl.u32 1326507024, %v2795
    %v2811 = vor.u32 %v2809, %v2810
    %vm2812 = vcmp.lt.s32.totalorder %v2793, 1
    %vm2813 = vcmp.lt.s32.totalorder %v2793, 2
    %vm2814 = vcmp.lt.s32.totalorder %v2793, 3
    %vm2815 = vcmp.lt.s32.totalorder %v2793, 4
    %v2816 = vsel %vm2812, %v2796, %v2799
    %v2817 = vsel %vm2815, %v2805, 2102212464
    %v2818 = vsel %vm2814, %v2802, %v2817
    %v2819 = vsel %vm2813, %v2816, %v2818
    %v2820 = vsel %vm2812, %v2799, %v2802
    %v2821 = vsel %vm2815, %v2808, 920167782
    %v2822 = vsel %vm2814, %v2805, %v2821
    %v2823 = vsel %vm2813, %v2820, %v2822
    %v2824 = vsel %vm2812, %v2802, %v2805
    %v2825 = vsel %vm2815, %v2811, 1326507024
    %v2826 = vsel %vm2814, %v2808, %v2825
    %v2827 = vsel %vm2813, %v2824, %v2826
    %v2828 = vshll.u32 %v2788, 8
    %v2829 = vmul.u32.u64.compose %v2828, %v2827
    %v2830 = vextract.low.u32 %v2829
    %v2831 = vextract.high.u32 %v2829
    %v2832 = vmul.u32.u64.compose %v2828, %v2823
    %v2833 = vextract.low.u32 %v2832
    %v2834 = vextract.high.u32 %v2832
    %v2835 = vmul.u32 %v2828, %v2819
    %v2836 = vadd.s32 %v2831, %v2833
    %vm2837 = vc.u32 %v2831, %v2833
    %v2838 = vadd.s32 %v2834, 1
    %v2839 = vsel %vm2837, %v2838, %v2834
    %v2840 = vadd.s32 %v2835, %v2839
    %v2841 = vadd.s32 %v2840, 536870912
    %v2842 = vshrl.u32 %v2841, 30
    %v2843 = vshll.u32 %v2842, 30
    %v2844 = vsub.s32 %v2840, %v2843
    %vm2845 = vcmp.lt.s32.totalorder %v2844, 0
    %v2846 = vsub.s32 0, %v2844
    %v2847 = vsel %vm2845, %v2846, %v2844
    %v2848 = vclz %v2847
    %v2849 = vsub.s32 %v2848, 2
    %vm2850 = vcmp.gt.s32.totalorder 0, %v2849
    %v2851 = vsel %vm2850, 0, %v2849
    %v2852 = vsub.s32 32, %v2851
    %v2853 = vshll.u32 %v2844, %v2851
    %v2854 = vshrl.u32 %v2836, %v2852
    %v2855 = vor.u32 %v2853, %v2854
    %v2856 = vsub.s32 4294967266, %v2851
    %v2857 = vadd.s32 %v2856, 127
    %v2858 = vshll.u32 %v2857, 23
    %v2859 = vor.u32 4788187, %v2858
    %v2860 = vand.u32 2147483647, %v2859
    %v2862 = vcvt.s32.f32 %v2855
    %v2863 = vmul.f32 %v2862, %v2860
    %v2864 = vxor.u32 %v2863, 2147483648
    %v2865 = vsel %vm2782, %v2864, %v2863
    %v2866 = vsub.s32 4, %v2842
    %v2867 = vsel %vm2782, %v2866, %v2842
    %v2868 = vsel %vm2781, %v446, %v2865
    %v2869 = vsel %vm2781, 0, %v2867
    %v2870 = vcosq.f32.pop %v2868
    %v2871 = vsinq.f32.pop %v2868
    %vm2872 = vweird.f32 %v446
    %v2873 = vand.u32 %v2869, 3
    %vm2874 = vcmp.lt.s32.totalorder %v2873, 2
    %vm2875 = vcmp.eq.s32.totalorder %v2873, 0
    %v2876 = vxor.u32 %v2871, 2147483648
    %v2877 = vsel %vm2875, %v2870, %v2876
    %vm2878 = vcmp.eq.s32.totalorder %v2873, 2
    %v2879 = vxor.u32 %v2870, 2147483648
    %v2880 = vsel %vm2878, %v2879, %v2871
    %v2881 = vsel %vm2874, %v2877, %v2880
    %v2882 = vsel %vm2872, nan, %v2881
    %v2883 = vand.u32 2147483647, %v448
    %vm2884 = vcmp.le.f32.partialorder %v2883, 0.7853982
    %vm2885 = vcmp.lt.s32.totalorder %v448, 0
    %v2886 = vand.u32 %v448, 2139095040
    %v2887 = vshrl.u32 %v2886, 23
    %v2888 = vsub.s32 %v2887, 127
    %v2889 = vand.u32 2147483647, %v448
    %v2890 = vand.u32 %v2889, 8388607
    %v2891 = vor.u32 %v2890, 8388608
    %v2892 = vsub.s32 0, %v2891
    %v2893 = vadd.s32 %v2888, 1
    %vm2894 = vcmp.gt.s32.totalorder %v2893, 0
    %v2895 = vsel %vm2894, %v2893, 0
    %v2896 = vshrl.u32 %v2895, 5
    %v2897 = vand.u32 %v2895, 31
    %v2898 = vsub.s32 32, %v2897
    %v2899 = vshrl.u32 683565275, %v2898
    %v2900 = vshll.u32 683565275, %v2897
    %v2901 = vshrl.u32 2475754826, %v2898
    %v2902 = vor.u32 %v2900, %v2901
    %v2903 = vshll.u32 2475754826, %v2897
    %v2904 = vshrl.u32 2131351028, %v2898
    %v2905 = vor.u32 %v2903, %v2904
    %v2906 = vshll.u32 2131351028, %v2897
    %v2907 = vshrl.u32 2102212464, %v2898
    %v2908 = vor.u32 %v2906, %v2907
    %v2909 = vshll.u32 2102212464, %v2897
    %v2910 = vshrl.u32 920167782, %v2898
    %v2911 = vor.u32 %v2909, %v2910
    %v2912 = vshll.u32 920167782, %v2897
    %v2913 = vshrl.u32 1326507024, %v2898
    %v2914 = vor.u32 %v2912, %v2913
    %vm2915 = vcmp.lt.s32.totalorder %v2896, 1
    %vm2916 = vcmp.lt.s32.totalorder %v2896, 2
    %vm2917 = vcmp.lt.s32.totalorder %v2896, 3
    %vm2918 = vcmp.lt.s32.totalorder %v2896, 4
    %v2919 = vsel %vm2915, %v2899, %v2902
    %v2920 = vsel %vm2918, %v2908, 2102212464
    %v2921 = vsel %vm2917, %v2905, %v2920
    %v2922 = vsel %vm2916, %v2919, %v2921
    %v2923 = vsel %vm2915, %v2902, %v2905
    %v2924 = vsel %vm2918, %v2911, 920167782
    %v2925 = vsel %vm2917, %v2908, %v2924
    %v2926 = vsel %vm2916, %v2923, %v2925
    %v2927 = vsel %vm2915, %v2905, %v2908
    %v2928 = vsel %vm2918, %v2914, 1326507024
    %v2929 = vsel %vm2917, %v2911, %v2928
    %v2930 = vsel %vm2916, %v2927, %v2929
    %v2931 = vshll.u32 %v2891, 8
    %v2932 = vmul.u32.u64.compose %v2931, %v2930
    %v2933 = vextract.low.u32 %v2932
    %v2934 = vextract.high.u32 %v2932
    %v2935 = vmul.u32.u64.compose %v2931, %v2926
    %v2936 = vextract.low.u32 %v2935
    %v2937 = vextract.high.u32 %v2935
    %v2938 = vmul.u32 %v2931, %v2922
    %v2939 = vadd.s32 %v2934, %v2936
    %vm2940 = vc.u32 %v2934, %v2936
    %v2941 = vadd.s32 %v2937, 1
    %v2942 = vsel %vm2940, %v2941, %v2937
    %v2943 = vadd.s32 %v2938, %v2942
    %v2944 = vadd.s32 %v2943, 536870912
    %v2945 = vshrl.u32 %v2944, 30
    %v2946 = vshll.u32 %v2945, 30
    %v2947 = vsub.s32 %v2943, %v2946
    %vm2948 = vcmp.lt.s32.totalorder %v2947, 0
    %v2949 = vsub.s32 0, %v2947
    %v2950 = vsel %vm2948, %v2949, %v2947
    %v2951 = vclz %v2950
    %v2952 = vsub.s32 %v2951, 2
    %vm2953 = vcmp.gt.s32.totalorder 0, %v2952
    %v2954 = vsel %vm2953, 0, %v2952
    %v2955 = vsub.s32 32, %v2954
    %v2956 = vshll.u32 %v2947, %v2954
    %v2957 = vshrl.u32 %v2939, %v2955
    %v2958 = vor.u32 %v2956, %v2957
    %v2959 = vsub.s32 4294967266, %v2954
    %v2960 = vadd.s32 %v2959, 127
    %v2961 = vshll.u32 %v2960, 23
    %v2962 = vor.u32 4788187, %v2961
    %v2963 = vand.u32 2147483647, %v2962
    %v2965 = vcvt.s32.f32 %v2958
    %v2966 = vmul.f32 %v2965, %v2963
    %v2967 = vxor.u32 %v2966, 2147483648
    %v2968 = vsel %vm2885, %v2967, %v2966
    %v2969 = vsub.s32 4, %v2945
    %v2970 = vsel %vm2885, %v2969, %v2945
    %v2971 = vsel %vm2884, %v448, %v2968
    %v2972 = vsel %vm2884, 0, %v2970
    %v2973 = vcosq.f32.pop %v2971
    %v2974 = vsinq.f32.pop %v2971
    %vm2975 = vweird.f32 %v448
    %v2976 = vand.u32 %v2972, 3
    %vm2977 = vcmp.lt.s32.totalorder %v2976, 2
    %vm2978 = vcmp.eq.s32.totalorder %v2976, 0
    %v2979 = vxor.u32 %v2974, 2147483648
    %v2980 = vsel %vm2978, %v2973, %v2979
    %vm2981 = vcmp.eq.s32.totalorder %v2976, 2
    %v2982 = vxor.u32 %v2973, 2147483648
    %v2983 = vsel %vm2981, %v2982, %v2974
    %v2984 = vsel %vm2977, %v2980, %v2983
    %v2985 = vsel %vm2975, nan, %v2984
    %v2986 = vand.u32 2147483647, %v517
    %vm2987 = vcmp.le.f32.partialorder %v2986, 0.7853982
    %vm2988 = vcmp.lt.s32.totalorder %v517, 0
    %v2989 = vand.u32 %v517, 2139095040
    %v2990 = vshrl.u32 %v2989, 23
    %v2991 = vsub.s32 %v2990, 127
    %v2992 = vand.u32 2147483647, %v517
    %v2993 = vand.u32 %v2992, 8388607
    %v2994 = vor.u32 %v2993, 8388608
    %v2995 = vsub.s32 0, %v2994
    %v2996 = vadd.s32 %v2991, 1
    %vm2997 = vcmp.gt.s32.totalorder %v2996, 0
    %v2998 = vsel %vm2997, %v2996, 0
    %v2999 = vshrl.u32 %v2998, 5
    %v3000 = vand.u32 %v2998, 31
    %v3001 = vsub.s32 32, %v3000
    %v3002 = vshrl.u32 683565275, %v3001
    %v3003 = vshll.u32 683565275, %v3000
    %v3004 = vshrl.u32 2475754826, %v3001
    %v3005 = vor.u32 %v3003, %v3004
    %v3006 = vshll.u32 2475754826, %v3000
    %v3007 = vshrl.u32 2131351028, %v3001
    %v3008 = vor.u32 %v3006, %v3007
    %v3009 = vshll.u32 2131351028, %v3000
    %v3010 = vshrl.u32 2102212464, %v3001
    %v3011 = vor.u32 %v3009, %v3010
    %v3012 = vshll.u32 2102212464, %v3000
    %v3013 = vshrl.u32 920167782, %v3001
    %v3014 = vor.u32 %v3012, %v3013
    %v3015 = vshll.u32 920167782, %v3000
    %v3016 = vshrl.u32 1326507024, %v3001
    %v3017 = vor.u32 %v3015, %v3016
    %vm3018 = vcmp.lt.s32.totalorder %v2999, 1
    %vm3019 = vcmp.lt.s32.totalorder %v2999, 2
    %vm3020 = vcmp.lt.s32.totalorder %v2999, 3
    %vm3021 = vcmp.lt.s32.totalorder %v2999, 4
    %v3022 = vsel %vm3018, %v3002, %v3005
    %v3023 = vsel %vm3021, %v3011, 2102212464
    %v3024 = vsel %vm3020, %v3008, %v3023
    %v3025 = vsel %vm3019, %v3022, %v3024
    %v3026 = vsel %vm3018, %v3005, %v3008
    %v3027 = vsel %vm3021, %v3014, 920167782
    %v3028 = vsel %vm3020, %v3011, %v3027
    %v3029 = vsel %vm3019, %v3026, %v3028
    %v3030 = vsel %vm3018, %v3008, %v3011
    %v3031 = vsel %vm3021, %v3017, 1326507024
    %v3032 = vsel %vm3020, %v3014, %v3031
    %v3033 = vsel %vm3019, %v3030, %v3032
    %v3034 = vshll.u32 %v2994, 8
    %v3035 = vmul.u32.u64.compose %v3034, %v3033
    %v3036 = vextract.low.u32 %v3035
    %v3037 = vextract.high.u32 %v3035
    %v3038 = vmul.u32.u64.compose %v3034, %v3029
    %v3039 = vextract.low.u32 %v3038
    %v3040 = vextract.high.u32 %v3038
    %v3041 = vmul.u32 %v3034, %v3025
    %v3042 = vadd.s32 %v3037, %v3039
    %vm3043 = vc.u32 %v3037, %v3039
    %v3044 = vadd.s32 %v3040, 1
    %v3045 = vsel %vm3043, %v3044, %v3040
    %v3046 = vadd.s32 %v3041, %v3045
    %v3047 = vadd.s32 %v3046, 536870912
    %v3048 = vshrl.u32 %v3047, 30
    %v3049 = vshll.u32 %v3048, 30
    %v3050 = vsub.s32 %v3046, %v3049
    %vm3051 = vcmp.lt.s32.totalorder %v3050, 0
    %v3052 = vsub.s32 0, %v3050
    %v3053 = vsel %vm3051, %v3052, %v3050
    %v3054 = vclz %v3053
    %v3055 = vsub.s32 %v3054, 2
    %vm3056 = vcmp.gt.s32.totalorder 0, %v3055
    %v3057 = vsel %vm3056, 0, %v3055
    %v3058 = vsub.s32 32, %v3057
    %v3059 = vshll.u32 %v3050, %v3057
    %v3060 = vshrl.u32 %v3042, %v3058
    %v3061 = vor.u32 %v3059, %v3060
    %v3062 = vsub.s32 4294967266, %v3057
    %v3063 = vadd.s32 %v3062, 127
    %v3064 = vshll.u32 %v3063, 23
    %v3065 = vor.u32 4788187, %v3064
    %v3066 = vand.u32 2147483647, %v3065
    %v3068 = vcvt.s32.f32 %v3061
    %v3069 = vmul.f32 %v3068, %v3066
    %v3070 = vxor.u32 %v3069, 2147483648
    %v3071 = vsel %vm2988, %v3070, %v3069
    %v3072 = vsub.s32 4, %v3048
    %v3073 = vsel %vm2988, %v3072, %v3048
    %v3074 = vsel %vm2987, %v517, %v3071
    %v3075 = vsel %vm2987, 0, %v3073
    %v3076 = vcosq.f32.pop %v3074
    %v3077 = vsinq.f32.pop %v3074
    %vm3078 = vweird.f32 %v517
    %v3079 = vand.u32 %v3075, 3
    %vm3080 = vcmp.lt.s32.totalorder %v3079, 2
    %vm3081 = vcmp.eq.s32.totalorder %v3079, 0
    %v3082 = vxor.u32 %v3077, 2147483648
    %v3083 = vsel %vm3081, %v3076, %v3082
    %vm3084 = vcmp.eq.s32.totalorder %v3079, 2
    %v3085 = vxor.u32 %v3076, 2147483648
    %v3086 = vsel %vm3084, %v3085, %v3077
    %v3087 = vsel %vm3080, %v3083, %v3086
    %v3088 = vsel %vm3078, nan, %v3087
    %v3089 = vand.u32 2147483647, %v519
    %vm3090 = vcmp.le.f32.partialorder %v3089, 0.7853982
    %vm3091 = vcmp.lt.s32.totalorder %v519, 0
    %v3092 = vand.u32 %v519, 2139095040
    %v3093 = vshrl.u32 %v3092, 23
    %v3094 = vsub.s32 %v3093, 127
    %v3095 = vand.u32 2147483647, %v519
    %v3096 = vand.u32 %v3095, 8388607
    %v3097 = vor.u32 %v3096, 8388608
    %v3098 = vsub.s32 0, %v3097
    %v3099 = vadd.s32 %v3094, 1
    %vm3100 = vcmp.gt.s32.totalorder %v3099, 0
    %v3101 = vsel %vm3100, %v3099, 0
    %v3102 = vshrl.u32 %v3101, 5
    %v3103 = vand.u32 %v3101, 31
    %v3104 = vsub.s32 32, %v3103
    %v3105 = vshrl.u32 683565275, %v3104
    %v3106 = vshll.u32 683565275, %v3103
    %v3107 = vshrl.u32 2475754826, %v3104
    %v3108 = vor.u32 %v3106, %v3107
    %v3109 = vshll.u32 2475754826, %v3103
    %v3110 = vshrl.u32 2131351028, %v3104
    %v3111 = vor.u32 %v3109, %v3110
    %v3112 = vshll.u32 2131351028, %v3103
    %v3113 = vshrl.u32 2102212464, %v3104
    %v3114 = vor.u32 %v3112, %v3113
    %v3115 = vshll.u32 2102212464, %v3103
    %v3116 = vshrl.u32 920167782, %v3104
    %v3117 = vor.u32 %v3115, %v3116
    %v3118 = vshll.u32 920167782, %v3103
    %v3119 = vshrl.u32 1326507024, %v3104
    %v3120 = vor.u32 %v3118, %v3119
    %vm3121 = vcmp.lt.s32.totalorder %v3102, 1
    %vm3122 = vcmp.lt.s32.totalorder %v3102, 2
    %vm3123 = vcmp.lt.s32.totalorder %v3102, 3
    %vm3124 = vcmp.lt.s32.totalorder %v3102, 4
    %v3125 = vsel %vm3121, %v3105, %v3108
    %v3126 = vsel %vm3124, %v3114, 2102212464
    %v3127 = vsel %vm3123, %v3111, %v3126
    %v3128 = vsel %vm3122, %v3125, %v3127
    %v3129 = vsel %vm3121, %v3108, %v3111
    %v3130 = vsel %vm3124, %v3117, 920167782
    %v3131 = vsel %vm3123, %v3114, %v3130
    %v3132 = vsel %vm3122, %v3129, %v3131
    %v3133 = vsel %vm3121, %v3111, %v3114
    %v3134 = vsel %vm3124, %v3120, 1326507024
    %v3135 = vsel %vm3123, %v3117, %v3134
    %v3136 = vsel %vm3122, %v3133, %v3135
    %v3137 = vshll.u32 %v3097, 8
    %v3138 = vmul.u32.u64.compose %v3137, %v3136
    %v3139 = vextract.low.u32 %v3138
    %v3140 = vextract.high.u32 %v3138
    %v3141 = vmul.u32.u64.compose %v3137, %v3132
    %v3142 = vextract.low.u32 %v3141
    %v3143 = vextract.high.u32 %v3141
    %v3144 = vmul.u32 %v3137, %v3128
    %v3145 = vadd.s32 %v3140, %v3142
    %vm3146 = vc.u32 %v3140, %v3142
    %v3147 = vadd.s32 %v3143, 1
    %v3148 = vsel %vm3146, %v3147, %v3143
    %v3149 = vadd.s32 %v3144, %v3148
    %v3150 = vadd.s32 %v3149, 536870912
    %v3151 = vshrl.u32 %v3150, 30
    %v3152 = vshll.u32 %v3151, 30
    %v3153 = vsub.s32 %v3149, %v3152
    %vm3154 = vcmp.lt.s32.totalorder %v3153, 0
    %v3155 = vsub.s32 0, %v3153
    %v3156 = vsel %vm3154, %v3155, %v3153
    %v3157 = vclz %v3156
    %v3158 = vsub.s32 %v3157, 2
    %vm3159 = vcmp.gt.s32.totalorder 0, %v3158
    %v3160 = vsel %vm3159, 0, %v3158
    %v3161 = vsub.s32 32, %v3160
    %v3162 = vshll.u32 %v3153, %v3160
    %v3163 = vshrl.u32 %v3145, %v3161
    %v3164 = vor.u32 %v3162, %v3163
    %v3165 = vsub.s32 4294967266, %v3160
    %v3166 = vadd.s32 %v3165, 127
    %v3167 = vshll.u32 %v3166, 23
    %v3168 = vor.u32 4788187, %v3167
    %v3169 = vand.u32 2147483647, %v3168
    %v3171 = vcvt.s32.f32 %v3164
    %v3172 = vmul.f32 %v3171, %v3169
    %v3173 = vxor.u32 %v3172, 2147483648
    %v3174 = vsel %vm3091, %v3173, %v3172
    %v3175 = vsub.s32 4, %v3151
    %v3176 = vsel %vm3091, %v3175, %v3151
    %v3177 = vsel %vm3090, %v519, %v3174
    %v3178 = vsel %vm3090, 0, %v3176
    %v3179 = vcosq.f32.pop %v3177
    %v3180 = vsinq.f32.pop %v3177
    %vm3181 = vweird.f32 %v519
    %v3182 = vand.u32 %v3178, 3
    %vm3183 = vcmp.lt.s32.totalorder %v3182, 2
    %vm3184 = vcmp.eq.s32.totalorder %v3182, 0
    %v3185 = vxor.u32 %v3180, 2147483648
    %v3186 = vsel %vm3184, %v3179, %v3185
    %vm3187 = vcmp.eq.s32.totalorder %v3182, 2
    %v3188 = vxor.u32 %v3179, 2147483648
    %v3189 = vsel %vm3187, %v3188, %v3180
    %v3190 = vsel %vm3183, %v3186, %v3189
    %v3191 = vsel %vm3181, nan, %v3190
    %v3192 = vand.u32 2147483647, %v588
    %vm3193 = vcmp.le.f32.partialorder %v3192, 0.7853982
    %vm3194 = vcmp.lt.s32.totalorder %v588, 0
    %v3195 = vand.u32 %v588, 2139095040
    %v3196 = vshrl.u32 %v3195, 23
    %v3197 = vsub.s32 %v3196, 127
    %v3198 = vand.u32 2147483647, %v588
    %v3199 = vand.u32 %v3198, 8388607
    %v3200 = vor.u32 %v3199, 8388608
    %v3201 = vsub.s32 0, %v3200
    %v3202 = vadd.s32 %v3197, 1
    %vm3203 = vcmp.gt.s32.totalorder %v3202, 0
    %v3204 = vsel %vm3203, %v3202, 0
    %v3205 = vshrl.u32 %v3204, 5
    %v3206 = vand.u32 %v3204, 31
    %v3207 = vsub.s32 32, %v3206
    %v3208 = vshrl.u32 683565275, %v3207
    %v3209 = vshll.u32 683565275, %v3206
    %v3210 = vshrl.u32 2475754826, %v3207
    %v3211 = vor.u32 %v3209, %v3210
    %v3212 = vshll.u32 2475754826, %v3206
    %v3213 = vshrl.u32 2131351028, %v3207
    %v3214 = vor.u32 %v3212, %v3213
    %v3215 = vshll.u32 2131351028, %v3206
    %v3216 = vshrl.u32 2102212464, %v3207
    %v3217 = vor.u32 %v3215, %v3216
    %v3218 = vshll.u32 2102212464, %v3206
    %v3219 = vshrl.u32 920167782, %v3207
    %v3220 = vor.u32 %v3218, %v3219
    %v3221 = vshll.u32 920167782, %v3206
    %v3222 = vshrl.u32 1326507024, %v3207
    %v3223 = vor.u32 %v3221, %v3222
    %vm3224 = vcmp.lt.s32.totalorder %v3205, 1
    %vm3225 = vcmp.lt.s32.totalorder %v3205, 2
    %vm3226 = vcmp.lt.s32.totalorder %v3205, 3
    %vm3227 = vcmp.lt.s32.totalorder %v3205, 4
    %v3228 = vsel %vm3224, %v3208, %v3211
    %v3229 = vsel %vm3227, %v3217, 2102212464
    %v3230 = vsel %vm3226, %v3214, %v3229
    %v3231 = vsel %vm3225, %v3228, %v3230
    %v3232 = vsel %vm3224, %v3211, %v3214
    %v3233 = vsel %vm3227, %v3220, 920167782
    %v3234 = vsel %vm3226, %v3217, %v3233
    %v3235 = vsel %vm3225, %v3232, %v3234
    %v3236 = vsel %vm3224, %v3214, %v3217
    %v3237 = vsel %vm3227, %v3223, 1326507024
    %v3238 = vsel %vm3226, %v3220, %v3237
    %v3239 = vsel %vm3225, %v3236, %v3238
    %v3240 = vshll.u32 %v3200, 8
    %v3241 = vmul.u32.u64.compose %v3240, %v3239
    %v3242 = vextract.low.u32 %v3241
    %v3243 = vextract.high.u32 %v3241
    %v3244 = vmul.u32.u64.compose %v3240, %v3235
    %v3245 = vextract.low.u32 %v3244
    %v3246 = vextract.high.u32 %v3244
    %v3247 = vmul.u32 %v3240, %v3231
    %v3248 = vadd.s32 %v3243, %v3245
    %vm3249 = vc.u32 %v3243, %v3245
    %v3250 = vadd.s32 %v3246, 1
    %v3251 = vsel %vm3249, %v3250, %v3246
    %v3252 = vadd.s32 %v3247, %v3251
    %v3253 = vadd.s32 %v3252, 536870912
    %v3254 = vshrl.u32 %v3253, 30
    %v3255 = vshll.u32 %v3254, 30
    %v3256 = vsub.s32 %v3252, %v3255
    %vm3257 = vcmp.lt.s32.totalorder %v3256, 0
    %v3258 = vsub.s32 0, %v3256
    %v3259 = vsel %vm3257, %v3258, %v3256
    %v3260 = vclz %v3259
    %v3261 = vsub.s32 %v3260, 2
    %vm3262 = vcmp.gt.s32.totalorder 0, %v3261
    %v3263 = vsel %vm3262, 0, %v3261
    %v3264 = vsub.s32 32, %v3263
    %v3265 = vshll.u32 %v3256, %v3263
    %v3266 = vshrl.u32 %v3248, %v3264
    %v3267 = vor.u32 %v3265, %v3266
    %v3268 = vsub.s32 4294967266, %v3263
    %v3269 = vadd.s32 %v3268, 127
    %v3270 = vshll.u32 %v3269, 23
    %v3271 = vor.u32 4788187, %v3270
    %v3272 = vand.u32 2147483647, %v3271
    %v3274 = vcvt.s32.f32 %v3267
    %v3275 = vmul.f32 %v3274, %v3272
    %v3276 = vxor.u32 %v3275, 2147483648
    %v3277 = vsel %vm3194, %v3276, %v3275
    %v3278 = vsub.s32 4, %v3254
    %v3279 = vsel %vm3194, %v3278, %v3254
    %v3280 = vsel %vm3193, %v588, %v3277
    %v3281 = vsel %vm3193, 0, %v3279
    %v3282 = vcosq.f32.pop %v3280
    %v3283 = vsinq.f32.pop %v3280
    %vm3284 = vweird.f32 %v588
    %v3285 = vand.u32 %v3281, 3
    %vm3286 = vcmp.lt.s32.totalorder %v3285, 2
    %vm3287 = vcmp.eq.s32.totalorder %v3285, 0
    %v3288 = vxor.u32 %v3283, 2147483648
    %v3289 = vsel %vm3287, %v3282, %v3288
    %vm3290 = vcmp.eq.s32.totalorder %v3285, 2
    %v3291 = vxor.u32 %v3282, 2147483648
    %v3292 = vsel %vm3290, %v3291, %v3283
    %v3293 = vsel %vm3286, %v3289, %v3292
    %v3294 = vsel %vm3284, nan, %v3293
    %v3295 = vand.u32 2147483647, %v590
    %vm3296 = vcmp.le.f32.partialorder %v3295, 0.7853982
    %vm3297 = vcmp.lt.s32.totalorder %v590, 0
    %v3298 = vand.u32 %v590, 2139095040
    %v3299 = vshrl.u32 %v3298, 23
    %v3300 = vsub.s32 %v3299, 127
    %v3301 = vand.u32 2147483647, %v590
    %v3302 = vand.u32 %v3301, 8388607
    %v3303 = vor.u32 %v3302, 8388608
    %v3304 = vsub.s32 0, %v3303
    %v3305 = vadd.s32 %v3300, 1
    %vm3306 = vcmp.gt.s32.totalorder %v3305, 0
    %v3307 = vsel %vm3306, %v3305, 0
    %v3308 = vshrl.u32 %v3307, 5
    %v3309 = vand.u32 %v3307, 31
    %v3310 = vsub.s32 32, %v3309
    %v3311 = vshrl.u32 683565275, %v3310
    %v3312 = vshll.u32 683565275, %v3309
    %v3313 = vshrl.u32 2475754826, %v3310
    %v3314 = vor.u32 %v3312, %v3313
    %v3315 = vshll.u32 2475754826, %v3309
    %v3316 = vshrl.u32 2131351028, %v3310
    %v3317 = vor.u32 %v3315, %v3316
    %v3318 = vshll.u32 2131351028, %v3309
    %v3319 = vshrl.u32 2102212464, %v3310
    %v3320 = vor.u32 %v3318, %v3319
    %v3321 = vshll.u32 2102212464, %v3309
    %v3322 = vshrl.u32 920167782, %v3310
    %v3323 = vor.u32 %v3321, %v3322
    %v3324 = vshll.u32 920167782, %v3309
    %v3325 = vshrl.u32 1326507024, %v3310
    %v3326 = vor.u32 %v3324, %v3325
    %vm3327 = vcmp.lt.s32.totalorder %v3308, 1
    %vm3328 = vcmp.lt.s32.totalorder %v3308, 2
    %vm3329 = vcmp.lt.s32.totalorder %v3308, 3
    %vm3330 = vcmp.lt.s32.totalorder %v3308, 4
    %v3331 = vsel %vm3327, %v3311, %v3314
    %v3332 = vsel %vm3330, %v3320, 2102212464
    %v3333 = vsel %vm3329, %v3317, %v3332
    %v3334 = vsel %vm3328, %v3331, %v3333
    %v3335 = vsel %vm3327, %v3314, %v3317
    %v3336 = vsel %vm3330, %v3323, 920167782
    %v3337 = vsel %vm3329, %v3320, %v3336
    %v3338 = vsel %vm3328, %v3335, %v3337
    %v3339 = vsel %vm3327, %v3317, %v3320
    %v3340 = vsel %vm3330, %v3326, 1326507024
    %v3341 = vsel %vm3329, %v3323, %v3340
    %v3342 = vsel %vm3328, %v3339, %v3341
    %v3343 = vshll.u32 %v3303, 8
    %v3344 = vmul.u32.u64.compose %v3343, %v3342
    %v3345 = vextract.low.u32 %v3344
    %v3346 = vextract.high.u32 %v3344
    %v3347 = vmul.u32.u64.compose %v3343, %v3338
    %v3348 = vextract.low.u32 %v3347
    %v3349 = vextract.high.u32 %v3347
    %v3350 = vmul.u32 %v3343, %v3334
    %v3351 = vadd.s32 %v3346, %v3348
    %vm3352 = vc.u32 %v3346, %v3348
    %v3353 = vadd.s32 %v3349, 1
    %v3354 = vsel %vm3352, %v3353, %v3349
    %v3355 = vadd.s32 %v3350, %v3354
    %v3356 = vadd.s32 %v3355, 536870912
    %v3357 = vshrl.u32 %v3356, 30
    %v3358 = vshll.u32 %v3357, 30
    %v3359 = vsub.s32 %v3355, %v3358
    %vm3360 = vcmp.lt.s32.totalorder %v3359, 0
    %v3361 = vsub.s32 0, %v3359
    %v3362 = vsel %vm3360, %v3361, %v3359
    %v3363 = vclz %v3362
    %v3364 = vsub.s32 %v3363, 2
    %vm3365 = vcmp.gt.s32.totalorder 0, %v3364
    %v3366 = vsel %vm3365, 0, %v3364
    %v3367 = vsub.s32 32, %v3366
    %v3368 = vshll.u32 %v3359, %v3366
    %v3369 = vshrl.u32 %v3351, %v3367
    %v3370 = vor.u32 %v3368, %v3369
    %v3371 = vsub.s32 4294967266, %v3366
    %v3372 = vadd.s32 %v3371, 127
    %v3373 = vshll.u32 %v3372, 23
    %v3374 = vor.u32 4788187, %v3373
    %v3375 = vand.u32 2147483647, %v3374
    %v3377 = vcvt.s32.f32 %v3370
    %v3378 = vmul.f32 %v3377, %v3375
    %v3379 = vxor.u32 %v3378, 2147483648
    %v3380 = vsel %vm3297, %v3379, %v3378
    %v3381 = vsub.s32 4, %v3357
    %v3382 = vsel %vm3297, %v3381, %v3357
    %v3383 = vsel %vm3296, %v590, %v3380
    %v3384 = vsel %vm3296, 0, %v3382
    %v3385 = vcosq.f32.pop %v3383
    %v3386 = vsinq.f32.pop %v3383
    %vm3387 = vweird.f32 %v590
    %v3388 = vand.u32 %v3384, 3
    %vm3389 = vcmp.lt.s32.totalorder %v3388, 2
    %vm3390 = vcmp.eq.s32.totalorder %v3388, 0
    %v3391 = vxor.u32 %v3386, 2147483648
    %v3392 = vsel %vm3390, %v3385, %v3391
    %vm3393 = vcmp.eq.s32.totalorder %v3388, 2
    %v3394 = vxor.u32 %v3385, 2147483648
    %v3395 = vsel %vm3393, %v3394, %v3386
    %v3396 = vsel %vm3389, %v3392, %v3395
    %v3397 = vsel %vm3387, nan, %v3396
    %v3398 = vand.u32 2147483647, %v659
    %vm3399 = vcmp.le.f32.partialorder %v3398, 0.7853982
    %vm3400 = vcmp.lt.s32.totalorder %v659, 0
    %v3401 = vand.u32 %v659, 2139095040
    %v3402 = vshrl.u32 %v3401, 23
    %v3403 = vsub.s32 %v3402, 127
    %v3404 = vand.u32 2147483647, %v659
    %v3405 = vand.u32 %v3404, 8388607
    %v3406 = vor.u32 %v3405, 8388608
    %v3407 = vsub.s32 0, %v3406
    %v3408 = vadd.s32 %v3403, 1
    %vm3409 = vcmp.gt.s32.totalorder %v3408, 0
    %v3410 = vsel %vm3409, %v3408, 0
    %v3411 = vshrl.u32 %v3410, 5
    %v3412 = vand.u32 %v3410, 31
    %v3413 = vsub.s32 32, %v3412
    %v3414 = vshrl.u32 683565275, %v3413
    %v3415 = vshll.u32 683565275, %v3412
    %v3416 = vshrl.u32 2475754826, %v3413
    %v3417 = vor.u32 %v3415, %v3416
    %v3418 = vshll.u32 2475754826, %v3412
    %v3419 = vshrl.u32 2131351028, %v3413
    %v3420 = vor.u32 %v3418, %v3419
    %v3421 = vshll.u32 2131351028, %v3412
    %v3422 = vshrl.u32 2102212464, %v3413
    %v3423 = vor.u32 %v3421, %v3422
    %v3424 = vshll.u32 2102212464, %v3412
    %v3425 = vshrl.u32 920167782, %v3413
    %v3426 = vor.u32 %v3424, %v3425
    %v3427 = vshll.u32 920167782, %v3412
    %v3428 = vshrl.u32 1326507024, %v3413
    %v3429 = vor.u32 %v3427, %v3428
    %vm3430 = vcmp.lt.s32.totalorder %v3411, 1
    %vm3431 = vcmp.lt.s32.totalorder %v3411, 2
    %vm3432 = vcmp.lt.s32.totalorder %v3411, 3
    %vm3433 = vcmp.lt.s32.totalorder %v3411, 4
    %v3434 = vsel %vm3430, %v3414, %v3417
    %v3435 = vsel %vm3433, %v3423, 2102212464
    %v3436 = vsel %vm3432, %v3420, %v3435
    %v3437 = vsel %vm3431, %v3434, %v3436
    %v3438 = vsel %vm3430, %v3417, %v3420
    %v3439 = vsel %vm3433, %v3426, 920167782
    %v3440 = vsel %vm3432, %v3423, %v3439
    %v3441 = vsel %vm3431, %v3438, %v3440
    %v3442 = vsel %vm3430, %v3420, %v3423
    %v3443 = vsel %vm3433, %v3429, 1326507024
    %v3444 = vsel %vm3432, %v3426, %v3443
    %v3445 = vsel %vm3431, %v3442, %v3444
    %v3446 = vshll.u32 %v3406, 8
    %v3447 = vmul.u32.u64.compose %v3446, %v3445
    %v3448 = vextract.low.u32 %v3447
    %v3449 = vextract.high.u32 %v3447
    %v3450 = vmul.u32.u64.compose %v3446, %v3441
    %v3451 = vextract.low.u32 %v3450
    %v3452 = vextract.high.u32 %v3450
    %v3453 = vmul.u32 %v3446, %v3437
    %v3454 = vadd.s32 %v3449, %v3451
    %vm3455 = vc.u32 %v3449, %v3451
    %v3456 = vadd.s32 %v3452, 1
    %v3457 = vsel %vm3455, %v3456, %v3452
    %v3458 = vadd.s32 %v3453, %v3457
    %v3459 = vadd.s32 %v3458, 536870912
    %v3460 = vshrl.u32 %v3459, 30
    %v3461 = vshll.u32 %v3460, 30
    %v3462 = vsub.s32 %v3458, %v3461
    %vm3463 = vcmp.lt.s32.totalorder %v3462, 0
    %v3464 = vsub.s32 0, %v3462
    %v3465 = vsel %vm3463, %v3464, %v3462
    %v3466 = vclz %v3465
    %v3467 = vsub.s32 %v3466, 2
    %vm3468 = vcmp.gt.s32.totalorder 0, %v3467
    %v3469 = vsel %vm3468, 0, %v3467
    %v3470 = vsub.s32 32, %v3469
    %v3471 = vshll.u32 %v3462, %v3469
    %v3472 = vshrl.u32 %v3454, %v3470
    %v3473 = vor.u32 %v3471, %v3472
    %v3474 = vsub.s32 4294967266, %v3469
    %v3475 = vadd.s32 %v3474, 127
    %v3476 = vshll.u32 %v3475, 23
    %v3477 = vor.u32 4788187, %v3476
    %v3478 = vand.u32 2147483647, %v3477
    %v3480 = vcvt.s32.f32 %v3473
    %v3481 = vmul.f32 %v3480, %v3478
    %v3482 = vxor.u32 %v3481, 2147483648
    %v3483 = vsel %vm3400, %v3482, %v3481
    %v3484 = vsub.s32 4, %v3460
    %v3485 = vsel %vm3400, %v3484, %v3460
    %v3486 = vsel %vm3399, %v659, %v3483
    %v3487 = vsel %vm3399, 0, %v3485
    %v3488 = vcosq.f32.pop %v3486
    %v3489 = vsinq.f32.pop %v3486
    %vm3490 = vweird.f32 %v659
    %v3491 = vand.u32 %v3487, 3
    %vm3492 = vcmp.lt.s32.totalorder %v3491, 2
    %vm3493 = vcmp.eq.s32.totalorder %v3491, 0
    %v3494 = vxor.u32 %v3489, 2147483648
    %v3495 = vsel %vm3493, %v3488, %v3494
    %vm3496 = vcmp.eq.s32.totalorder %v3491, 2
    %v3497 = vxor.u32 %v3488, 2147483648
    %v3498 = vsel %vm3496, %v3497, %v3489
    %v3499 = vsel %vm3492, %v3495, %v3498
    %v3500 = vsel %vm3490, nan, %v3499
    %v3501 = vand.u32 2147483647, %v661
    %vm3502 = vcmp.le.f32.partialorder %v3501, 0.7853982
    %vm3503 = vcmp.lt.s32.totalorder %v661, 0
    %v3504 = vand.u32 %v661, 2139095040
    %v3505 = vshrl.u32 %v3504, 23
    %v3506 = vsub.s32 %v3505, 127
    %v3507 = vand.u32 2147483647, %v661
    %v3508 = vand.u32 %v3507, 8388607
    %v3509 = vor.u32 %v3508, 8388608
    %v3510 = vsub.s32 0, %v3509
    %v3511 = vadd.s32 %v3506, 1
    %vm3512 = vcmp.gt.s32.totalorder %v3511, 0
    %v3513 = vsel %vm3512, %v3511, 0
    %v3514 = vshrl.u32 %v3513, 5
    %v3515 = vand.u32 %v3513, 31
    %v3516 = vsub.s32 32, %v3515
    %v3517 = vshrl.u32 683565275, %v3516
    %v3518 = vshll.u32 683565275, %v3515
    %v3519 = vshrl.u32 2475754826, %v3516
    %v3520 = vor.u32 %v3518, %v3519
    %v3521 = vshll.u32 2475754826, %v3515
    %v3522 = vshrl.u32 2131351028, %v3516
    %v3523 = vor.u32 %v3521, %v3522
    %v3524 = vshll.u32 2131351028, %v3515
    %v3525 = vshrl.u32 2102212464, %v3516
    %v3526 = vor.u32 %v3524, %v3525
    %v3527 = vshll.u32 2102212464, %v3515
    %v3528 = vshrl.u32 920167782, %v3516
    %v3529 = vor.u32 %v3527, %v3528
    %v3530 = vshll.u32 920167782, %v3515
    %v3531 = vshrl.u32 1326507024, %v3516
    %v3532 = vor.u32 %v3530, %v3531
    %vm3533 = vcmp.lt.s32.totalorder %v3514, 1
    %vm3534 = vcmp.lt.s32.totalorder %v3514, 2
    %vm3535 = vcmp.lt.s32.totalorder %v3514, 3
    %vm3536 = vcmp.lt.s32.totalorder %v3514, 4
    %v3537 = vsel %vm3533, %v3517, %v3520
    %v3538 = vsel %vm3536, %v3526, 2102212464
    %v3539 = vsel %vm3535, %v3523, %v3538
    %v3540 = vsel %vm3534, %v3537, %v3539
    %v3541 = vsel %vm3533, %v3520, %v3523
    %v3542 = vsel %vm3536, %v3529, 920167782
    %v3543 = vsel %vm3535, %v3526, %v3542
    %v3544 = vsel %vm3534, %v3541, %v3543
    %v3545 = vsel %vm3533, %v3523, %v3526
    %v3546 = vsel %vm3536, %v3532, 1326507024
    %v3547 = vsel %vm3535, %v3529, %v3546
    %v3548 = vsel %vm3534, %v3545, %v3547
    %v3549 = vshll.u32 %v3509, 8
    %v3550 = vmul.u32.u64.compose %v3549, %v3548
    %v3551 = vextract.low.u32 %v3550
    %v3552 = vextract.high.u32 %v3550
    %v3553 = vmul.u32.u64.compose %v3549, %v3544
    %v3554 = vextract.low.u32 %v3553
    %v3555 = vextract.high.u32 %v3553
    %v3556 = vmul.u32 %v3549, %v3540
    %v3557 = vadd.s32 %v3552, %v3554
    %vm3558 = vc.u32 %v3552, %v3554
    %v3559 = vadd.s32 %v3555, 1
    %v3560 = vsel %vm3558, %v3559, %v3555
    %v3561 = vadd.s32 %v3556, %v3560
    %v3562 = vadd.s32 %v3561, 536870912
    %v3563 = vshrl.u32 %v3562, 30
    %v3564 = vshll.u32 %v3563, 30
    %v3565 = vsub.s32 %v3561, %v3564
    %vm3566 = vcmp.lt.s32.totalorder %v3565, 0
    %v3567 = vsub.s32 0, %v3565
    %v3568 = vsel %vm3566, %v3567, %v3565
    %v3569 = vclz %v3568
    %v3570 = vsub.s32 %v3569, 2
    %vm3571 = vcmp.gt.s32.totalorder 0, %v3570
    %v3572 = vsel %vm3571, 0, %v3570
    %v3573 = vsub.s32 32, %v3572
    %v3574 = vshll.u32 %v3565, %v3572
    %v3575 = vshrl.u32 %v3557, %v3573
    %v3576 = vor.u32 %v3574, %v3575
    %v3577 = vsub.s32 4294967266, %v3572
    %v3578 = vadd.s32 %v3577, 127
    %v3579 = vshll.u32 %v3578, 23
    %v3580 = vor.u32 4788187, %v3579
    %v3581 = vand.u32 2147483647, %v3580
    %v3583 = vcvt.s32.f32 %v3576
    %v3584 = vmul.f32 %v3583, %v3581
    %v3585 = vxor.u32 %v3584, 2147483648
    %v3586 = vsel %vm3503, %v3585, %v3584
    %v3587 = vsub.s32 4, %v3563
    %v3588 = vsel %vm3503, %v3587, %v3563
    %v3589 = vsel %vm3502, %v661, %v3586
    %v3590 = vsel %vm3502, 0, %v3588
    %v3591 = vcosq.f32.pop %v3589
    %v3592 = vsinq.f32.pop %v3589
    %vm3593 = vweird.f32 %v661
    %v3594 = vand.u32 %v3590, 3
    %vm3595 = vcmp.lt.s32.totalorder %v3594, 2
    %vm3596 = vcmp.eq.s32.totalorder %v3594, 0
    %v3597 = vxor.u32 %v3592, 2147483648
    %v3598 = vsel %vm3596, %v3591, %v3597
    %vm3599 = vcmp.eq.s32.totalorder %v3594, 2
    %v3600 = vxor.u32 %v3591, 2147483648
    %v3601 = vsel %vm3599, %v3600, %v3592
    %v3602 = vsel %vm3595, %v3598, %v3601
    %v3603 = vsel %vm3593, nan, %v3602
    %v3604 = vand.u32 2147483647, %v730
    %vm3605 = vcmp.le.f32.partialorder %v3604, 0.7853982
    %vm3606 = vcmp.lt.s32.totalorder %v730, 0
    %v3607 = vand.u32 %v730, 2139095040
    %v3608 = vshrl.u32 %v3607, 23
    %v3609 = vsub.s32 %v3608, 127
    %v3610 = vand.u32 2147483647, %v730
    %v3611 = vand.u32 %v3610, 8388607
    %v3612 = vor.u32 %v3611, 8388608
    %v3613 = vsub.s32 0, %v3612
    %v3614 = vadd.s32 %v3609, 1
    %vm3615 = vcmp.gt.s32.totalorder %v3614, 0
    %v3616 = vsel %vm3615, %v3614, 0
    %v3617 = vshrl.u32 %v3616, 5
    %v3618 = vand.u32 %v3616, 31
    %v3619 = vsub.s32 32, %v3618
    %v3620 = vshrl.u32 683565275, %v3619
    %v3621 = vshll.u32 683565275, %v3618
    %v3622 = vshrl.u32 2475754826, %v3619
    %v3623 = vor.u32 %v3621, %v3622
    %v3624 = vshll.u32 2475754826, %v3618
    %v3625 = vshrl.u32 2131351028, %v3619
    %v3626 = vor.u32 %v3624, %v3625
    %v3627 = vshll.u32 2131351028, %v3618
    %v3628 = vshrl.u32 2102212464, %v3619
    %v3629 = vor.u32 %v3627, %v3628
    %v3630 = vshll.u32 2102212464, %v3618
    %v3631 = vshrl.u32 920167782, %v3619
    %v3632 = vor.u32 %v3630, %v3631
    %v3633 = vshll.u32 920167782, %v3618
    %v3634 = vshrl.u32 1326507024, %v3619
    %v3635 = vor.u32 %v3633, %v3634
    %vm3636 = vcmp.lt.s32.totalorder %v3617, 1
    %vm3637 = vcmp.lt.s32.totalorder %v3617, 2
    %vm3638 = vcmp.lt.s32.totalorder %v3617, 3
    %vm3639 = vcmp.lt.s32.totalorder %v3617, 4
    %v3640 = vsel %vm3636, %v3620, %v3623
    %v3641 = vsel %vm3639, %v3629, 2102212464
    %v3642 = vsel %vm3638, %v3626, %v3641
    %v3643 = vsel %vm3637, %v3640, %v3642
    %v3644 = vsel %vm3636, %v3623, %v3626
    %v3645 = vsel %vm3639, %v3632, 920167782
    %v3646 = vsel %vm3638, %v3629, %v3645
    %v3647 = vsel %vm3637, %v3644, %v3646
    %v3648 = vsel %vm3636, %v3626, %v3629
    %v3649 = vsel %vm3639, %v3635, 1326507024
    %v3650 = vsel %vm3638, %v3632, %v3649
    %v3651 = vsel %vm3637, %v3648, %v3650
    %v3652 = vshll.u32 %v3612, 8
    %v3653 = vmul.u32.u64.compose %v3652, %v3651
    %v3654 = vextract.low.u32 %v3653
    %v3655 = vextract.high.u32 %v3653
    %v3656 = vmul.u32.u64.compose %v3652, %v3647
    %v3657 = vextract.low.u32 %v3656
    %v3658 = vextract.high.u32 %v3656
    %v3659 = vmul.u32 %v3652, %v3643
    %v3660 = vadd.s32 %v3655, %v3657
    %vm3661 = vc.u32 %v3655, %v3657
    %v3662 = vadd.s32 %v3658, 1
    %v3663 = vsel %vm3661, %v3662, %v3658
    %v3664 = vadd.s32 %v3659, %v3663
    %v3665 = vadd.s32 %v3664, 536870912
    %v3666 = vshrl.u32 %v3665, 30
    %v3667 = vshll.u32 %v3666, 30
    %v3668 = vsub.s32 %v3664, %v3667
    %vm3669 = vcmp.lt.s32.totalorder %v3668, 0
    %v3670 = vsub.s32 0, %v3668
    %v3671 = vsel %vm3669, %v3670, %v3668
    %v3672 = vclz %v3671
    %v3673 = vsub.s32 %v3672, 2
    %vm3674 = vcmp.gt.s32.totalorder 0, %v3673
    %v3675 = vsel %vm3674, 0, %v3673
    %v3676 = vsub.s32 32, %v3675
    %v3677 = vshll.u32 %v3668, %v3675
    %v3678 = vshrl.u32 %v3660, %v3676
    %v3679 = vor.u32 %v3677, %v3678
    %v3680 = vsub.s32 4294967266, %v3675
    %v3681 = vadd.s32 %v3680, 127
    %v3682 = vshll.u32 %v3681, 23
    %v3683 = vor.u32 4788187, %v3682
    %v3684 = vand.u32 2147483647, %v3683
    %v3686 = vcvt.s32.f32 %v3679
    %v3687 = vmul.f32 %v3686, %v3684
    %v3688 = vxor.u32 %v3687, 2147483648
    %v3689 = vsel %vm3606, %v3688, %v3687
    %v3690 = vsub.s32 4, %v3666
    %v3691 = vsel %vm3606, %v3690, %v3666
    %v3692 = vsel %vm3605, %v730, %v3689
    %v3693 = vsel %vm3605, 0, %v3691
    %v3694 = vcosq.f32.pop %v3692
    %v3695 = vsinq.f32.pop %v3692
    %vm3696 = vweird.f32 %v730
    %v3697 = vand.u32 %v3693, 3
    %vm3698 = vcmp.lt.s32.totalorder %v3697, 2
    %vm3699 = vcmp.eq.s32.totalorder %v3697, 0
    %v3700 = vxor.u32 %v3695, 2147483648
    %v3701 = vsel %vm3699, %v3694, %v3700
    %vm3702 = vcmp.eq.s32.totalorder %v3697, 2
    %v3703 = vxor.u32 %v3694, 2147483648
    %v3704 = vsel %vm3702, %v3703, %v3695
    %v3705 = vsel %vm3698, %v3701, %v3704
    %v3706 = vsel %vm3696, nan, %v3705
    %v3707 = vand.u32 2147483647, %v732
    %vm3708 = vcmp.le.f32.partialorder %v3707, 0.7853982
    %vm3709 = vcmp.lt.s32.totalorder %v732, 0
    %v3710 = vand.u32 %v732, 2139095040
    %v3711 = vshrl.u32 %v3710, 23
    %v3712 = vsub.s32 %v3711, 127
    %v3713 = vand.u32 2147483647, %v732
    %v3714 = vand.u32 %v3713, 8388607
    %v3715 = vor.u32 %v3714, 8388608
    %v3716 = vsub.s32 0, %v3715
    %v3717 = vadd.s32 %v3712, 1
    %vm3718 = vcmp.gt.s32.totalorder %v3717, 0
    %v3719 = vsel %vm3718, %v3717, 0
    %v3720 = vshrl.u32 %v3719, 5
    %v3721 = vand.u32 %v3719, 31
    %v3722 = vsub.s32 32, %v3721
    %v3723 = vshrl.u32 683565275, %v3722
    %v3724 = vshll.u32 683565275, %v3721
    %v3725 = vshrl.u32 2475754826, %v3722
    %v3726 = vor.u32 %v3724, %v3725
    %v3727 = vshll.u32 2475754826, %v3721
    %v3728 = vshrl.u32 2131351028, %v3722
    %v3729 = vor.u32 %v3727, %v3728
    %v3730 = vshll.u32 2131351028, %v3721
    %v3731 = vshrl.u32 2102212464, %v3722
    %v3732 = vor.u32 %v3730, %v3731
    %v3733 = vshll.u32 2102212464, %v3721
    %v3734 = vshrl.u32 920167782, %v3722
    %v3735 = vor.u32 %v3733, %v3734
    %v3736 = vshll.u32 920167782, %v3721
    %v3737 = vshrl.u32 1326507024, %v3722
    %v3738 = vor.u32 %v3736, %v3737
    %vm3739 = vcmp.lt.s32.totalorder %v3720, 1
    %vm3740 = vcmp.lt.s32.totalorder %v3720, 2
    %vm3741 = vcmp.lt.s32.totalorder %v3720, 3
    %vm3742 = vcmp.lt.s32.totalorder %v3720, 4
    %v3743 = vsel %vm3739, %v3723, %v3726
    %v3744 = vsel %vm3742, %v3732, 2102212464
    %v3745 = vsel %vm3741, %v3729, %v3744
    %v3746 = vsel %vm3740, %v3743, %v3745
    %v3747 = vsel %vm3739, %v3726, %v3729
    %v3748 = vsel %vm3742, %v3735, 920167782
    %v3749 = vsel %vm3741, %v3732, %v3748
    %v3750 = vsel %vm3740, %v3747, %v3749
    %v3751 = vsel %vm3739, %v3729, %v3732
    %v3752 = vsel %vm3742, %v3738, 1326507024
    %v3753 = vsel %vm3741, %v3735, %v3752
    %v3754 = vsel %vm3740, %v3751, %v3753
    %v3755 = vshll.u32 %v3715, 8
    %v3756 = vmul.u32.u64.compose %v3755, %v3754
    %v3757 = vextract.low.u32 %v3756
    %v3758 = vextract.high.u32 %v3756
    %v3759 = vmul.u32.u64.compose %v3755, %v3750
    %v3760 = vextract.low.u32 %v3759
    %v3761 = vextract.high.u32 %v3759
    %v3762 = vmul.u32 %v3755, %v3746
    %v3763 = vadd.s32 %v3758, %v3760
    %vm3764 = vc.u32 %v3758, %v3760
    %v3765 = vadd.s32 %v3761, 1
    %v3766 = vsel %vm3764, %v3765, %v3761
    %v3767 = vadd.s32 %v3762, %v3766
    %v3768 = vadd.s32 %v3767, 536870912
    %v3769 = vshrl.u32 %v3768, 30
    %v3770 = vshll.u32 %v3769, 30
    %v3771 = vsub.s32 %v3767, %v3770
    %vm3772 = vcmp.lt.s32.totalorder %v3771, 0
    %v3773 = vsub.s32 0, %v3771
    %v3774 = vsel %vm3772, %v3773, %v3771
    %v3775 = vclz %v3774
    %v3776 = vsub.s32 %v3775, 2
    %vm3777 = vcmp.gt.s32.totalorder 0, %v3776
    %v3778 = vsel %vm3777, 0, %v3776
    %v3779 = vsub.s32 32, %v3778
    %v3780 = vshll.u32 %v3771, %v3778
    %v3781 = vshrl.u32 %v3763, %v3779
    %v3782 = vor.u32 %v3780, %v3781
    %v3783 = vsub.s32 4294967266, %v3778
    %v3784 = vadd.s32 %v3783, 127
    %v3785 = vshll.u32 %v3784, 23
    %v3786 = vor.u32 4788187, %v3785
    %v3787 = vand.u32 2147483647, %v3786
    %v3789 = vcvt.s32.f32 %v3782
    %v3790 = vmul.f32 %v3789, %v3787
    %v3791 = vxor.u32 %v3790, 2147483648
    %v3792 = vsel %vm3709, %v3791, %v3790
    %v3793 = vsub.s32 4, %v3769
    %v3794 = vsel %vm3709, %v3793, %v3769
    %v3795 = vsel %vm3708, %v732, %v3792
    %v3796 = vsel %vm3708, 0, %v3794
    %v3797 = vcosq.f32.pop %v3795
    %v3798 = vsinq.f32.pop %v3795
    %vm3799 = vweird.f32 %v732
    %v3800 = vand.u32 %v3796, 3
    %vm3801 = vcmp.lt.s32.totalorder %v3800, 2
    %vm3802 = vcmp.eq.s32.totalorder %v3800, 0
    %v3803 = vxor.u32 %v3798, 2147483648
    %v3804 = vsel %vm3802, %v3797, %v3803
    %vm3805 = vcmp.eq.s32.totalorder %v3800, 2
    %v3806 = vxor.u32 %v3797, 2147483648
    %v3807 = vsel %vm3805, %v3806, %v3798
    %v3808 = vsel %vm3801, %v3804, %v3807
    %v3809 = vsel %vm3799, nan, %v3808
    %v3810 = vand.u32 2147483647, %v801
    %vm3811 = vcmp.le.f32.partialorder %v3810, 0.7853982
    %vm3812 = vcmp.lt.s32.totalorder %v801, 0
    %v3813 = vand.u32 %v801, 2139095040
    %v3814 = vshrl.u32 %v3813, 23
    %v3815 = vsub.s32 %v3814, 127
    %v3816 = vand.u32 2147483647, %v801
    %v3817 = vand.u32 %v3816, 8388607
    %v3818 = vor.u32 %v3817, 8388608
    %v3819 = vsub.s32 0, %v3818
    %v3820 = vadd.s32 %v3815, 1
    %vm3821 = vcmp.gt.s32.totalorder %v3820, 0
    %v3822 = vsel %vm3821, %v3820, 0
    %v3823 = vshrl.u32 %v3822, 5
    %v3824 = vand.u32 %v3822, 31
    %v3825 = vsub.s32 32, %v3824
    %v3826 = vshrl.u32 683565275, %v3825
    %v3827 = vshll.u32 683565275, %v3824
    %v3828 = vshrl.u32 2475754826, %v3825
    %v3829 = vor.u32 %v3827, %v3828
    %v3830 = vshll.u32 2475754826, %v3824
    %v3831 = vshrl.u32 2131351028, %v3825
    %v3832 = vor.u32 %v3830, %v3831
    %v3833 = vshll.u32 2131351028, %v3824
    %v3834 = vshrl.u32 2102212464, %v3825
    %v3835 = vor.u32 %v3833, %v3834
    %v3836 = vshll.u32 2102212464, %v3824
    %v3837 = vshrl.u32 920167782, %v3825
    %v3838 = vor.u32 %v3836, %v3837
    %v3839 = vshll.u32 920167782, %v3824
    %v3840 = vshrl.u32 1326507024, %v3825
    %v3841 = vor.u32 %v3839, %v3840
    %vm3842 = vcmp.lt.s32.totalorder %v3823, 1
    %vm3843 = vcmp.lt.s32.totalorder %v3823, 2
    %vm3844 = vcmp.lt.s32.totalorder %v3823, 3
    %vm3845 = vcmp.lt.s32.totalorder %v3823, 4
    %v3846 = vsel %vm3842, %v3826, %v3829
    %v3847 = vsel %vm3845, %v3835, 2102212464
    %v3848 = vsel %vm3844, %v3832, %v3847
    %v3849 = vsel %vm3843, %v3846, %v3848
    %v3850 = vsel %vm3842, %v3829, %v3832
    %v3851 = vsel %vm3845, %v3838, 920167782
    %v3852 = vsel %vm3844, %v3835, %v3851
    %v3853 = vsel %vm3843, %v3850, %v3852
    %v3854 = vsel %vm3842, %v3832, %v3835
    %v3855 = vsel %vm3845, %v3841, 1326507024
    %v3856 = vsel %vm3844, %v3838, %v3855
    %v3857 = vsel %vm3843, %v3854, %v3856
    %v3858 = vshll.u32 %v3818, 8
    %v3859 = vmul.u32.u64.compose %v3858, %v3857
    %v3860 = vextract.low.u32 %v3859
    %v3861 = vextract.high.u32 %v3859
    %v3862 = vmul.u32.u64.compose %v3858, %v3853
    %v3863 = vextract.low.u32 %v3862
    %v3864 = vextract.high.u32 %v3862
    %v3865 = vmul.u32 %v3858, %v3849
    %v3866 = vadd.s32 %v3861, %v3863
    %vm3867 = vc.u32 %v3861, %v3863
    %v3868 = vadd.s32 %v3864, 1
    %v3869 = vsel %vm3867, %v3868, %v3864
    %v3870 = vadd.s32 %v3865, %v3869
    %v3871 = vadd.s32 %v3870, 536870912
    %v3872 = vshrl.u32 %v3871, 30
    %v3873 = vshll.u32 %v3872, 30
    %v3874 = vsub.s32 %v3870, %v3873
    %vm3875 = vcmp.lt.s32.totalorder %v3874, 0
    %v3876 = vsub.s32 0, %v3874
    %v3877 = vsel %vm3875, %v3876, %v3874
    %v3878 = vclz %v3877
    %v3879 = vsub.s32 %v3878, 2
    %vm3880 = vcmp.gt.s32.totalorder 0, %v3879
    %v3881 = vsel %vm3880, 0, %v3879
    %v3882 = vsub.s32 32, %v3881
    %v3883 = vshll.u32 %v3874, %v3881
    %v3884 = vshrl.u32 %v3866, %v3882
    %v3885 = vor.u32 %v3883, %v3884
    %v3886 = vsub.s32 4294967266, %v3881
    %v3887 = vadd.s32 %v3886, 127
    %v3888 = vshll.u32 %v3887, 23
    %v3889 = vor.u32 4788187, %v3888
    %v3890 = vand.u32 2147483647, %v3889
    %v3892 = vcvt.s32.f32 %v3885
    %v3893 = vmul.f32 %v3892, %v3890
    %v3894 = vxor.u32 %v3893, 2147483648
    %v3895 = vsel %vm3812, %v3894, %v3893
    %v3896 = vsub.s32 4, %v3872
    %v3897 = vsel %vm3812, %v3896, %v3872
    %v3898 = vsel %vm3811, %v801, %v3895
    %v3899 = vsel %vm3811, 0, %v3897
    %v3900 = vcosq.f32.pop %v3898
    %v3901 = vsinq.f32.pop %v3898
    %vm3902 = vweird.f32 %v801
    %v3903 = vand.u32 %v3899, 3
    %vm3904 = vcmp.lt.s32.totalorder %v3903, 2
    %vm3905 = vcmp.eq.s32.totalorder %v3903, 0
    %v3906 = vxor.u32 %v3901, 2147483648
    %v3907 = vsel %vm3905, %v3900, %v3906
    %vm3908 = vcmp.eq.s32.totalorder %v3903, 2
    %v3909 = vxor.u32 %v3900, 2147483648
    %v3910 = vsel %vm3908, %v3909, %v3901
    %v3911 = vsel %vm3904, %v3907, %v3910
    %v3912 = vsel %vm3902, nan, %v3911
    %v3928 = vcombine.low %v911, %v1015
    %v3929 = vcombine.low %v1119, %v1223
    %v3930 = vcombine.low %v1327, %v1431
    %v3931 = vcombine.low %v1535, %v1639
    %v3933 = vunpack.c.l.s4 1966171168
    %v3934 = vunpack.c.0.s8 %v3933
    %v3935 = vlaneseq
    %v3936 = vshrl.u32 %v3935, 7
    %v3937 = vsub.s32 %v3934, %v3936
    %v3938 = vrot.slane %v3928, %v3937
    %v3940 = vunpack.c.l.s4 1966171168
    %v3941 = vunpack.c.0.s8 %v3940
    %v3942 = vlaneseq
    %v3943 = vshrl.u32 %v3942, 7
    %v3944 = vsub.s32 %v3941, %v3943
    %v3945 = vrot.slane %v3929, %v3944
    %v3947 = vunpack.c.l.s4 1966171168
    %v3948 = vunpack.c.0.s8 %v3947
    %v3949 = vlaneseq
    %v3950 = vshrl.u32 %v3949, 7
    %v3951 = vsub.s32 %v3948, %v3950
    %v3952 = vrot.slane %v3930, %v3951
    %v3954 = vunpack.c.l.s4 1966171168
    %v3955 = vunpack.c.0.s8 %v3954
    %v3956 = vlaneseq
    %v3957 = vshrl.u32 %v3956, 7
    %v3958 = vsub.s32 %v3955, %v3957
    %v3959 = vrot.slane %v3931, %v3958
    %v3960 = vcombine.low %v3938, %v3945
    %v3961 = vcombine.low %v3952, %v3959
    %v3963 = vunpack.c.l.s4 1966171168
    %v3964 = vunpack.c.0.s8 %v3963
    %v3965 = vlaneseq
    %v3966 = vshrl.u32 %v3965, 7
    %v3967 = vsub.s32 %v3964, %v3966
    %v3968 = vrot.slane %v3960, %v3967
    %v3970 = vunpack.c.l.s4 1966171168
    %v3971 = vunpack.c.0.s8 %v3970
    %v3972 = vlaneseq
    %v3973 = vshrl.u32 %v3972, 7
    %v3974 = vsub.s32 %v3971, %v3973
    %v3975 = vrot.slane %v3961, %v3974
    %v3976 = vcombine.low %v3968, %v3975
    %v3977 = vcombine.low %v1743, %v1847
    %v3978 = vcombine.low %v1951, %v2055
    %v3979 = vcombine.low %v2159, %v2263
    %v3981 = vunpack.c.l.s4 1966171168
    %v3982 = vunpack.c.0.s8 %v3981
    %v3983 = vlaneseq
    %v3984 = vshrl.u32 %v3983, 7
    %v3985 = vsub.s32 %v3982, %v3984
    %v3986 = vrot.slane %v3977, %v3985
    %v3988 = vunpack.c.l.s4 1966171168
    %v3989 = vunpack.c.0.s8 %v3988
    %v3990 = vlaneseq
    %v3991 = vshrl.u32 %v3990, 7
    %v3992 = vsub.s32 %v3989, %v3991
    %v3993 = vrot.slane %v3978, %v3992
    %v3995 = vunpack.c.l.s4 1966171168
    %v3996 = vunpack.c.0.s8 %v3995
    %v3997 = vlaneseq
    %v3998 = vshrl.u32 %v3997, 7
    %v3999 = vsub.s32 %v3996, %v3998
    %v4000 = vrot.slane %v3979, %v3999
    %v4002 = vunpack.c.l.s4 1966171168
    %v4003 = vunpack.c.0.s8 %v4002
    %v4004 = vlaneseq
    %v4005 = vshrl.u32 %v4004, 7
    %v4006 = vsub.s32 %v4003, %v4005
    %v4007 = vrot.slane %v2367, %v4006
    %v4008 = vcombine.low %v3986, %v3993
    %v4009 = vcombine.low %v4000, %v4007
    %v4011 = vunpack.c.l.s4 1966171168
    %v4012 = vunpack.c.0.s8 %v4011
    %v4013 = vlaneseq
    %v4014 = vshrl.u32 %v4013, 7
    %v4015 = vsub.s32 %v4012, %v4014
    %v4016 = vrot.slane %v4008, %v4015
    %v4018 = vunpack.c.l.s4 1966171168
    %v4019 = vunpack.c.0.s8 %v4018
    %v4020 = vlaneseq
    %v4021 = vshrl.u32 %v4020, 7
    %v4022 = vsub.s32 %v4019, %v4021
    %v4023 = vrot.slane %v4009, %v4022
    %v4024 = vcombine.low %v4016, %v4023
    %v4042 = vcombine.low %v2470, %v2573
    %v4043 = vcombine.low %v2676, %v2779
    %v4044 = vcombine.low %v2882, %v2985
    %v4045 = vcombine.low %v3088, %v3191
    %v4047 = vunpack.c.l.s4 1966171168
    %v4048 = vunpack.c.0.s8 %v4047
    %v4049 = vlaneseq
    %v4050 = vshrl.u32 %v4049, 7
    %v4051 = vsub.s32 %v4048, %v4050
    %v4052 = vrot.slane %v4042, %v4051
    %v4054 = vunpack.c.l.s4 1966171168
    %v4055 = vunpack.c.0.s8 %v4054
    %v4056 = vlaneseq
    %v4057 = vshrl.u32 %v4056, 7
    %v4058 = vsub.s32 %v4055, %v4057
    %v4059 = vrot.slane %v4043, %v4058
    %v4061 = vunpack.c.l.s4 1966171168
    %v4062 = vunpack.c.0.s8 %v4061
    %v4063 = vlaneseq
    %v4064 = vshrl.u32 %v4063, 7
    %v4065 = vsub.s32 %v4062, %v4064
    %v4066 = vrot.slane %v4044, %v4065
    %v4068 = vunpack.c.l.s4 1966171168
    %v4069 = vunpack.c.0.s8 %v4068
    %v4070 = vlaneseq
    %v4071 = vshrl.u32 %v4070, 7
    %v4072 = vsub.s32 %v4069, %v4071
    %v4073 = vrot.slane %v4045, %v4072
    %v4074 = vcombine.low %v4052, %v4059
    %v4075 = vcombine.low %v4066, %v4073
    %v4077 = vunpack.c.l.s4 1966171168
    %v4078 = vunpack.c.0.s8 %v4077
    %v4079 = vlaneseq
    %v4080 = vshrl.u32 %v4079, 7
    %v4081 = vsub.s32 %v4078, %v4080
    %v4082 = vrot.slane %v4074, %v4081
    %v4084 = vunpack.c.l.s4 1966171168
    %v4085 = vunpack.c.0.s8 %v4084
    %v4086 = vlaneseq
    %v4087 = vshrl.u32 %v4086, 7
    %v4088 = vsub.s32 %v4085, %v4087
    %v4089 = vrot.slane %v4075, %v4088
    %v4090 = vcombine.low %v4082, %v4089
    %v4091 = vcombine.low %v3294, %v3397
    %v4092 = vcombine.low %v3500, %v3603
    %v4093 = vcombine.low %v3706, %v3809
    %v4095 = vunpack.c.l.s4 1966171168
    %v4096 = vunpack.c.0.s8 %v4095
    %v4097 = vlaneseq
    %v4098 = vshrl.u32 %v4097, 7
    %v4099 = vsub.s32 %v4096, %v4098
    %v4100 = vrot.slane %v4091, %v4099
    %v4102 = vunpack.c.l.s4 1966171168
    %v4103 = vunpack.c.0.s8 %v4102
    %v4104 = vlaneseq
    %v4105 = vshrl.u32 %v4104, 7
    %v4106 = vsub.s32 %v4103, %v4105
    %v4107 = vrot.slane %v4092, %v4106
    %v4109 = vunpack.c.l.s4 1966171168
    %v4110 = vunpack.c.0.s8 %v4109
    %v4111 = vlaneseq
    %v4112 = vshrl.u32 %v4111, 7
    %v4113 = vsub.s32 %v4110, %v4112
    %v4114 = vrot.slane %v4093, %v4113
    %v4116 = vunpack.c.l.s4 1966171168
    %v4117 = vunpack.c.0.s8 %v4116
    %v4118 = vlaneseq
    %v4119 = vshrl.u32 %v4118, 7
    %v4120 = vsub.s32 %v4117, %v4119
    %v4121 = vrot.slane %v3912, %v4120
    %v4122 = vcombine.low %v4100, %v4107
    %v4123 = vcombine.low %v4114, %v4121
    %v4125 = vunpack.c.l.s4 1966171168
    %v4126 = vunpack.c.0.s8 %v4125
    %v4127 = vlaneseq
    %v4128 = vshrl.u32 %v4127, 7
    %v4129 = vsub.s32 %v4126, %v4128
    %v4130 = vrot.slane %v4122, %v4129
    %v4132 = vunpack.c.l.s4 1966171168
    %v4133 = vunpack.c.0.s8 %v4132
    %v4134 = vlaneseq
    %v4135 = vshrl.u32 %v4134, 7
    %v4136 = vsub.s32 %v4133, %v4135
    %v4137 = vrot.slane %v4123, %v4136
    %v4138 = vcombine.low %v4130, %v4137
    %v4141 = vsel %vm806, %v3976, %v4090
    %v4142 = vsel %vm807, %v4024, %v4138
    %4143 = vst [vmem:[#allocation8] sm:$0xff] %v4141
    %v4144 = vlaneseq
    %vm4145 = vcmp.ge.s32.totalorder %v4144, 0
    %vm4146 = vcmp.lt.s32.totalorder %v4144, 896
    %vm4147 = vmand %vm4145, %vm4146
    %4148 = vst.msk [vmem:[#allocation8 + $0x8] sm:$0x7f] %vm4147, %v4142
    // Predicated region
    $region26: #{tpu_custom_call.1} parent=1 // pred_check
      _
    $region27: #{tpu_custom_call.1} parent=1 // pred_check_branch
      %4150 = sbr.rel (0) target = $region29
    $region28: #{tpu_custom_call.1} parent=1 // pred_region
      %s4152 = ssub.s32 240, 240
      %4153 = vsyncadd [#allocation4], %s4152
      %s4155 = sshll.u32 [#allocation8], 4
      %s4156 = int_to_ptr.vmem [resolvable:$true] %s4155
      %4158 = dma.vmem_to_hbm [thread:$0]  %s4156, 240, %s3, [#allocation4]
    $region29: #{tpu_custom_call.1} parent=1 // pred_fallthru
      _
    // Predicated region
    $region30: #{tpu_custom_call.1} parent=1 // pred_check
      _
    $region31: #{tpu_custom_call.1} parent=1 // pred_check_branch
      %4160 = sbr.rel (0) target = $region33
    $region32: #{tpu_custom_call.1} parent=1 // pred_region
      %4161 = dma.done [#allocation4], 240
    $region33: #{tpu_custom_call.1} parent=1 // pred_fallthru
      _
    %4162 = vsyncpa [#allocation3], 1
    %4163 = vsyncpa [#allocation6], 1
    %4164 = vsyncpa [#allocation4], 1

</llo_original>
